<compile_context>
chip_gen: v7x
topology: tpu7x:2x2x1
jax: 0.10.0
libtpu: 0.0.40
codegen_flags: <defaults>
</compile_context>

<pallas_src>
import functools

import jax
import jax.numpy as jnp
from jax.experimental import pallas as pl
from jax.experimental.pallas import tpu as pltpu

_EPS = 1e-12                              # F.normalize default eps
_MIB = 1024 * 1024
_HIGHEST = jax.lax.Precision.HIGHEST      # exact f32 matmuls (torch semantics)


# --------------------------------------------------------------------------
# small helpers
# --------------------------------------------------------------------------
def _round_up(x, m):
    return ((x + m - 1) // m) * m


def _sublane_multiple(itemsize):
    # second-to-last dim tiling: f32 -> 8, bf16 -> 16, int8/fp8 -> 32
    return max(8, 32 // max(1, int(itemsize)))


def _l2_normalize(x):
    # F.normalize(x, dim=-1): x / max(||x||_2, eps), row-wise over N
    norm = jnp.sqrt(jnp.sum(x * x, axis=-1, keepdims=True))
    return x / jnp.maximum(norm, _EPS)


def _time_valid_mask(k, t_total, t_block):
    # Mask for padded time rows of the last (partial) T chunk.  Compiled out
    # entirely (returns None) when t_block divides T.
    if t_total % t_block == 0:
        return None
    t_idx = k * t_block + jax.lax.broadcasted_iota(
        jnp.int32, (t_block, 1), dimension=0)
    return t_idx < t_total


def _maybe_init(k, acc_o_ref, acc_d_ref):
    @pl.when(k == 0)
    def _():
        acc_o_ref[...] = jnp.zeros_like(acc_o_ref)
        acc_d_ref[...] = jnp.zeros_like(acc_d_ref)


def _maybe_finalize(k, out_ref, acc_o_ref, acc_d_ref):
    @pl.when(k == pl.num_programs(1) - 1)
    def _():
        out_ref[:, 0, :, :] = acc_o_ref[...].astype(out_ref.dtype)
        out_ref[:, 1, :, :] = acc_d_ref[...].astype(out_ref.dtype)


def _accumulate_batch_gram(o_data, d_data, valid, b,
                           acc_o_ref, acc_d_ref, gram_dtype):
    """(tt, N) f32 O/D time-rows of one batch element -> Gram accumulators."""
    if valid is not None:
        o_data = jnp.where(valid, o_data, 0.0)
        d_data = jnp.where(valid, d_data, 0.0)
    o_norm = _l2_normalize(o_data)
    d_norm = _l2_normalize(d_data)
    if gram_dtype is not None:            # optional bf16 MXU operands (~1e-3 err)
        o_norm = o_norm.astype(gram_dtype)
        d_norm = d_norm.astype(gram_dtype)
    # einsum('ti,tj->ij'): contract the leading time axis of both operands.
    contract_t = (((0,), (0,)), ((), ()))
    acc_o_ref[b] += jax.lax.dot_general(
        o_norm, o_norm, contract_t,
        preferred_element_type=jnp.float32, precision=_HIGHEST)
    acc_d_ref[b] += jax.lax.dot_general(
        d_norm, d_norm, contract_t,
        preferred_element_type=jnp.float32, precision=_HIGHEST)


# --------------------------------------------------------------------------
# kernels
# --------------------------------------------------------------------------
def _od_sim_flat_kernel(flow_ref, sel_o_ref, sel_d_ref, out_ref,
                        acc_o_ref, acc_d_ref, *, t_total, t_block, gram_dtype):
    """Lane-dense path: flow_ref is (bb, tt, N*N); selectors (N*N, N) resident.

    Row/column sums of each (N, N) OD matrix are MXU matmuls of the flat
    chunk against constant 0/1 selectors, so the big chunk only touches the
    DMA engines and the MXU (no VPU work at N/128 lane utilization).
    """
    k = pl.program_id(1)                   # T-chunk index (reduction, last axis)
    _maybe_init(k, acc_o_ref, acc_d_ref)

    sel_o = sel_o_ref[...]
    sel_d = sel_d_ref[...]
    valid = _time_valid_mask(k, t_total, t_block)

    contract_f = (((1,), (0,)), ((), ()))  # contract the flat N*N axis
    for b in range(flow_ref.shape[0]):     # tiny static unroll (bb <= 8)
        fb = flow_ref[b]                   # (tt, N*N) sub-slice bounds live ranges
        o_data = jax.lax.dot_general(fb, sel_o, contract_f,
                                     preferred_element_type=jnp.float32,
                                     precision=_HIGHEST)     # (tt, N)
        d_data = jax.lax.dot_general(fb, sel_d, contract_f,
                                     preferred_element_type=jnp.float32,
                                     precision=_HIGHEST)
        _accumulate_batch_gram(o_data, d_data, valid, b,
                               acc_o_ref, acc_d_ref, gram_dtype)

    _maybe_finalize(k, out_ref, acc_o_ref, acc_d_ref)


def _od_sim_direct_kernel(flow_ref, out_ref, acc_o_ref, acc_d_ref,
                          *, t_total, t_block, gram_dtype):
    """Large-N path: flow_ref is (bb, tt, N, N); VPU sums are already lane-dense."""
    k = pl.program_id(1)
    _maybe_init(k, acc_o_ref, acc_d_ref)
    valid = _time_valid_mask(k, t_total, t_block)

    for b in range(flow_ref.shape[0]):     # tiny static unroll (bb <= 8)
        fb = flow_ref[b].astype(jnp.float32)      # (tt, N, N)
        o_data = jnp.sum(fb, axis=1)              # batch_flow.sum(dim=1)
        d_data = jnp.sum(fb, axis=2)              # batch_flow.sum(dim=2)
        _accumulate_batch_gram(o_data, d_data, valid, b,
                               acc_o_ref, acc_d_ref, gram_dtype)

    _maybe_finalize(k, out_ref, acc_o_ref, acc_d_ref)


# --------------------------------------------------------------------------
# tiling / wrapper
# --------------------------------------------------------------------------
def _flat_block_bytes(bb, tt, nn, itemsize):
    sub = _sublane_multiple(itemsize)
    return bb * _round_up(tt, sub) * _round_up(nn, 128) * itemsize


def _direct_block_bytes(bb, tt, n, itemsize):
    sub = _sublane_multiple(itemsize)
    return bb * tt * _round_up(n, sub) * _round_up(n, 128) * itemsize


def _choose_tiles(B, T, block_bytes_fn, sub_mult, target_bytes, max_batch_block):
    """Pick (batch_block, time_block) so one *padded* input block ~ target."""
    # Batch-block cap: <= 8 keeps the per-batch static unroll tiny, and
    # <= ceil(B/2) keeps grid[0] >= 2 so the "parallel" batch axis can shard
    # across TensorCores (v7x has 2 TCs/chip; costs nothing on 1-TC chips).
    bb_cap = max(1, min(B, max_batch_block, 8))
    if B >= 2:
        bb_cap = min(bb_cap, pl.cdiv(B, 2))

    per_batch = block_bytes_fn(1, T)
    if per_batch <= target_bytes:
        bb = int(max(1, min(bb_cap, target_bytes // per_batch)))
        return bb, int(T)

    # One batch element per block; chunk T in sublane-aligned units so the
    # block's second-to-last dim stays (8,128)-friendly.
    per_unit = block_bytes_fn(1, sub_mult)
    n_units = max(1, int(target_bytes // per_unit))
    tt = min(int(T), n_units * sub_mult)
    return 1, max(1, tt)


def _default_vmem_limit_bytes():
    """~3/4 of per-core VMEM (~48 MiB on v7x, ~96 MiB on v5e/v6e); falls back
    to the v7x-safe 48 MiB when the hardware query is unavailable."""
    cap = None
    try:
        cap = getattr(pltpu.get_tpu_info(), "vmem_capacity_bytes", None)
    except Exception:
        cap = None
    if not cap:
        return 48 * _MIB
    return int(min(96 * _MIB, max(32 * _MIB, (int(cap) * 3) // 4)))


def od_similarity(flow, *, target_block_bytes=None, max_batch_block=8,
                  vmem_limit_bytes=None, gram_dtype=None, flat_threshold_n=64):
    """flow: (B, T, N, N)  ->  (B, 2, N, N)  (channel 0 = O-sim, 1 = D-sim)."""
    B, T, N, N2 = flow.shape
    if N != N2:
        raise ValueError("per-batch flow must be (T, N, N)")

    itemsize = jnp.dtype(flow.dtype).itemsize
    sub_mult = _sublane_multiple(itemsize)

    if vmem_limit_bytes is None:
        vmem_limit_bytes = _default_vmem_limit_bytes()
    if target_block_bytes is None:
        # Double-buffered inputs (2 buffers) take at most ~half of the VMEM
        # limit; the rest covers the output block, the f32 Gram accumulators,
        # the resident selectors and compiler temporaries.
        # -> ~12 MiB blocks on v7x (48 MiB limit), 16 MiB on v5e/v6e.
        target_block_bytes = min(16 * _MIB, vmem_limit_bytes // 4)
    target_block_bytes = max(int(target_block_bytes), 1)

    use_flat = N <= flat_threshold_n       # lane-dense path for small OD graphs

    if use_flat:
        nn = N * N
        bb, tt = _choose_tiles(
            B, T, lambda b, t: _flat_block_bytes(b, t, nn, itemsize),
            sub_mult, target_block_bytes, max_batch_block)
        grid = (pl.cdiv(B, bb), pl.cdiv(T, tt))

        flow_in = flow.reshape(B, T, nn)   # free: merges contiguous trailing dims
        eye = jnp.eye(N, dtype=flow.dtype)
        sel_o = jnp.tile(eye, (N, 1))      # row j*N+i -> e_i  (sum over j)
        sel_d = jnp.repeat(eye, N, axis=0)  # row j*N+i -> e_j  (sum over i)

        kernel = functools.partial(_od_sim_flat_kernel, t_total=T, t_block=tt,
                                   gram_dtype=gram_dtype)
        in_specs = [
            pl.BlockSpec((bb, tt, nn), lambda b, k: (b, k, 0)),
            pl.BlockSpec((nn, N), lambda b, k: (0, 0)),   # resident selectors
            pl.BlockSpec((nn, N), lambda b, k: (0, 0)),
        ]
        operands = (flow_in, sel_o, sel_d)
    else:
        bb, tt = _choose_tiles(
            B, T, lambda b, t: _direct_block_bytes(b, t, N, itemsize),
            sub_mult, target_block_bytes, max_batch_block)
        grid = (pl.cdiv(B, bb), pl.cdiv(T, tt))

        kernel = functools.partial(_od_sim_direct_kernel, t_total=T, t_block=tt,
                                   gram_dtype=gram_dtype)
        in_specs = [pl.BlockSpec((bb, tt, N, N), lambda b, k: (b, k, 0, 0))]
        operands = (flow,)

    grid_spec = pltpu.PrefetchScalarGridSpec(
        num_scalar_prefetch=0,
        grid=grid,
        in_specs=in_specs,
        # Same output block across the T axis -> resident target, written
        # back once per batch block.
        out_specs=pl.BlockSpec((bb, 2, N, N), lambda b, k: (b, 0, 0, 0)),
        scratch_shapes=[pltpu.VMEM((bb, N, N), jnp.float32),   # O-Gram acc
                        pltpu.VMEM((bb, N, N), jnp.float32)],  # D-Gram acc
    )

    return pl.pallas_call(
        kernel,
        out_shape=jax.ShapeDtypeStruct((B, 2, N, N), flow.dtype),
        grid_spec=grid_spec,
        compiler_params=pltpu.CompilerParams(
            dimension_semantics=("parallel", "arbitrary"),
            vmem_limit_bytes=int(vmem_limit_bytes),
        ),
    )(*operands)


# --------------------------------------------------------------------------
# pure-JAX reference mirroring the PyTorch module
# --------------------------------------------------------------------------
def _od_similarity_ref(flow):
    f = flow.astype(jnp.float32)
    o_data = jnp.sum(f, axis=2)                        # (B, T, N)
    d_data = jnp.sum(f, axis=3)                        # (B, T, N)
    o_norm = o_data / jnp.maximum(
        jnp.linalg.norm(o_data, axis=2, keepdims=True), _EPS)
    d_norm = d_data / jnp.maximum(
        jnp.linalg.norm(d_data, axis=2, keepdims=True), _EPS)
    sim_o = jnp.einsum('bti,btj->bij', o_norm, o_norm, precision=_HIGHEST)
    sim_d = jnp.einsum('bti,btj->bij', d_norm, d_norm, precision=_HIGHEST)
    return jnp.stack([sim_o, sim_d], axis=1).astype(flow.dtype)


if __name__ == "__main__":
    key = jax.random.PRNGKey(0)

    # Exercise: single-block fast path, T-chunked accumulation + remainder
    # masking, partial batch block, and the large-N (non-flattened) path.
    configs = [
        dict(B=2, T=8,  N=16,  kwargs={}),                             # flat, one chunk
        dict(B=3, T=12, N=16,  kwargs=dict(target_block_bytes=4096)),  # T chunks + remainder
        dict(B=3, T=13, N=16,  kwargs=dict(target_block_bytes=4096)),  # odd T remainder
        dict(B=3, T=8,  N=16,  kwargs=dict(max_batch_block=2)),        # partial batch block
        dict(B=2, T=8,  N=128, kwargs={}),                             # direct (large-N) path
    ]

    for i, cfg in enumerate(configs):
        key, sub = jax.random.split(key)
        B, T, N = cfg["B"], cfg["T"], cfg["N"]
        flow = jax.random.uniform(sub, (B, T, N, N), dtype=jnp.float32)

        out = jax.block_until_ready(od_similarity(flow, **cfg["kwargs"]))
        ref = _od_similarity_ref(flow)

        assert out.shape == (B, 2, N, N), (i, out.shape)
        assert jnp.allclose(out, ref, atol=1e-5, rtol=1e-5), f"mismatch in config {i}"

    print("KERNEL_OK")
</pallas_src>

<mosaic_0001>
module attributes {stable_mosaic.version = 11 : i64} {
  func.func @_od_sim_flat_kernel(%arg0: i32, %arg1: i32, %arg2: memref<1x8x256xf32, #tpu.memory_space<vmem>>, %arg3: memref<256x16xf32, #tpu.memory_space<vmem>>, %arg4: memref<256x16xf32, #tpu.memory_space<vmem>>, %arg5: memref<1x2x16x16xf32, #tpu.memory_space<vmem>>, %arg6: memref<1x16x16xf32, #tpu.memory_space<vmem>>, %arg7: memref<1x16x16xf32, #tpu.memory_space<vmem>>) attributes {dimension_semantics = [#tpu.dimension_semantics<parallel>, #tpu.dimension_semantics<arbitrary>], iteration_bounds = array<i64: 2, 1>, scalar_prefetch = 0 : i64, scratch_operands = 2 : i64, tpu.core_type = #tpu.core_type<tc>, window_params = [{transform_indices = @transform_0, window_bounds = array<i64: 1, 8, 256>}, {pipeline_mode = #tpu.pipeline_mode<synchronous>, transform_indices = @transform_1, window_bounds = array<i64: 256, 16>}, {pipeline_mode = #tpu.pipeline_mode<synchronous>, transform_indices = @transform_2, window_bounds = array<i64: 256, 16>}, {transform_indices = @transform_3, window_bounds = array<i64: 1, 2, 16, 16>}]} {
    %c0_i32 = arith.constant 0 : i32
    %0 = arith.cmpi eq, %arg1, %c0_i32 : i32
    %1 = arith.extui %0 : i1 to i32
    %c0_i32_0 = arith.constant 0 : i32
    %2 = arith.cmpi ne, %1, %c0_i32_0 : i32
    scf.if %2 {
      %cst_28 = arith.constant 0.000000e+00 : f32
      %42 = vector.broadcast %cst_28 : f32 to vector<1x16x16xf32>
      %c0_29 = arith.constant 0 : index
      %c0_30 = arith.constant 0 : index
      %c0_31 = arith.constant 0 : index
      %43 = vector.load %arg6[%c0_29, %c0_30, %c0_31] : memref<1x16x16xf32, #tpu.memory_space<vmem>>, vector<1x16x16xf32>
      tpu.vector_store %arg6[%c0_29, %c0_30, %c0_31], %42 {strides = array<i32>} : memref<1x16x16xf32, #tpu.memory_space<vmem>>, vector<1x16x16xf32>,
      %cst_32 = arith.constant 0.000000e+00 : f32
      %44 = vector.broadcast %cst_32 : f32 to vector<1x16x16xf32>
      %c0_33 = arith.constant 0 : index
      %c0_34 = arith.constant 0 : index
      %c0_35 = arith.constant 0 : index
      %45 = vector.load %arg7[%c0_33, %c0_34, %c0_35] : memref<1x16x16xf32, #tpu.memory_space<vmem>>, vector<1x16x16xf32>
      tpu.vector_store %arg7[%c0_33, %c0_34, %c0_35], %44 {strides = array<i32>} : memref<1x16x16xf32, #tpu.memory_space<vmem>>, vector<1x16x16xf32>,
    } else {
    }
    %c0 = arith.constant 0 : index
    %c0_1 = arith.constant 0 : index
    %3 = vector.load %arg3[%c0, %c0_1] : memref<256x16xf32, #tpu.memory_space<vmem>>, vector<256x16xf32>
    %c0_2 = arith.constant 0 : index
    %c0_3 = arith.constant 0 : index
    %4 = vector.load %arg4[%c0_2, %c0_3] : memref<256x16xf32, #tpu.memory_space<vmem>>, vector<256x16xf32>
    %c0_4 = arith.constant 0 : index
    %c0_5 = arith.constant 0 : index
    %c0_6 = arith.constant 0 : index
    %5 = vector.load %arg2[%c0_4, %c0_5, %c0_6] : memref<1x8x256xf32, #tpu.memory_space<vmem>>, vector<1x8x256xf32>
    %6 = vector.shape_cast %5 : vector<1x8x256xf32> to vector<8x256xf32>
    %cst = arith.constant dense<0.000000e+00> : vector<8x16xf32>
    %7 = tpu.matmul %6, %3, %cst {dimension_numbers = #tpu.dot_dimension_numbers<[1], [0], [0], [1], [0, 0, 1, 1], [], []>, precision = #tpu.contract_precision<fp32>} : vector<8x256xf32>, vector<256x16xf32>, vector<8x16xf32> -> vector<8x16xf32>
    %cst_7 = arith.constant dense<0.000000e+00> : vector<8x16xf32>
    %8 = tpu.matmul %6, %4, %cst_7 {dimension_numbers = #tpu.dot_dimension_numbers<[1], [0], [0], [1], [0, 0, 1, 1], [], []>, precision = #tpu.contract_precision<fp32>} : vector<8x256xf32>, vector<256x16xf32>, vector<8x16xf32> -> vector<8x16xf32>
    %9 = arith.mulf %7, %7 : vector<8x16xf32>
    %cst_8 = arith.constant dense<0.000000e+00> : vector<8xf32>
    %10 = vector.multi_reduction <add>, %9, %cst_8 [1] : vector<8x16xf32> to vector<8xf32>
    %11 = vector.shape_cast %10 : vector<8xf32> to vector<8x1xf32>
    %12 = math.sqrt %11 : vector<8x1xf32>
    %cst_9 = arith.constant 9.99999996E-13 : f32
    %13 = vector.broadcast %cst_9 : f32 to vector<8x1xf32>
    %14 = arith.maximumf %12, %13 : vector<8x1xf32>
    %15 = vector.broadcast %14 : vector<8x1xf32> to vector<8x16xf32>
    %16 = arith.divf %7, %15 : vector<8x16xf32>
    %17 = arith.mulf %8, %8 : vector<8x16xf32>
    %cst_10 = arith.constant dense<0.000000e+00> : vector<8xf32>
    %18 = vector.multi_reduction <add>, %17, %cst_10 [1] : vector<8x16xf32> to vector<8xf32>
    %19 = vector.shape_cast %18 : vector<8xf32> to vector<8x1xf32>
    %20 = math.sqrt %19 : vector<8x1xf32>
    %cst_11 = arith.constant 9.99999996E-13 : f32
    %21 = vector.broadcast %cst_11 : f32 to vector<8x1xf32>
    %22 = arith.maximumf %20, %21 : vector<8x1xf32>
    %23 = vector.broadcast %22 : vector<8x1xf32> to vector<8x16xf32>
    %24 = arith.divf %8, %23 : vector<8x16xf32>
    %c0_12 = arith.constant 0 : index
    %c0_13 = arith.constant 0 : index
    %c0_14 = arith.constant 0 : index
    %25 = vector.load %arg6[%c0_12, %c0_13, %c0_14] : memref<1x16x16xf32, #tpu.memory_space<vmem>>, vector<1x16x16xf32>
    %26 = vector.shape_cast %25 : vector<1x16x16xf32> to vector<16x16xf32>
    %cst_15 = arith.constant dense<0.000000e+00> : vector<16x16xf32>
    %27 = tpu.matmul %16, %16, %cst_15 {dimension_numbers = #tpu.dot_dimension_numbers<[0], [0], [1], [1], [0, 1, 1, 1], [], []>, precision = #tpu.contract_precision<fp32>} : vector<8x16xf32>, vector<8x16xf32>, vector<16x16xf32> -> vector<16x16xf32>
    %28 = arith.addf %26, %27 : vector<16x16xf32>
    %c0_16 = arith.constant 0 : index
    %c0_17 = arith.constant 0 : index
    %c0_18 = arith.constant 0 : index
    %29 = vector.load %arg6[%c0_16, %c0_17, %c0_18] : memref<1x16x16xf32, #tpu.memory_space<vmem>>, vector<1x16x16xf32>
    %30 = vector.shape_cast %29 : vector<1x16x16xf32> to vector<16x16xf32>
    %31 = vector.shape_cast %28 : vector<16x16xf32> to vector<1x16x16xf32>
    tpu.vector_store %arg6[%c0_16, %c0_17, %c0_18], %31 {strides = array<i32>} : memref<1x16x16xf32, #tpu.memory_space<vmem>>, vector<1x16x16xf32>,
    %c0_19 = arith.constant 0 : index
    %c0_20 = arith.constant 0 : index
    %c0_21 = arith.constant 0 : index
    %32 = vector.load %arg7[%c0_19, %c0_20, %c0_21] : memref<1x16x16xf32, #tpu.memory_space<vmem>>, vector<1x16x16xf32>
    %33 = vector.shape_cast %32 : vector<1x16x16xf32> to vector<16x16xf32>
    %cst_22 = arith.constant dense<0.000000e+00> : vector<16x16xf32>
    %34 = tpu.matmul %24, %24, %cst_22 {dimension_numbers = #tpu.dot_dimension_numbers<[0], [0], [1], [1], [0, 1, 1, 1], [], []>, precision = #tpu.contract_precision<fp32>} : vector<8x16xf32>, vector<8x16xf32>, vector<16x16xf32> -> vector<16x16xf32>
    %35 = arith.addf %33, %34 : vector<16x16xf32>
    %c0_23 = arith.constant 0 : index
    %c0_24 = arith.constant 0 : index
    %c0_25 = arith.constant 0 : index
    %36 = vector.load %arg7[%c0_23, %c0_24, %c0_25] : memref<1x16x16xf32, #tpu.memory_space<vmem>>, vector<1x16x16xf32>
    %37 = vector.shape_cast %36 : vector<1x16x16xf32> to vector<16x16xf32>
    %38 = vector.shape_cast %35 : vector<16x16xf32> to vector<1x16x16xf32>
    tpu.vector_store %arg7[%c0_23, %c0_24, %c0_25], %38 {strides = array<i32>} : memref<1x16x16xf32, #tpu.memory_space<vmem>>, vector<1x16x16xf32>,
    %c0_i32_26 = arith.constant 0 : i32
    %39 = arith.cmpi eq, %arg1, %c0_i32_26 : i32
    %40 = arith.extui %39 : i1 to i32
    %c0_i32_27 = arith.constant 0 : i32
    %41 = arith.cmpi ne, %40, %c0_i32_27 : i32
    scf.if %41 {
      %c0_28 = arith.constant 0 : index
      %c0_29 = arith.constant 0 : index
      %c0_30 = arith.constant 0 : index
      %42 = vector.load %arg6[%c0_28, %c0_29, %c0_30] : memref<1x16x16xf32, #tpu.memory_space<vmem>>, vector<1x16x16xf32>
      %c0_31 = arith.constant 0 : index
      %c0_32 = arith.constant 0 : index
      %c0_33 = arith.constant 0 : index
      %c0_34 = arith.constant 0 : index
      %43 = vector.load %arg5[%c0_31, %c0_32, %c0_33, %c0_34] : memref<1x2x16x16xf32, #tpu.memory_space<vmem>>, vector<1x1x16x16xf32>
      %44 = vector.shape_cast %43 : vector<1x1x16x16xf32> to vector<1x16x16xf32>
      %45 = vector.shape_cast %42 : vector<1x16x16xf32> to vector<1x1x16x16xf32>
      tpu.vector_store %arg5[%c0_31, %c0_32, %c0_33, %c0_34], %45 {strides = array<i32>} : memref<1x2x16x16xf32, #tpu.memory_space<vmem>>, vector<1x1x16x16xf32>,
      %c0_35 = arith.constant 0 : index
      %c0_36 = arith.constant 0 : index
      %c0_37 = arith.constant 0 : index
      %46 = vector.load %arg7[%c0_35, %c0_36, %c0_37] : memref<1x16x16xf32, #tpu.memory_space<vmem>>, vector<1x16x16xf32>
      %c0_38 = arith.constant 0 : index
      %c1 = arith.constant 1 : index
      %c0_39 = arith.constant 0 : index
      %c0_40 = arith.constant 0 : index
      %47 = vector.load %arg5[%c0_38, %c1, %c0_39, %c0_40] : memref<1x2x16x16xf32, #tpu.memory_space<vmem>>, vector<1x1x16x16xf32>
      %48 = vector.shape_cast %47 : vector<1x1x16x16xf32> to vector<1x16x16xf32>
      %49 = vector.shape_cast %46 : vector<1x16x16xf32> to vector<1x1x16x16xf32>
      tpu.vector_store %arg5[%c0_38, %c1, %c0_39, %c0_40], %49 {strides = array<i32>} : memref<1x2x16x16xf32, #tpu.memory_space<vmem>>, vector<1x1x16x16xf32>,
    } else {
    }
    return
  }
  func.func @transform_0(%arg0: i32, %arg1: i32) -> (i32, i32, i32) {
    %c0_i32 = arith.constant 0 : i32
    %c0_i32_0 = arith.constant 0 : i32
    return %arg0, %arg1, %c0_i32 : i32, i32, i32
  }
  func.func @transform_1(%arg0: i32, %arg1: i32) -> (i32, i32) {
    %c0_i32 = arith.constant 0 : i32
    %c0_i32_0 = arith.constant 0 : i32
    %c0_i32_1 = arith.constant 0 : i32
    return %c0_i32, %c0_i32_0 : i32, i32
  }
  func.func @transform_2(%arg0: i32, %arg1: i32) -> (i32, i32) {
    %c0_i32 = arith.constant 0 : i32
    %c0_i32_0 = arith.constant 0 : i32
    %c0_i32_1 = arith.constant 0 : i32
    return %c0_i32, %c0_i32_0 : i32, i32
  }
  func.func @transform_3(%arg0: i32, %arg1: i32) -> (i32, i32, i32, i32) {
    %c0_i32 = arith.constant 0 : i32
    %c0_i32_0 = arith.constant 0 : i32
    %c0_i32_1 = arith.constant 0 : i32
    %c0_i32_2 = arith.constant 0 : i32
    return %arg0, %c0_i32, %c0_i32_0, %c0_i32_1 : i32, i32, i32, i32
  }
}

</mosaic_0001>

<llo_original>
// kernel: tpu_custom_call.1
$region0: #{tpu_custom_call.1}
  #allocation0 [shape = 'u32[]', space=smem, size = 0x4, offset = 0x4, fixed_abs, tag = 'smem constant byte address 0x4 - core index']
  #allocation1 [shape = 'u32[144,128]{1,0:T(1,128)}', space=vmem, size = 0x12000, scoped, tag = 'internal scratch']
  #allocation2 [shape = 'f32[1,16,16]{2,1,0:T(8,128)}', space=vmem, size = 0x2000, scoped, tag = 'scratch operand']
  #allocation3 [shape = 'f32[1,16,16]{2,1,0:T(8,128)}', space=vmem, size = 0x2000, scoped, tag = 'scratch operand']
  %s0 = inlined_call_operand.vmem [shape: f32[2,8,256], index: 0, kind: input, shape index: {}]
  %s1 = inlined_call_operand.vmem [shape: f32[256,16], index: 1, kind: input, shape index: {}]
  %s2 = inlined_call_operand.vmem [shape: f32[256,16], index: 2, kind: input, shape index: {}]
  %s3 = inlined_call_operand.hbm [shape: f32[2,2,16,16], index: 3, kind: output, shape index: {}]
  %s4 = sld [smem:[#allocation0]]
  $region53: #{tpu_custom_call.1} parent=0
    _
  %s6 = ssub.s32 1, %s4
  %s7 = scalar_select 0, %s6, %s4
  $region1: #{tpu_custom_call.1} parent=0
    #allocation4 [shape = 'u8[32768]{0}', space=vmem, size = 0x8000, scoped, tag = 'output window, operand 0']
    #allocation5 [shape = 's32[2]{0}', space=sflag, size = 0x8, scoped, tag = 'scoped memory for tpu_custom_call.1']
    %8 = vsyncpa [#allocation5], 0
    %s9 = scalar_lea.sflag [#allocation5], 1
    %10 = vsyncpa %s9, 0
    loop: start=0, step=1, limit=4
    $region2: #{tpu_custom_call.1} parent=1 // loop_pre_header
      _
    $region3: #{tpu_custom_call.1} parent=1 // loop_header
      %s12 = sphi 0, %s16
      %p13 = scmp.ge.s32.totalorder %s12, 4
      %s19 = sphi 0, %s31
      %s20 = sphi 0, %s27
      %s21 = sphi 0, %s19
      %s22 = sphi 0, %s20
      %s23 = sphi 0, %s21
      %s24 = sphi 0, %s22
      %s36 = sphi 0, %s38
      %s39 = sphi 0, %s36
      %s40 = sphi 0, %s39
      %s56 = sphi 0, %s40
      %s60 = sphi 0, %s60
      %s62 = sphi 0, %s60
      %s63 = sphi 0, %s62
      %s77 = sphi 0, %s63
      %s81 = sphi 0, %s81
      %s83 = sphi 0, %s81
      %s84 = sphi 0, %s83
      %s98 = sphi 0, %s84
      %s104 = sphi 0, %s106
      %s107 = sphi 0, %s104
      %s108 = sphi 0, %s107
      %s124 = sphi 0, %s108
    $region4: #{tpu_custom_call.1} parent=1 // loop_header_branch
      %15 = sbr.rel (%p13) target = $region8
    $region5: #{tpu_custom_call.1} parent=1 // loop_body
      %s17 = ssub.s32 %s12, 1
      %s18 = ssub.s32 %s12, 2
      %s25 = sadd.s32 1, %s20
      %p26 = scmp.ge.s32.totalorder %s25, 1
      %s27 = scalar_select %p26, 0, %s25
      %s28 = sadd.s32 1, %s19
      %s29 = scalar_select %p26, %s28, %s19
      %p30 = scmp.ge.s32.totalorder %s29, 2
      %s31 = scalar_select %p30, 0, %s29
      %s32 = ssub.s32 %s19, %s31
      %s33 = ssub.s32 %s20, %s27
      %s34 = sor.u32 %s32, %s33
      %p35 = scmp.eq.s32.totalorder %s34, 0
      %s37 = sadd.s32 %s36, 1
      %s38 = scalar_select %p35, %s36, %s37
      %p41 = pneg %p35
      %p42 = scmp.eq.s32.totalorder %s12, 1
      %p43 = por %p41, %p42
      %p44 = scmp.ne.s32.totalorder %s36, %s39
      %p45 = scmp.eq.s32.totalorder %s12, 0
      %p46 = por %p44, %p45
      %p47 = scmp.ne.s32.totalorder %s36, %s39
      %p48 = scmp.eq.s32.totalorder %s17, 1
      %p49 = por %p47, %p48
      %p50 = scmp.ne.s32.totalorder %s39, %s40
      %p51 = scmp.eq.s32.totalorder %s17, 0
      %p52 = por %p50, %p51
      %p53 = scmp.ne.s32.totalorder %s39, %s40
      %p54 = scmp.eq.s32.totalorder %s18, 1
      %p55 = por %p53, %p54
      %p57 = scmp.ne.s32.totalorder %s40, %s56
      %p58 = scmp.eq.s32.totalorder %s18, 0
      %p59 = por %p57, %p58
      %s61 = sadd.s32 %s60, 1
      %p64 = scmp.eq.s32.totalorder %s12, 1
      %p65 = scmp.ne.s32.totalorder %s60, %s62
      %p66 = scmp.eq.s32.totalorder %s12, 0
      %p67 = por %p65, %p66
      %p68 = scmp.ne.s32.totalorder %s60, %s62
      %p69 = scmp.eq.s32.totalorder %s17, 1
      %p70 = por %p68, %p69
      %p71 = scmp.ne.s32.totalorder %s62, %s63
      %p72 = scmp.eq.s32.totalorder %s17, 0
      %p73 = por %p71, %p72
      %p74 = scmp.ne.s32.totalorder %s62, %s63
      %p75 = scmp.eq.s32.totalorder %s18, 1
      %p76 = por %p74, %p75
      %p78 = scmp.ne.s32.totalorder %s63, %s77
      %p79 = scmp.eq.s32.totalorder %s18, 0
      %p80 = por %p78, %p79
      %s82 = sadd.s32 %s81, 1
      %p85 = scmp.eq.s32.totalorder %s12, 1
      %p86 = scmp.ne.s32.totalorder %s81, %s83
      %p87 = scmp.eq.s32.totalorder %s12, 0
      %p88 = por %p86, %p87
      %p89 = scmp.ne.s32.totalorder %s81, %s83
      %p90 = scmp.eq.s32.totalorder %s17, 1
      %p91 = por %p89, %p90
      %p92 = scmp.ne.s32.totalorder %s83, %s84
      %p93 = scmp.eq.s32.totalorder %s17, 0
      %p94 = por %p92, %p93
      %p95 = scmp.ne.s32.totalorder %s83, %s84
      %p96 = scmp.eq.s32.totalorder %s18, 1
      %p97 = por %p95, %p96
      %p99 = scmp.ne.s32.totalorder %s84, %s98
      %p100 = scmp.eq.s32.totalorder %s18, 0
      %p101 = por %p99, %p100
      %s102 = ssub.s32 %s19, %s31
      %p103 = scmp.eq.s32.totalorder %s102, 0
      %s105 = sadd.s32 %s104, 1
      %s106 = scalar_select %p103, %s104, %s105
      %p109 = pneg %p103
      %p110 = scmp.eq.s32.totalorder %s12, 1
      %p111 = por %p109, %p110
      %p112 = scmp.ne.s32.totalorder %s104, %s107
      %p113 = scmp.eq.s32.totalorder %s12, 0
      %p114 = por %p112, %p113
      %p115 = scmp.ne.s32.totalorder %s104, %s107
      %p116 = scmp.eq.s32.totalorder %s17, 1
      %p117 = por %p115, %p116
      %p118 = scmp.ne.s32.totalorder %s107, %s108
      %p119 = scmp.eq.s32.totalorder %s17, 0
      %p120 = por %p118, %p119
      %p121 = scmp.ne.s32.totalorder %s107, %s108
      %p122 = scmp.eq.s32.totalorder %s18, 1
      %p123 = por %p121, %p122
      %p125 = scmp.ne.s32.totalorder %s108, %s124
      %p126 = scmp.eq.s32.totalorder %s18, 0
      %p127 = por %p125, %p126
      %p128 = scmp.le.s32.totalorder 1, %s12
      %p129 = scmp.lt.s32.totalorder %s12, 3
      %p130 = pnand %p128, %p129
      %p131 = pneg %p130
      // Predicated region
      $region9: #{tpu_custom_call.1} parent=5 // pred_check
        _
      $region10: #{tpu_custom_call.1} parent=5 // pred_check_branch
        %133 = sbr.rel (%p130) target = $region12
      $region11: #{tpu_custom_call.1} parent=5 // pred_region
        %s134 = ssub.s32 %s12, 1
        // Predicated region
        $region13: #{tpu_custom_call.1} parent=11 // pred_check
          %p135 = pneg %p73
        $region14: #{tpu_custom_call.1} parent=11 // pred_check_branch
          %137 = sbr.rel (%p135) target = $region16
        $region15: #{tpu_custom_call.1} parent=11 // pred_region
          _
        $region16: #{tpu_custom_call.1} parent=11 // pred_fallthru
          _
        // Predicated region
        $region17: #{tpu_custom_call.1} parent=11 // pred_check
          %p138 = pneg %p94
        $region18: #{tpu_custom_call.1} parent=11 // pred_check_branch
          %140 = sbr.rel (%p138) target = $region20
        $region19: #{tpu_custom_call.1} parent=11 // pred_region
          _
        $region20: #{tpu_custom_call.1} parent=11 // pred_fallthru
          _
      $region12: #{tpu_custom_call.1} parent=5 // pred_fallthru
        _
      %p141 = scmp.lt.s32.totalorder %s12, 2
      // Predicated region
      $region21: #{tpu_custom_call.1} parent=5 // pred_check
        %p142 = pneg %p141
      $region22: #{tpu_custom_call.1} parent=5 // pred_check_branch
        %144 = sbr.rel (%p142) target = $region24
      $region23: #{tpu_custom_call.1} parent=5 // pred_region
        // Predicated region
        $region25: #{tpu_custom_call.1} parent=23 // pred_check
          %p145 = pneg %p46
        $region26: #{tpu_custom_call.1} parent=23 // pred_check_branch
          %147 = sbr.rel (%p145) target = $region28
        $region27: #{tpu_custom_call.1} parent=23 // pred_region
          %p148 = scmp.lt.s32.totalorder %s19, 1
          %s149 = scalar_select %p148, %s19, 1
          %p150 = scmp.lt.s32.totalorder %s20, 0
          %s151 = scalar_select %p150, %s20, 0
          %s152 = smul.addr %s151, 2
          %s153 = smul.addr %s149, 2
          %s154 = sadd.s32 %s152, %s153
          %s155 = smul.addr %s154, 8
          %s156 = scalar_lea.vmem %s0, %s155
        $region28: #{tpu_custom_call.1} parent=23 // pred_fallthru
          _
      $region24: #{tpu_custom_call.1} parent=5 // pred_fallthru
        _
      %p157 = scmp.le.s32.totalorder 1, %s12
      %p158 = scmp.lt.s32.totalorder %s12, 3
      %p159 = pnand %p157, %p158
      %p160 = pneg %p159
      // Predicated region
      $region29: #{tpu_custom_call.1} parent=5 // pred_check
        _
      $region30: #{tpu_custom_call.1} parent=5 // pred_check_branch
        %162 = sbr.rel (%p159) target = $region32
      $region31: #{tpu_custom_call.1} parent=5 // pred_region
        %s163 = ssub.s32 %s12, 1
        %p164 = scmp.lt.s32.totalorder %s21, 1
        %s165 = scalar_select %p164, %s21, 1
        %p166 = scmp.lt.s32.totalorder %s22, 0
        %s167 = scalar_select %p166, %s22, 0
        %s168 = smul.addr %s167, 2
        %s169 = smul.addr %s165, 2
        %s170 = sadd.s32 %s168, %s169
        %s171 = smul.addr %s170, 8
        %s172 = scalar_lea.vmem %s0, %s171
        %p173 = pneg %p52
        %p174 = pneg %p49
        %p175 = pneg %p73
        %p176 = pneg %p70
        %p177 = pneg %p94
        %p178 = pneg %p91
        %p179 = pneg %p120
        %p180 = pneg %p117
        %s181 = sand.u32 %s107, 1
        %s182 = scalar_lea.sflag [#allocation5], %s181
        %s183 = sand.u32 %s107, 1
        %s184 = smul.addr %s183, 32
        %s185 = scalar_lea.vmem [#allocation4], %s184
        %p186 = scmp.lt.s32.totalorder %s21, 1
        %s187 = scalar_select %p186, %s21, 1
        %p188 = scmp.lt.s32.totalorder %s22, 0
        %s189 = scalar_select %p188, %s22, 0
        %s190 = smul.addr %s189, 2
        %s191 = smul.addr %s187, 2
        %s192 = sadd.s32 %s190, %s191
        %s193 = smul.addr %s192, 8
        %s194 = scalar_lea.vmem %s0, %s193
        %p195 = scmp.eq.s32.totalorder %s22, 0
        // Predicated region
        $region33: #{tpu_custom_call.1} parent=31 // pred_check
          %p196 = pneg %p195
        $region34: #{tpu_custom_call.1} parent=31 // pred_check_branch
          %198 = sbr.rel (%p196) target = $region36
        $region35: #{tpu_custom_call.1} parent=31 // pred_region
          %vm199 = vcmask 130048
          %200 = vst.msk [vmem:[#allocation2] sm:$0xff] %vm199, 0.0
          %201 = vst.msk [vmem:[#allocation2 + $0x8] sm:$0xff] %vm199, 0.0
          %202 = vst.msk [vmem:[#allocation3] sm:$0xff] %vm199, 0.0
          %203 = vst.msk [vmem:[#allocation3 + $0x8] sm:$0xff] %vm199, 0.0
        $region36: #{tpu_custom_call.1} parent=31 // pred_fallthru
          _
        %v204 = vld [vmem:[%s1] sm:$0xff]
        %v205 = vld [vmem:[%s1 + $0x8] sm:$0xff]
        %v206 = vld [vmem:[%s1 + $0x10] sm:$0xff]
        %v207 = vld [vmem:[%s1 + $0x18] sm:$0xff]
        %v208 = vld [vmem:[%s1 + $0x20] sm:$0xff]
        %v209 = vld [vmem:[%s1 + $0x28] sm:$0xff]
        %v210 = vld [vmem:[%s1 + $0x30] sm:$0xff]
        %v211 = vld [vmem:[%s1 + $0x38] sm:$0xff]
        %v212 = vld [vmem:[%s1 + $0x40] sm:$0xff]
        %v213 = vld [vmem:[%s1 + $0x48] sm:$0xff]
        %v214 = vld [vmem:[%s1 + $0x50] sm:$0xff]
        %v215 = vld [vmem:[%s1 + $0x58] sm:$0xff]
        %v216 = vld [vmem:[%s1 + $0x60] sm:$0xff]
        %v217 = vld [vmem:[%s1 + $0x68] sm:$0xff]
        %v218 = vld [vmem:[%s1 + $0x70] sm:$0xff]
        %v219 = vld [vmem:[%s1 + $0x78] sm:$0xff]
        %v220 = vld [vmem:[%s1 + $0x80] sm:$0xff]
        %v221 = vld [vmem:[%s1 + $0x88] sm:$0xff]
        %v222 = vld [vmem:[%s1 + $0x90] sm:$0xff]
        %v223 = vld [vmem:[%s1 + $0x98] sm:$0xff]
        %v224 = vld [vmem:[%s1 + $0xa0] sm:$0xff]
        %v225 = vld [vmem:[%s1 + $0xa8] sm:$0xff]
        %v226 = vld [vmem:[%s1 + $0xb0] sm:$0xff]
        %v227 = vld [vmem:[%s1 + $0xb8] sm:$0xff]
        %v228 = vld [vmem:[%s1 + $0xc0] sm:$0xff]
        %v229 = vld [vmem:[%s1 + $0xc8] sm:$0xff]
        %v230 = vld [vmem:[%s1 + $0xd0] sm:$0xff]
        %v231 = vld [vmem:[%s1 + $0xd8] sm:$0xff]
        %v232 = vld [vmem:[%s1 + $0xe0] sm:$0xff]
        %v233 = vld [vmem:[%s1 + $0xe8] sm:$0xff]
        %v234 = vld [vmem:[%s1 + $0xf0] sm:$0xff]
        %v235 = vld [vmem:[%s1 + $0xf8] sm:$0xff]
        %v236 = vld [vmem:[%s2] sm:$0xff]
        %v237 = vld [vmem:[%s2 + $0x8] sm:$0xff]
        %v238 = vld [vmem:[%s2 + $0x10] sm:$0xff]
        %v239 = vld [vmem:[%s2 + $0x18] sm:$0xff]
        %v240 = vld [vmem:[%s2 + $0x20] sm:$0xff]
        %v241 = vld [vmem:[%s2 + $0x28] sm:$0xff]
        %v242 = vld [vmem:[%s2 + $0x30] sm:$0xff]
        %v243 = vld [vmem:[%s2 + $0x38] sm:$0xff]
        %v244 = vld [vmem:[%s2 + $0x40] sm:$0xff]
        %v245 = vld [vmem:[%s2 + $0x48] sm:$0xff]
        %v246 = vld [vmem:[%s2 + $0x50] sm:$0xff]
        %v247 = vld [vmem:[%s2 + $0x58] sm:$0xff]
        %v248 = vld [vmem:[%s2 + $0x60] sm:$0xff]
        %v249 = vld [vmem:[%s2 + $0x68] sm:$0xff]
        %v250 = vld [vmem:[%s2 + $0x70] sm:$0xff]
        %v251 = vld [vmem:[%s2 + $0x78] sm:$0xff]
        %v252 = vld [vmem:[%s2 + $0x80] sm:$0xff]
        %v253 = vld [vmem:[%s2 + $0x88] sm:$0xff]
        %v254 = vld [vmem:[%s2 + $0x90] sm:$0xff]
        %v255 = vld [vmem:[%s2 + $0x98] sm:$0xff]
        %v256 = vld [vmem:[%s2 + $0xa0] sm:$0xff]
        %v257 = vld [vmem:[%s2 + $0xa8] sm:$0xff]
        %v258 = vld [vmem:[%s2 + $0xb0] sm:$0xff]
        %v259 = vld [vmem:[%s2 + $0xb8] sm:$0xff]
        %v260 = vld [vmem:[%s2 + $0xc0] sm:$0xff]
        %v261 = vld [vmem:[%s2 + $0xc8] sm:$0xff]
        %v262 = vld [vmem:[%s2 + $0xd0] sm:$0xff]
        %v263 = vld [vmem:[%s2 + $0xd8] sm:$0xff]
        %v264 = vld [vmem:[%s2 + $0xe0] sm:$0xff]
        %v265 = vld [vmem:[%s2 + $0xe8] sm:$0xff]
        %v266 = vld [vmem:[%s2 + $0xf0] sm:$0xff]
        %v267 = vld [vmem:[%s2 + $0xf8] sm:$0xff]
        %v268 = vld [vmem:[%s194] sm:$0xff]
        %v269 = vld [vmem:[%s194 + $0x8] sm:$0xff]
        %270 = vmatprep.subr.mxu0 0.0
        %v271 = vand.u32 %v204, 4294901760
        %272 = vmatpush1.msra.mxu0 %v271
        %273 = vmatprep.subr.mxu0 0.0
        %v274 = vand.u32 %v205, 4294901760
        %275 = vmatpush1.msra.mxu0 %v274
        %276 = vmatprep.subr.mxu0 0.0
        %v277 = vand.u32 %v206, 4294901760
        %278 = vmatpush1.msra.mxu0 %v277
        %279 = vmatprep.subr.mxu0 0.0
        %v280 = vand.u32 %v207, 4294901760
        %281 = vmatpush1.msra.mxu0 %v280
        %282 = vmatprep.subr.mxu0 0.0
        %v283 = vand.u32 %v208, 4294901760
        %284 = vmatpush1.msra.mxu0 %v283
        %285 = vmatprep.subr.mxu0 0.0
        %v286 = vand.u32 %v209, 4294901760
        %287 = vmatpush1.msra.mxu0 %v286
        %288 = vmatprep.subr.mxu0 0.0
        %v289 = vand.u32 %v210, 4294901760
        %290 = vmatpush1.msra.mxu0 %v289
        %291 = vmatprep.subr.mxu0 0.0
        %v292 = vand.u32 %v211, 4294901760
        %293 = vmatpush1.msra.mxu0 %v292
        %294 = vmatprep.subr.mxu0 0.0
        %v295 = vand.u32 %v212, 4294901760
        %296 = vmatpush1.msra.mxu0 %v295
        %297 = vmatprep.subr.mxu0 0.0
        %v298 = vand.u32 %v213, 4294901760
        %299 = vmatpush1.msra.mxu0 %v298
        %300 = vmatprep.subr.mxu0 0.0
        %v301 = vand.u32 %v214, 4294901760
        %302 = vmatpush1.msra.mxu0 %v301
        %303 = vmatprep.subr.mxu0 0.0
        %v304 = vand.u32 %v215, 4294901760
        %305 = vmatpush1.msra.mxu0 %v304
        %306 = vmatprep.subr.mxu0 0.0
        %v307 = vand.u32 %v216, 4294901760
        %308 = vmatpush1.msra.mxu0 %v307
        %309 = vmatprep.subr.mxu0 0.0
        %v310 = vand.u32 %v217, 4294901760
        %311 = vmatpush1.msra.mxu0 %v310
        %312 = vmatprep.subr.mxu0 0.0
        %v313 = vand.u32 %v218, 4294901760
        %314 = vmatpush1.msra.mxu0 %v313
        %315 = vmatprep.subr.mxu0 0.0
        %v316 = vand.u32 %v219, 4294901760
        %317 = vmatpush1.msra.mxu0 %v316
        %318 = vmatprep.subr.mxu0 0.0
        %v319 = vand.u32 %v220, 4294901760
        %320 = vmatpush1.msra.mxu0 %v319
        %321 = vmatprep.subr.mxu0 0.0
        %v322 = vand.u32 %v221, 4294901760
        %323 = vmatpush1.msra.mxu0 %v322
        %324 = vmatprep.subr.mxu0 0.0
        %v325 = vand.u32 %v222, 4294901760
        %326 = vmatpush1.msra.mxu0 %v325
        %327 = vmatprep.subr.mxu0 0.0
        %v328 = vand.u32 %v223, 4294901760
        %329 = vmatpush1.msra.mxu0 %v328
        %330 = vmatprep.subr.mxu0 0.0
        %v331 = vand.u32 %v224, 4294901760
        %332 = vmatpush1.msra.mxu0 %v331
        %333 = vmatprep.subr.mxu0 0.0
        %v334 = vand.u32 %v225, 4294901760
        %335 = vmatpush1.msra.mxu0 %v334
        %336 = vmatprep.subr.mxu0 0.0
        %v337 = vand.u32 %v226, 4294901760
        %338 = vmatpush1.msra.mxu0 %v337
        %339 = vmatprep.subr.mxu0 0.0
        %v340 = vand.u32 %v227, 4294901760
        %341 = vmatpush1.msra.mxu0 %v340
        %342 = vmatprep.subr.mxu0 0.0
        %v343 = vand.u32 %v228, 4294901760
        %344 = vmatpush1.msra.mxu0 %v343
        %345 = vmatprep.subr.mxu0 0.0
        %v346 = vand.u32 %v229, 4294901760
        %347 = vmatpush1.msra.mxu0 %v346
        %348 = vmatprep.subr.mxu0 0.0
        %v349 = vand.u32 %v230, 4294901760
        %350 = vmatpush1.msra.mxu0 %v349
        %351 = vmatprep.subr.mxu0 0.0
        %v352 = vand.u32 %v231, 4294901760
        %353 = vmatpush1.msra.mxu0 %v352
        %354 = vmatprep.subr.mxu0 0.0
        %v355 = vand.u32 %v232, 4294901760
        %356 = vmatpush1.msra.mxu0 %v355
        %357 = vmatprep.subr.mxu0 0.0
        %v358 = vand.u32 %v233, 4294901760
        %359 = vmatpush1.msra.mxu0 %v358
        %360 = vmatprep.subr.mxu0 0.0
        %v361 = vand.u32 %v234, 4294901760
        %362 = vmatpush1.msra.mxu0 %v361
        %363 = vmatprep.subr.mxu0 0.0
        %v364 = vand.u32 %v235, 4294901760
        %365 = vmatpush1.msra.mxu0 %v364
        %v366 = vand.u32 %v269, 4294901760
        %v367 = vsub.f32 %v269, %v366
        %v368 = vand.u32 %v367, 4294901760
        %v369 = vsub.f32 %v367, %v368
        %v370 = vand.u32 %v369, 4294901760
        %371 = vmatprep.mubr.f32.mxu0 %v370
        %v372 = vand.u32 %v268, 4294901760
        %v373 = vsub.f32 %v268, %v372
        %v374 = vand.u32 %v373, 4294901760
        %v375 = vsub.f32 %v373, %v374
        %v376 = vand.u32 %v375, 4294901760
        %377 = vmatmul.mubr.f32.gmra.mrb[0].mxu0 %v376
        %v378 = vpop.f32.mrb[0].mxu0
        %v379 = vadd.f32 0.0, %v378
        %v380 = vpop.f32.mrb[0].mxu0
        %381 = vdwg.mxu0
        %382 = vmatprep.subr.mxu0 0.0
        %v383 = vand.u32 %v204, 4294901760
        %v384 = vsub.f32 %v204, %v383
        %v385 = vand.u32 %v384, 4294901760
        %v386 = vsub.f32 %v384, %v385
        %v387 = vand.u32 %v386, 4294901760
        %388 = vmatpush1.msra.mxu0 %v387
        %389 = vmatprep.subr.mxu0 0.0
        %v390 = vand.u32 %v205, 4294901760
        %v391 = vsub.f32 %v205, %v390
        %v392 = vand.u32 %v391, 4294901760
        %v393 = vsub.f32 %v391, %v392
        %v394 = vand.u32 %v393, 4294901760
        %395 = vmatpush1.msra.mxu0 %v394
        %396 = vmatprep.subr.mxu0 0.0
        %v397 = vand.u32 %v206, 4294901760
        %v398 = vsub.f32 %v206, %v397
        %v399 = vand.u32 %v398, 4294901760
        %v400 = vsub.f32 %v398, %v399
        %v401 = vand.u32 %v400, 4294901760
        %402 = vmatpush1.msra.mxu0 %v401
        %403 = vmatprep.subr.mxu0 0.0
        %v404 = vand.u32 %v207, 4294901760
        %v405 = vsub.f32 %v207, %v404
        %v406 = vand.u32 %v405, 4294901760
        %v407 = vsub.f32 %v405, %v406
        %v408 = vand.u32 %v407, 4294901760
        %409 = vmatpush1.msra.mxu0 %v408
        %410 = vmatprep.subr.mxu0 0.0
        %v411 = vand.u32 %v208, 4294901760
        %v412 = vsub.f32 %v208, %v411
        %v413 = vand.u32 %v412, 4294901760
        %v414 = vsub.f32 %v412, %v413
        %v415 = vand.u32 %v414, 4294901760
        %416 = vmatpush1.msra.mxu0 %v415
        %417 = vmatprep.subr.mxu0 0.0
        %v418 = vand.u32 %v209, 4294901760
        %v419 = vsub.f32 %v209, %v418
        %v420 = vand.u32 %v419, 4294901760
        %v421 = vsub.f32 %v419, %v420
        %v422 = vand.u32 %v421, 4294901760
        %423 = vmatpush1.msra.mxu0 %v422
        %424 = vmatprep.subr.mxu0 0.0
        %v425 = vand.u32 %v210, 4294901760
        %v426 = vsub.f32 %v210, %v425
        %v427 = vand.u32 %v426, 4294901760
        %v428 = vsub.f32 %v426, %v427
        %v429 = vand.u32 %v428, 4294901760
        %430 = vmatpush1.msra.mxu0 %v429
        %431 = vmatprep.subr.mxu0 0.0
        %v432 = vand.u32 %v211, 4294901760
        %v433 = vsub.f32 %v211, %v432
        %v434 = vand.u32 %v433, 4294901760
        %v435 = vsub.f32 %v433, %v434
        %v436 = vand.u32 %v435, 4294901760
        %437 = vmatpush1.msra.mxu0 %v436
        %438 = vmatprep.subr.mxu0 0.0
        %v439 = vand.u32 %v212, 4294901760
        %v440 = vsub.f32 %v212, %v439
        %v441 = vand.u32 %v440, 4294901760
        %v442 = vsub.f32 %v440, %v441
        %v443 = vand.u32 %v442, 4294901760
        %444 = vmatpush1.msra.mxu0 %v443
        %445 = vmatprep.subr.mxu0 0.0
        %v446 = vand.u32 %v213, 4294901760
        %v447 = vsub.f32 %v213, %v446
        %v448 = vand.u32 %v447, 4294901760
        %v449 = vsub.f32 %v447, %v448
        %v450 = vand.u32 %v449, 4294901760
        %451 = vmatpush1.msra.mxu0 %v450
        %452 = vmatprep.subr.mxu0 0.0
        %v453 = vand.u32 %v214, 4294901760
        %v454 = vsub.f32 %v214, %v453
        %v455 = vand.u32 %v454, 4294901760
        %v456 = vsub.f32 %v454, %v455
        %v457 = vand.u32 %v456, 4294901760
        %458 = vmatpush1.msra.mxu0 %v457
        %459 = vmatprep.subr.mxu0 0.0
        %v460 = vand.u32 %v215, 4294901760
        %v461 = vsub.f32 %v215, %v460
        %v462 = vand.u32 %v461, 4294901760
        %v463 = vsub.f32 %v461, %v462
        %v464 = vand.u32 %v463, 4294901760
        %465 = vmatpush1.msra.mxu0 %v464
        %466 = vmatprep.subr.mxu0 0.0
        %v467 = vand.u32 %v216, 4294901760
        %v468 = vsub.f32 %v216, %v467
        %v469 = vand.u32 %v468, 4294901760
        %v470 = vsub.f32 %v468, %v469
        %v471 = vand.u32 %v470, 4294901760
        %472 = vmatpush1.msra.mxu0 %v471
        %473 = vmatprep.subr.mxu0 0.0
        %v474 = vand.u32 %v217, 4294901760
        %v475 = vsub.f32 %v217, %v474
        %v476 = vand.u32 %v475, 4294901760
        %v477 = vsub.f32 %v475, %v476
        %v478 = vand.u32 %v477, 4294901760
        %479 = vmatpush1.msra.mxu0 %v478
        %480 = vmatprep.subr.mxu0 0.0
        %v481 = vand.u32 %v218, 4294901760
        %v482 = vsub.f32 %v218, %v481
        %v483 = vand.u32 %v482, 4294901760
        %v484 = vsub.f32 %v482, %v483
        %v485 = vand.u32 %v484, 4294901760
        %486 = vmatpush1.msra.mxu0 %v485
        %487 = vmatprep.subr.mxu0 0.0
        %v488 = vand.u32 %v219, 4294901760
        %v489 = vsub.f32 %v219, %v488
        %v490 = vand.u32 %v489, 4294901760
        %v491 = vsub.f32 %v489, %v490
        %v492 = vand.u32 %v491, 4294901760
        %493 = vmatpush1.msra.mxu0 %v492
        %494 = vmatprep.subr.mxu0 0.0
        %v495 = vand.u32 %v220, 4294901760
        %v496 = vsub.f32 %v220, %v495
        %v497 = vand.u32 %v496, 4294901760
        %v498 = vsub.f32 %v496, %v497
        %v499 = vand.u32 %v498, 4294901760
        %500 = vmatpush1.msra.mxu0 %v499
        %501 = vmatprep.subr.mxu0 0.0
        %v502 = vand.u32 %v221, 4294901760
        %v503 = vsub.f32 %v221, %v502
        %v504 = vand.u32 %v503, 4294901760
        %v505 = vsub.f32 %v503, %v504
        %v506 = vand.u32 %v505, 4294901760
        %507 = vmatpush1.msra.mxu0 %v506
        %508 = vmatprep.subr.mxu0 0.0
        %v509 = vand.u32 %v222, 4294901760
        %v510 = vsub.f32 %v222, %v509
        %v511 = vand.u32 %v510, 4294901760
        %v512 = vsub.f32 %v510, %v511
        %v513 = vand.u32 %v512, 4294901760
        %514 = vmatpush1.msra.mxu0 %v513
        %515 = vmatprep.subr.mxu0 0.0
        %v516 = vand.u32 %v223, 4294901760
        %v517 = vsub.f32 %v223, %v516
        %v518 = vand.u32 %v517, 4294901760
        %v519 = vsub.f32 %v517, %v518
        %v520 = vand.u32 %v519, 4294901760
        %521 = vmatpush1.msra.mxu0 %v520
        %522 = vmatprep.subr.mxu0 0.0
        %v523 = vand.u32 %v224, 4294901760
        %v524 = vsub.f32 %v224, %v523
        %v525 = vand.u32 %v524, 4294901760
        %v526 = vsub.f32 %v524, %v525
        %v527 = vand.u32 %v526, 4294901760
        %528 = vmatpush1.msra.mxu0 %v527
        %529 = vmatprep.subr.mxu0 0.0
        %v530 = vand.u32 %v225, 4294901760
        %v531 = vsub.f32 %v225, %v530
        %v532 = vand.u32 %v531, 4294901760
        %v533 = vsub.f32 %v531, %v532
        %v534 = vand.u32 %v533, 4294901760
        %535 = vmatpush1.msra.mxu0 %v534
        %536 = vmatprep.subr.mxu0 0.0
        %v537 = vand.u32 %v226, 4294901760
        %v538 = vsub.f32 %v226, %v537
        %v539 = vand.u32 %v538, 4294901760
        %v540 = vsub.f32 %v538, %v539
        %v541 = vand.u32 %v540, 4294901760
        %542 = vmatpush1.msra.mxu0 %v541
        %543 = vmatprep.subr.mxu0 0.0
        %v544 = vand.u32 %v227, 4294901760
        %v545 = vsub.f32 %v227, %v544
        %v546 = vand.u32 %v545, 4294901760
        %v547 = vsub.f32 %v545, %v546
        %v548 = vand.u32 %v547, 4294901760
        %549 = vmatpush1.msra.mxu0 %v548
        %550 = vmatprep.subr.mxu0 0.0
        %v551 = vand.u32 %v228, 4294901760
        %v552 = vsub.f32 %v228, %v551
        %v553 = vand.u32 %v552, 4294901760
        %v554 = vsub.f32 %v552, %v553
        %v555 = vand.u32 %v554, 4294901760
        %556 = vmatpush1.msra.mxu0 %v555
        %557 = vmatprep.subr.mxu0 0.0
        %v558 = vand.u32 %v229, 4294901760
        %v559 = vsub.f32 %v229, %v558
        %v560 = vand.u32 %v559, 4294901760
        %v561 = vsub.f32 %v559, %v560
        %v562 = vand.u32 %v561, 4294901760
        %563 = vmatpush1.msra.mxu0 %v562
        %564 = vmatprep.subr.mxu0 0.0
        %v565 = vand.u32 %v230, 4294901760
        %v566 = vsub.f32 %v230, %v565
        %v567 = vand.u32 %v566, 4294901760
        %v568 = vsub.f32 %v566, %v567
        %v569 = vand.u32 %v568, 4294901760
        %570 = vmatpush1.msra.mxu0 %v569
        %571 = vmatprep.subr.mxu0 0.0
        %v572 = vand.u32 %v231, 4294901760
        %v573 = vsub.f32 %v231, %v572
        %v574 = vand.u32 %v573, 4294901760
        %v575 = vsub.f32 %v573, %v574
        %v576 = vand.u32 %v575, 4294901760
        %577 = vmatpush1.msra.mxu0 %v576
        %578 = vmatprep.subr.mxu0 0.0
        %v579 = vand.u32 %v232, 4294901760
        %v580 = vsub.f32 %v232, %v579
        %v581 = vand.u32 %v580, 4294901760
        %v582 = vsub.f32 %v580, %v581
        %v583 = vand.u32 %v582, 4294901760
        %584 = vmatpush1.msra.mxu0 %v583
        %585 = vmatprep.subr.mxu0 0.0
        %v586 = vand.u32 %v233, 4294901760
        %v587 = vsub.f32 %v233, %v586
        %v588 = vand.u32 %v587, 4294901760
        %v589 = vsub.f32 %v587, %v588
        %v590 = vand.u32 %v589, 4294901760
        %591 = vmatpush1.msra.mxu0 %v590
        %592 = vmatprep.subr.mxu0 0.0
        %v593 = vand.u32 %v234, 4294901760
        %v594 = vsub.f32 %v234, %v593
        %v595 = vand.u32 %v594, 4294901760
        %v596 = vsub.f32 %v594, %v595
        %v597 = vand.u32 %v596, 4294901760
        %598 = vmatpush1.msra.mxu0 %v597
        %599 = vmatprep.subr.mxu0 0.0
        %v600 = vand.u32 %v235, 4294901760
        %v601 = vsub.f32 %v235, %v600
        %v602 = vand.u32 %v601, 4294901760
        %v603 = vsub.f32 %v601, %v602
        %v604 = vand.u32 %v603, 4294901760
        %605 = vmatpush1.msra.mxu0 %v604
        %v606 = vand.u32 %v269, 4294901760
        %607 = vmatprep.mubr.f32.mxu0 %v606
        %v608 = vand.u32 %v268, 4294901760
        %609 = vmatmul.mubr.f32.gmra.mrb[0].mxu0 %v608
        %v610 = vpop.f32.mrb[0].mxu0
        %v611 = vadd.f32 %v379, %v610
        %v612 = vpop.f32.mrb[0].mxu0
        %613 = vdwg.mxu0
        %614 = vmatprep.subr.mxu0 0.0
        %v615 = vand.u32 %v204, 4294901760
        %v616 = vsub.f32 %v204, %v615
        %617 = vmatpush1.msra.mxu0 %v616
        %618 = vmatprep.subr.mxu0 0.0
        %v619 = vand.u32 %v205, 4294901760
        %v620 = vsub.f32 %v205, %v619
        %621 = vmatpush1.msra.mxu0 %v620
        %622 = vmatprep.subr.mxu0 0.0
        %v623 = vand.u32 %v206, 4294901760
        %v624 = vsub.f32 %v206, %v623
        %625 = vmatpush1.msra.mxu0 %v624
        %626 = vmatprep.subr.mxu0 0.0
        %v627 = vand.u32 %v207, 4294901760
        %v628 = vsub.f32 %v207, %v627
        %629 = vmatpush1.msra.mxu0 %v628
        %630 = vmatprep.subr.mxu0 0.0
        %v631 = vand.u32 %v208, 4294901760
        %v632 = vsub.f32 %v208, %v631
        %633 = vmatpush1.msra.mxu0 %v632
        %634 = vmatprep.subr.mxu0 0.0
        %v635 = vand.u32 %v209, 4294901760
        %v636 = vsub.f32 %v209, %v635
        %637 = vmatpush1.msra.mxu0 %v636
        %638 = vmatprep.subr.mxu0 0.0
        %v639 = vand.u32 %v210, 4294901760
        %v640 = vsub.f32 %v210, %v639
        %641 = vmatpush1.msra.mxu0 %v640
        %642 = vmatprep.subr.mxu0 0.0
        %v643 = vand.u32 %v211, 4294901760
        %v644 = vsub.f32 %v211, %v643
        %645 = vmatpush1.msra.mxu0 %v644
        %646 = vmatprep.subr.mxu0 0.0
        %v647 = vand.u32 %v212, 4294901760
        %v648 = vsub.f32 %v212, %v647
        %649 = vmatpush1.msra.mxu0 %v648
        %650 = vmatprep.subr.mxu0 0.0
        %v651 = vand.u32 %v213, 4294901760
        %v652 = vsub.f32 %v213, %v651
        %653 = vmatpush1.msra.mxu0 %v652
        %654 = vmatprep.subr.mxu0 0.0
        %v655 = vand.u32 %v214, 4294901760
        %v656 = vsub.f32 %v214, %v655
        %657 = vmatpush1.msra.mxu0 %v656
        %658 = vmatprep.subr.mxu0 0.0
        %v659 = vand.u32 %v215, 4294901760
        %v660 = vsub.f32 %v215, %v659
        %661 = vmatpush1.msra.mxu0 %v660
        %662 = vmatprep.subr.mxu0 0.0
        %v663 = vand.u32 %v216, 4294901760
        %v664 = vsub.f32 %v216, %v663
        %665 = vmatpush1.msra.mxu0 %v664
        %666 = vmatprep.subr.mxu0 0.0
        %v667 = vand.u32 %v217, 4294901760
        %v668 = vsub.f32 %v217, %v667
        %669 = vmatpush1.msra.mxu0 %v668
        %670 = vmatprep.subr.mxu0 0.0
        %v671 = vand.u32 %v218, 4294901760
        %v672 = vsub.f32 %v218, %v671
        %673 = vmatpush1.msra.mxu0 %v672
        %674 = vmatprep.subr.mxu0 0.0
        %v675 = vand.u32 %v219, 4294901760
        %v676 = vsub.f32 %v219, %v675
        %677 = vmatpush1.msra.mxu0 %v676
        %678 = vmatprep.subr.mxu0 0.0
        %v679 = vand.u32 %v220, 4294901760
        %v680 = vsub.f32 %v220, %v679
        %681 = vmatpush1.msra.mxu0 %v680
        %682 = vmatprep.subr.mxu0 0.0
        %v683 = vand.u32 %v221, 4294901760
        %v684 = vsub.f32 %v221, %v683
        %685 = vmatpush1.msra.mxu0 %v684
        %686 = vmatprep.subr.mxu0 0.0
        %v687 = vand.u32 %v222, 4294901760
        %v688 = vsub.f32 %v222, %v687
        %689 = vmatpush1.msra.mxu0 %v688
        %690 = vmatprep.subr.mxu0 0.0
        %v691 = vand.u32 %v223, 4294901760
        %v692 = vsub.f32 %v223, %v691
        %693 = vmatpush1.msra.mxu0 %v692
        %694 = vmatprep.subr.mxu0 0.0
        %v695 = vand.u32 %v224, 4294901760
        %v696 = vsub.f32 %v224, %v695
        %697 = vmatpush1.msra.mxu0 %v696
        %698 = vmatprep.subr.mxu0 0.0
        %v699 = vand.u32 %v225, 4294901760
        %v700 = vsub.f32 %v225, %v699
        %701 = vmatpush1.msra.mxu0 %v700
        %702 = vmatprep.subr.mxu0 0.0
        %v703 = vand.u32 %v226, 4294901760
        %v704 = vsub.f32 %v226, %v703
        %705 = vmatpush1.msra.mxu0 %v704
        %706 = vmatprep.subr.mxu0 0.0
        %v707 = vand.u32 %v227, 4294901760
        %v708 = vsub.f32 %v227, %v707
        %709 = vmatpush1.msra.mxu0 %v708
        %710 = vmatprep.subr.mxu0 0.0
        %v711 = vand.u32 %v228, 4294901760
        %v712 = vsub.f32 %v228, %v711
        %713 = vmatpush1.msra.mxu0 %v712
        %714 = vmatprep.subr.mxu0 0.0
        %v715 = vand.u32 %v229, 4294901760
        %v716 = vsub.f32 %v229, %v715
        %717 = vmatpush1.msra.mxu0 %v716
        %718 = vmatprep.subr.mxu0 0.0
        %v719 = vand.u32 %v230, 4294901760
        %v720 = vsub.f32 %v230, %v719
        %721 = vmatpush1.msra.mxu0 %v720
        %722 = vmatprep.subr.mxu0 0.0
        %v723 = vand.u32 %v231, 4294901760
        %v724 = vsub.f32 %v231, %v723
        %725 = vmatpush1.msra.mxu0 %v724
        %726 = vmatprep.subr.mxu0 0.0
        %v727 = vand.u32 %v232, 4294901760
        %v728 = vsub.f32 %v232, %v727
        %729 = vmatpush1.msra.mxu0 %v728
        %730 = vmatprep.subr.mxu0 0.0
        %v731 = vand.u32 %v233, 4294901760
        %v732 = vsub.f32 %v233, %v731
        %733 = vmatpush1.msra.mxu0 %v732
        %734 = vmatprep.subr.mxu0 0.0
        %v735 = vand.u32 %v234, 4294901760
        %v736 = vsub.f32 %v234, %v735
        %737 = vmatpush1.msra.mxu0 %v736
        %738 = vmatprep.subr.mxu0 0.0
        %v739 = vand.u32 %v235, 4294901760
        %v740 = vsub.f32 %v235, %v739
        %741 = vmatpush1.msra.mxu0 %v740
        %v742 = vand.u32 %v269, 4294901760
        %v743 = vsub.f32 %v269, %v742
        %744 = vmatprep.mubr.f32.mxu0 %v743
        %v745 = vand.u32 %v268, 4294901760
        %v746 = vsub.f32 %v268, %v745
        %747 = vmatmul.mubr.f32.gmra.mrb[0].mxu0 %v746
        %v748 = vpop.f32.mrb[0].mxu0
        %v749 = vadd.f32 %v611, %v748
        %v750 = vpop.f32.mrb[0].mxu0
        %751 = vdwg.mxu0
        %752 = vmatprep.subr.mxu0 0.0
        %v753 = vand.u32 %v204, 4294901760
        %754 = vmatpush1.msra.mxu0 %v753
        %755 = vmatprep.subr.mxu0 0.0
        %v756 = vand.u32 %v205, 4294901760
        %757 = vmatpush1.msra.mxu0 %v756
        %758 = vmatprep.subr.mxu0 0.0
        %v759 = vand.u32 %v206, 4294901760
        %760 = vmatpush1.msra.mxu0 %v759
        %761 = vmatprep.subr.mxu0 0.0
        %v762 = vand.u32 %v207, 4294901760
        %763 = vmatpush1.msra.mxu0 %v762
        %764 = vmatprep.subr.mxu0 0.0
        %v765 = vand.u32 %v208, 4294901760
        %766 = vmatpush1.msra.mxu0 %v765
        %767 = vmatprep.subr.mxu0 0.0
        %v768 = vand.u32 %v209, 4294901760
        %769 = vmatpush1.msra.mxu0 %v768
        %770 = vmatprep.subr.mxu0 0.0
        %v771 = vand.u32 %v210, 4294901760
        %772 = vmatpush1.msra.mxu0 %v771
        %773 = vmatprep.subr.mxu0 0.0
        %v774 = vand.u32 %v211, 4294901760
        %775 = vmatpush1.msra.mxu0 %v774
        %776 = vmatprep.subr.mxu0 0.0
        %v777 = vand.u32 %v212, 4294901760
        %778 = vmatpush1.msra.mxu0 %v777
        %779 = vmatprep.subr.mxu0 0.0
        %v780 = vand.u32 %v213, 4294901760
        %781 = vmatpush1.msra.mxu0 %v780
        %782 = vmatprep.subr.mxu0 0.0
        %v783 = vand.u32 %v214, 4294901760
        %784 = vmatpush1.msra.mxu0 %v783
        %785 = vmatprep.subr.mxu0 0.0
        %v786 = vand.u32 %v215, 4294901760
        %787 = vmatpush1.msra.mxu0 %v786
        %788 = vmatprep.subr.mxu0 0.0
        %v789 = vand.u32 %v216, 4294901760
        %790 = vmatpush1.msra.mxu0 %v789
        %791 = vmatprep.subr.mxu0 0.0
        %v792 = vand.u32 %v217, 4294901760
        %793 = vmatpush1.msra.mxu0 %v792
        %794 = vmatprep.subr.mxu0 0.0
        %v795 = vand.u32 %v218, 4294901760
        %796 = vmatpush1.msra.mxu0 %v795
        %797 = vmatprep.subr.mxu0 0.0
        %v798 = vand.u32 %v219, 4294901760
        %799 = vmatpush1.msra.mxu0 %v798
        %800 = vmatprep.subr.mxu0 0.0
        %v801 = vand.u32 %v220, 4294901760
        %802 = vmatpush1.msra.mxu0 %v801
        %803 = vmatprep.subr.mxu0 0.0
        %v804 = vand.u32 %v221, 4294901760
        %805 = vmatpush1.msra.mxu0 %v804
        %806 = vmatprep.subr.mxu0 0.0
        %v807 = vand.u32 %v222, 4294901760
        %808 = vmatpush1.msra.mxu0 %v807
        %809 = vmatprep.subr.mxu0 0.0
        %v810 = vand.u32 %v223, 4294901760
        %811 = vmatpush1.msra.mxu0 %v810
        %812 = vmatprep.subr.mxu0 0.0
        %v813 = vand.u32 %v224, 4294901760
        %814 = vmatpush1.msra.mxu0 %v813
        %815 = vmatprep.subr.mxu0 0.0
        %v816 = vand.u32 %v225, 4294901760
        %817 = vmatpush1.msra.mxu0 %v816
        %818 = vmatprep.subr.mxu0 0.0
        %v819 = vand.u32 %v226, 4294901760
        %820 = vmatpush1.msra.mxu0 %v819
        %821 = vmatprep.subr.mxu0 0.0
        %v822 = vand.u32 %v227, 4294901760
        %823 = vmatpush1.msra.mxu0 %v822
        %824 = vmatprep.subr.mxu0 0.0
        %v825 = vand.u32 %v228, 4294901760
        %826 = vmatpush1.msra.mxu0 %v825
        %827 = vmatprep.subr.mxu0 0.0
        %v828 = vand.u32 %v229, 4294901760
        %829 = vmatpush1.msra.mxu0 %v828
        %830 = vmatprep.subr.mxu0 0.0
        %v831 = vand.u32 %v230, 4294901760
        %832 = vmatpush1.msra.mxu0 %v831
        %833 = vmatprep.subr.mxu0 0.0
        %v834 = vand.u32 %v231, 4294901760
        %835 = vmatpush1.msra.mxu0 %v834
        %836 = vmatprep.subr.mxu0 0.0
        %v837 = vand.u32 %v232, 4294901760
        %838 = vmatpush1.msra.mxu0 %v837
        %839 = vmatprep.subr.mxu0 0.0
        %v840 = vand.u32 %v233, 4294901760
        %841 = vmatpush1.msra.mxu0 %v840
        %842 = vmatprep.subr.mxu0 0.0
        %v843 = vand.u32 %v234, 4294901760
        %844 = vmatpush1.msra.mxu0 %v843
        %845 = vmatprep.subr.mxu0 0.0
        %v846 = vand.u32 %v235, 4294901760
        %847 = vmatpush1.msra.mxu0 %v846
        %v848 = vand.u32 %v269, 4294901760
        %v849 = vsub.f32 %v269, %v848
        %v850 = vand.u32 %v849, 4294901760
        %851 = vmatprep.mubr.f32.mxu0 %v850
        %v852 = vand.u32 %v268, 4294901760
        %v853 = vsub.f32 %v268, %v852
        %v854 = vand.u32 %v853, 4294901760
        %855 = vmatmul.mubr.f32.gmra.mrb[0].mxu0 %v854
        %v856 = vpop.f32.mrb[0].mxu0
        %v857 = vadd.f32 %v749, %v856
        %v858 = vpop.f32.mrb[0].mxu0
        %859 = vdwg.mxu0
        %860 = vmatprep.subr.mxu0 0.0
        %v861 = vand.u32 %v204, 4294901760
        %v862 = vsub.f32 %v204, %v861
        %v863 = vand.u32 %v862, 4294901760
        %864 = vmatpush1.msra.mxu0 %v863
        %865 = vmatprep.subr.mxu0 0.0
        %v866 = vand.u32 %v205, 4294901760
        %v867 = vsub.f32 %v205, %v866
        %v868 = vand.u32 %v867, 4294901760
        %869 = vmatpush1.msra.mxu0 %v868
        %870 = vmatprep.subr.mxu0 0.0
        %v871 = vand.u32 %v206, 4294901760
        %v872 = vsub.f32 %v206, %v871
        %v873 = vand.u32 %v872, 4294901760
        %874 = vmatpush1.msra.mxu0 %v873
        %875 = vmatprep.subr.mxu0 0.0
        %v876 = vand.u32 %v207, 4294901760
        %v877 = vsub.f32 %v207, %v876
        %v878 = vand.u32 %v877, 4294901760
        %879 = vmatpush1.msra.mxu0 %v878
        %880 = vmatprep.subr.mxu0 0.0
        %v881 = vand.u32 %v208, 4294901760
        %v882 = vsub.f32 %v208, %v881
        %v883 = vand.u32 %v882, 4294901760
        %884 = vmatpush1.msra.mxu0 %v883
        %885 = vmatprep.subr.mxu0 0.0
        %v886 = vand.u32 %v209, 4294901760
        %v887 = vsub.f32 %v209, %v886
        %v888 = vand.u32 %v887, 4294901760
        %889 = vmatpush1.msra.mxu0 %v888
        %890 = vmatprep.subr.mxu0 0.0
        %v891 = vand.u32 %v210, 4294901760
        %v892 = vsub.f32 %v210, %v891
        %v893 = vand.u32 %v892, 4294901760
        %894 = vmatpush1.msra.mxu0 %v893
        %895 = vmatprep.subr.mxu0 0.0
        %v896 = vand.u32 %v211, 4294901760
        %v897 = vsub.f32 %v211, %v896
        %v898 = vand.u32 %v897, 4294901760
        %899 = vmatpush1.msra.mxu0 %v898
        %900 = vmatprep.subr.mxu0 0.0
        %v901 = vand.u32 %v212, 4294901760
        %v902 = vsub.f32 %v212, %v901
        %v903 = vand.u32 %v902, 4294901760
        %904 = vmatpush1.msra.mxu0 %v903
        %905 = vmatprep.subr.mxu0 0.0
        %v906 = vand.u32 %v213, 4294901760
        %v907 = vsub.f32 %v213, %v906
        %v908 = vand.u32 %v907, 4294901760
        %909 = vmatpush1.msra.mxu0 %v908
        %910 = vmatprep.subr.mxu0 0.0
        %v911 = vand.u32 %v214, 4294901760
        %v912 = vsub.f32 %v214, %v911
        %v913 = vand.u32 %v912, 4294901760
        %914 = vmatpush1.msra.mxu0 %v913
        %915 = vmatprep.subr.mxu0 0.0
        %v916 = vand.u32 %v215, 4294901760
        %v917 = vsub.f32 %v215, %v916
        %v918 = vand.u32 %v917, 4294901760
        %919 = vmatpush1.msra.mxu0 %v918
        %920 = vmatprep.subr.mxu0 0.0
        %v921 = vand.u32 %v216, 4294901760
        %v922 = vsub.f32 %v216, %v921
        %v923 = vand.u32 %v922, 4294901760
        %924 = vmatpush1.msra.mxu0 %v923
        %925 = vmatprep.subr.mxu0 0.0
        %v926 = vand.u32 %v217, 4294901760
        %v927 = vsub.f32 %v217, %v926
        %v928 = vand.u32 %v927, 4294901760
        %929 = vmatpush1.msra.mxu0 %v928
        %930 = vmatprep.subr.mxu0 0.0
        %v931 = vand.u32 %v218, 4294901760
        %v932 = vsub.f32 %v218, %v931
        %v933 = vand.u32 %v932, 4294901760
        %934 = vmatpush1.msra.mxu0 %v933
        %935 = vmatprep.subr.mxu0 0.0
        %v936 = vand.u32 %v219, 4294901760
        %v937 = vsub.f32 %v219, %v936
        %v938 = vand.u32 %v937, 4294901760
        %939 = vmatpush1.msra.mxu0 %v938
        %940 = vmatprep.subr.mxu0 0.0
        %v941 = vand.u32 %v220, 4294901760
        %v942 = vsub.f32 %v220, %v941
        %v943 = vand.u32 %v942, 4294901760
        %944 = vmatpush1.msra.mxu0 %v943
        %945 = vmatprep.subr.mxu0 0.0
        %v946 = vand.u32 %v221, 4294901760
        %v947 = vsub.f32 %v221, %v946
        %v948 = vand.u32 %v947, 4294901760
        %949 = vmatpush1.msra.mxu0 %v948
        %950 = vmatprep.subr.mxu0 0.0
        %v951 = vand.u32 %v222, 4294901760
        %v952 = vsub.f32 %v222, %v951
        %v953 = vand.u32 %v952, 4294901760
        %954 = vmatpush1.msra.mxu0 %v953
        %955 = vmatprep.subr.mxu0 0.0
        %v956 = vand.u32 %v223, 4294901760
        %v957 = vsub.f32 %v223, %v956
        %v958 = vand.u32 %v957, 4294901760
        %959 = vmatpush1.msra.mxu0 %v958
        %960 = vmatprep.subr.mxu0 0.0
        %v961 = vand.u32 %v224, 4294901760
        %v962 = vsub.f32 %v224, %v961
        %v963 = vand.u32 %v962, 4294901760
        %964 = vmatpush1.msra.mxu0 %v963
        %965 = vmatprep.subr.mxu0 0.0
        %v966 = vand.u32 %v225, 4294901760
        %v967 = vsub.f32 %v225, %v966
        %v968 = vand.u32 %v967, 4294901760
        %969 = vmatpush1.msra.mxu0 %v968
        %970 = vmatprep.subr.mxu0 0.0
        %v971 = vand.u32 %v226, 4294901760
        %v972 = vsub.f32 %v226, %v971
        %v973 = vand.u32 %v972, 4294901760
        %974 = vmatpush1.msra.mxu0 %v973
        %975 = vmatprep.subr.mxu0 0.0
        %v976 = vand.u32 %v227, 4294901760
        %v977 = vsub.f32 %v227, %v976
        %v978 = vand.u32 %v977, 4294901760
        %979 = vmatpush1.msra.mxu0 %v978
        %980 = vmatprep.subr.mxu0 0.0
        %v981 = vand.u32 %v228, 4294901760
        %v982 = vsub.f32 %v228, %v981
        %v983 = vand.u32 %v982, 4294901760
        %984 = vmatpush1.msra.mxu0 %v983
        %985 = vmatprep.subr.mxu0 0.0
        %v986 = vand.u32 %v229, 4294901760
        %v987 = vsub.f32 %v229, %v986
        %v988 = vand.u32 %v987, 4294901760
        %989 = vmatpush1.msra.mxu0 %v988
        %990 = vmatprep.subr.mxu0 0.0
        %v991 = vand.u32 %v230, 4294901760
        %v992 = vsub.f32 %v230, %v991
        %v993 = vand.u32 %v992, 4294901760
        %994 = vmatpush1.msra.mxu0 %v993
        %995 = vmatprep.subr.mxu0 0.0
        %v996 = vand.u32 %v231, 4294901760
        %v997 = vsub.f32 %v231, %v996
        %v998 = vand.u32 %v997, 4294901760
        %999 = vmatpush1.msra.mxu0 %v998
        %1000 = vmatprep.subr.mxu0 0.0
        %v1001 = vand.u32 %v232, 4294901760
        %v1002 = vsub.f32 %v232, %v1001
        %v1003 = vand.u32 %v1002, 4294901760
        %1004 = vmatpush1.msra.mxu0 %v1003
        %1005 = vmatprep.subr.mxu0 0.0
        %v1006 = vand.u32 %v233, 4294901760
        %v1007 = vsub.f32 %v233, %v1006
        %v1008 = vand.u32 %v1007, 4294901760
        %1009 = vmatpush1.msra.mxu0 %v1008
        %1010 = vmatprep.subr.mxu0 0.0
        %v1011 = vand.u32 %v234, 4294901760
        %v1012 = vsub.f32 %v234, %v1011
        %v1013 = vand.u32 %v1012, 4294901760
        %1014 = vmatpush1.msra.mxu0 %v1013
        %1015 = vmatprep.subr.mxu0 0.0
        %v1016 = vand.u32 %v235, 4294901760
        %v1017 = vsub.f32 %v235, %v1016
        %v1018 = vand.u32 %v1017, 4294901760
        %1019 = vmatpush1.msra.mxu0 %v1018
        %v1020 = vand.u32 %v269, 4294901760
        %1021 = vmatprep.mubr.f32.mxu0 %v1020
        %v1022 = vand.u32 %v268, 4294901760
        %1023 = vmatmul.mubr.f32.gmra.mrb[0].mxu0 %v1022
        %v1024 = vpop.f32.mrb[0].mxu0
        %v1025 = vadd.f32 %v857, %v1024
        %v1026 = vpop.f32.mrb[0].mxu0
        %1027 = vdwg.mxu0
        %1028 = vmatprep.subr.mxu0 0.0
        %v1029 = vand.u32 %v204, 4294901760
        %1030 = vmatpush1.msra.mxu0 %v1029
        %1031 = vmatprep.subr.mxu0 0.0
        %v1032 = vand.u32 %v205, 4294901760
        %1033 = vmatpush1.msra.mxu0 %v1032
        %1034 = vmatprep.subr.mxu0 0.0
        %v1035 = vand.u32 %v206, 4294901760
        %1036 = vmatpush1.msra.mxu0 %v1035
        %1037 = vmatprep.subr.mxu0 0.0
        %v1038 = vand.u32 %v207, 4294901760
        %1039 = vmatpush1.msra.mxu0 %v1038
        %1040 = vmatprep.subr.mxu0 0.0
        %v1041 = vand.u32 %v208, 4294901760
        %1042 = vmatpush1.msra.mxu0 %v1041
        %1043 = vmatprep.subr.mxu0 0.0
        %v1044 = vand.u32 %v209, 4294901760
        %1045 = vmatpush1.msra.mxu0 %v1044
        %1046 = vmatprep.subr.mxu0 0.0
        %v1047 = vand.u32 %v210, 4294901760
        %1048 = vmatpush1.msra.mxu0 %v1047
        %1049 = vmatprep.subr.mxu0 0.0
        %v1050 = vand.u32 %v211, 4294901760
        %1051 = vmatpush1.msra.mxu0 %v1050
        %1052 = vmatprep.subr.mxu0 0.0
        %v1053 = vand.u32 %v212, 4294901760
        %1054 = vmatpush1.msra.mxu0 %v1053
        %1055 = vmatprep.subr.mxu0 0.0
        %v1056 = vand.u32 %v213, 4294901760
        %1057 = vmatpush1.msra.mxu0 %v1056
        %1058 = vmatprep.subr.mxu0 0.0
        %v1059 = vand.u32 %v214, 4294901760
        %1060 = vmatpush1.msra.mxu0 %v1059
        %1061 = vmatprep.subr.mxu0 0.0
        %v1062 = vand.u32 %v215, 4294901760
        %1063 = vmatpush1.msra.mxu0 %v1062
        %1064 = vmatprep.subr.mxu0 0.0
        %v1065 = vand.u32 %v216, 4294901760
        %1066 = vmatpush1.msra.mxu0 %v1065
        %1067 = vmatprep.subr.mxu0 0.0
        %v1068 = vand.u32 %v217, 4294901760
        %1069 = vmatpush1.msra.mxu0 %v1068
        %1070 = vmatprep.subr.mxu0 0.0
        %v1071 = vand.u32 %v218, 4294901760
        %1072 = vmatpush1.msra.mxu0 %v1071
        %1073 = vmatprep.subr.mxu0 0.0
        %v1074 = vand.u32 %v219, 4294901760
        %1075 = vmatpush1.msra.mxu0 %v1074
        %1076 = vmatprep.subr.mxu0 0.0
        %v1077 = vand.u32 %v220, 4294901760
        %1078 = vmatpush1.msra.mxu0 %v1077
        %1079 = vmatprep.subr.mxu0 0.0
        %v1080 = vand.u32 %v221, 4294901760
        %1081 = vmatpush1.msra.mxu0 %v1080
        %1082 = vmatprep.subr.mxu0 0.0
        %v1083 = vand.u32 %v222, 4294901760
        %1084 = vmatpush1.msra.mxu0 %v1083
        %1085 = vmatprep.subr.mxu0 0.0
        %v1086 = vand.u32 %v223, 4294901760
        %1087 = vmatpush1.msra.mxu0 %v1086
        %1088 = vmatprep.subr.mxu0 0.0
        %v1089 = vand.u32 %v224, 4294901760
        %1090 = vmatpush1.msra.mxu0 %v1089
        %1091 = vmatprep.subr.mxu0 0.0
        %v1092 = vand.u32 %v225, 4294901760
        %1093 = vmatpush1.msra.mxu0 %v1092
        %1094 = vmatprep.subr.mxu0 0.0
        %v1095 = vand.u32 %v226, 4294901760
        %1096 = vmatpush1.msra.mxu0 %v1095
        %1097 = vmatprep.subr.mxu0 0.0
        %v1098 = vand.u32 %v227, 4294901760
        %1099 = vmatpush1.msra.mxu0 %v1098
        %1100 = vmatprep.subr.mxu0 0.0
        %v1101 = vand.u32 %v228, 4294901760
        %1102 = vmatpush1.msra.mxu0 %v1101
        %1103 = vmatprep.subr.mxu0 0.0
        %v1104 = vand.u32 %v229, 4294901760
        %1105 = vmatpush1.msra.mxu0 %v1104
        %1106 = vmatprep.subr.mxu0 0.0
        %v1107 = vand.u32 %v230, 4294901760
        %1108 = vmatpush1.msra.mxu0 %v1107
        %1109 = vmatprep.subr.mxu0 0.0
        %v1110 = vand.u32 %v231, 4294901760
        %1111 = vmatpush1.msra.mxu0 %v1110
        %1112 = vmatprep.subr.mxu0 0.0
        %v1113 = vand.u32 %v232, 4294901760
        %1114 = vmatpush1.msra.mxu0 %v1113
        %1115 = vmatprep.subr.mxu0 0.0
        %v1116 = vand.u32 %v233, 4294901760
        %1117 = vmatpush1.msra.mxu0 %v1116
        %1118 = vmatprep.subr.mxu0 0.0
        %v1119 = vand.u32 %v234, 4294901760
        %1120 = vmatpush1.msra.mxu0 %v1119
        %1121 = vmatprep.subr.mxu0 0.0
        %v1122 = vand.u32 %v235, 4294901760
        %1123 = vmatpush1.msra.mxu0 %v1122
        %v1124 = vand.u32 %v269, 4294901760
        %1125 = vmatprep.mubr.f32.mxu0 %v1124
        %v1126 = vand.u32 %v268, 4294901760
        %1127 = vmatmul.mubr.f32.gmra.mrb[0].mxu0 %v1126
        %v1128 = vpop.f32.mrb[0].mxu0
        %v1129 = vadd.f32 %v1025, %v1128
        %v1130 = vpop.f32.mrb[0].mxu0
        %1131 = vdwg.mxu0
        %1132 = vmatprep.subr.mxu0 0.0
        %v1133 = vand.u32 %v236, 4294901760
        %1134 = vmatpush1.msra.mxu0 %v1133
        %1135 = vmatprep.subr.mxu0 0.0
        %v1136 = vand.u32 %v237, 4294901760
        %1137 = vmatpush1.msra.mxu0 %v1136
        %1138 = vmatprep.subr.mxu0 0.0
        %v1139 = vand.u32 %v238, 4294901760
        %1140 = vmatpush1.msra.mxu0 %v1139
        %1141 = vmatprep.subr.mxu0 0.0
        %v1142 = vand.u32 %v239, 4294901760
        %1143 = vmatpush1.msra.mxu0 %v1142
        %1144 = vmatprep.subr.mxu0 0.0
        %v1145 = vand.u32 %v240, 4294901760
        %1146 = vmatpush1.msra.mxu0 %v1145
        %1147 = vmatprep.subr.mxu0 0.0
        %v1148 = vand.u32 %v241, 4294901760
        %1149 = vmatpush1.msra.mxu0 %v1148
        %1150 = vmatprep.subr.mxu0 0.0
        %v1151 = vand.u32 %v242, 4294901760
        %1152 = vmatpush1.msra.mxu0 %v1151
        %1153 = vmatprep.subr.mxu0 0.0
        %v1154 = vand.u32 %v243, 4294901760
        %1155 = vmatpush1.msra.mxu0 %v1154
        %1156 = vmatprep.subr.mxu0 0.0
        %v1157 = vand.u32 %v244, 4294901760
        %1158 = vmatpush1.msra.mxu0 %v1157
        %1159 = vmatprep.subr.mxu0 0.0
        %v1160 = vand.u32 %v245, 4294901760
        %1161 = vmatpush1.msra.mxu0 %v1160
        %1162 = vmatprep.subr.mxu0 0.0
        %v1163 = vand.u32 %v246, 4294901760
        %1164 = vmatpush1.msra.mxu0 %v1163
        %1165 = vmatprep.subr.mxu0 0.0
        %v1166 = vand.u32 %v247, 4294901760
        %1167 = vmatpush1.msra.mxu0 %v1166
        %1168 = vmatprep.subr.mxu0 0.0
        %v1169 = vand.u32 %v248, 4294901760
        %1170 = vmatpush1.msra.mxu0 %v1169
        %1171 = vmatprep.subr.mxu0 0.0
        %v1172 = vand.u32 %v249, 4294901760
        %1173 = vmatpush1.msra.mxu0 %v1172
        %1174 = vmatprep.subr.mxu0 0.0
        %v1175 = vand.u32 %v250, 4294901760
        %1176 = vmatpush1.msra.mxu0 %v1175
        %1177 = vmatprep.subr.mxu0 0.0
        %v1178 = vand.u32 %v251, 4294901760
        %1179 = vmatpush1.msra.mxu0 %v1178
        %1180 = vmatprep.subr.mxu0 0.0
        %v1181 = vand.u32 %v252, 4294901760
        %1182 = vmatpush1.msra.mxu0 %v1181
        %1183 = vmatprep.subr.mxu0 0.0
        %v1184 = vand.u32 %v253, 4294901760
        %1185 = vmatpush1.msra.mxu0 %v1184
        %1186 = vmatprep.subr.mxu0 0.0
        %v1187 = vand.u32 %v254, 4294901760
        %1188 = vmatpush1.msra.mxu0 %v1187
        %1189 = vmatprep.subr.mxu0 0.0
        %v1190 = vand.u32 %v255, 4294901760
        %1191 = vmatpush1.msra.mxu0 %v1190
        %1192 = vmatprep.subr.mxu0 0.0
        %v1193 = vand.u32 %v256, 4294901760
        %1194 = vmatpush1.msra.mxu0 %v1193
        %1195 = vmatprep.subr.mxu0 0.0
        %v1196 = vand.u32 %v257, 4294901760
        %1197 = vmatpush1.msra.mxu0 %v1196
        %1198 = vmatprep.subr.mxu0 0.0
        %v1199 = vand.u32 %v258, 4294901760
        %1200 = vmatpush1.msra.mxu0 %v1199
        %1201 = vmatprep.subr.mxu0 0.0
        %v1202 = vand.u32 %v259, 4294901760
        %1203 = vmatpush1.msra.mxu0 %v1202
        %1204 = vmatprep.subr.mxu0 0.0
        %v1205 = vand.u32 %v260, 4294901760
        %1206 = vmatpush1.msra.mxu0 %v1205
        %1207 = vmatprep.subr.mxu0 0.0
        %v1208 = vand.u32 %v261, 4294901760
        %1209 = vmatpush1.msra.mxu0 %v1208
        %1210 = vmatprep.subr.mxu0 0.0
        %v1211 = vand.u32 %v262, 4294901760
        %1212 = vmatpush1.msra.mxu0 %v1211
        %1213 = vmatprep.subr.mxu0 0.0
        %v1214 = vand.u32 %v263, 4294901760
        %1215 = vmatpush1.msra.mxu0 %v1214
        %1216 = vmatprep.subr.mxu0 0.0
        %v1217 = vand.u32 %v264, 4294901760
        %1218 = vmatpush1.msra.mxu0 %v1217
        %1219 = vmatprep.subr.mxu0 0.0
        %v1220 = vand.u32 %v265, 4294901760
        %1221 = vmatpush1.msra.mxu0 %v1220
        %1222 = vmatprep.subr.mxu0 0.0
        %v1223 = vand.u32 %v266, 4294901760
        %1224 = vmatpush1.msra.mxu0 %v1223
        %1225 = vmatprep.subr.mxu0 0.0
        %v1226 = vand.u32 %v267, 4294901760
        %1227 = vmatpush1.msra.mxu0 %v1226
        %v1228 = vand.u32 %v269, 4294901760
        %v1229 = vsub.f32 %v269, %v1228
        %v1230 = vand.u32 %v1229, 4294901760
        %v1231 = vsub.f32 %v1229, %v1230
        %v1232 = vand.u32 %v1231, 4294901760
        %1233 = vmatprep.mubr.f32.mxu0 %v1232
        %v1234 = vand.u32 %v268, 4294901760
        %v1235 = vsub.f32 %v268, %v1234
        %v1236 = vand.u32 %v1235, 4294901760
        %v1237 = vsub.f32 %v1235, %v1236
        %v1238 = vand.u32 %v1237, 4294901760
        %1239 = vmatmul.mubr.f32.gmra.mrb[0].mxu0 %v1238
        %v1240 = vpop.f32.mrb[0].mxu0
        %v1241 = vadd.f32 0.0, %v1240
        %v1242 = vpop.f32.mrb[0].mxu0
        %1243 = vdwg.mxu0
        %1244 = vmatprep.subr.mxu0 0.0
        %v1245 = vand.u32 %v236, 4294901760
        %v1246 = vsub.f32 %v236, %v1245
        %v1247 = vand.u32 %v1246, 4294901760
        %v1248 = vsub.f32 %v1246, %v1247
        %v1249 = vand.u32 %v1248, 4294901760
        %1250 = vmatpush1.msra.mxu0 %v1249
        %1251 = vmatprep.subr.mxu0 0.0
        %v1252 = vand.u32 %v237, 4294901760
        %v1253 = vsub.f32 %v237, %v1252
        %v1254 = vand.u32 %v1253, 4294901760
        %v1255 = vsub.f32 %v1253, %v1254
        %v1256 = vand.u32 %v1255, 4294901760
        %1257 = vmatpush1.msra.mxu0 %v1256
        %1258 = vmatprep.subr.mxu0 0.0
        %v1259 = vand.u32 %v238, 4294901760
        %v1260 = vsub.f32 %v238, %v1259
        %v1261 = vand.u32 %v1260, 4294901760
        %v1262 = vsub.f32 %v1260, %v1261
        %v1263 = vand.u32 %v1262, 4294901760
        %1264 = vmatpush1.msra.mxu0 %v1263
        %1265 = vmatprep.subr.mxu0 0.0
        %v1266 = vand.u32 %v239, 4294901760
        %v1267 = vsub.f32 %v239, %v1266
        %v1268 = vand.u32 %v1267, 4294901760
        %v1269 = vsub.f32 %v1267, %v1268
        %v1270 = vand.u32 %v1269, 4294901760
        %1271 = vmatpush1.msra.mxu0 %v1270
        %1272 = vmatprep.subr.mxu0 0.0
        %v1273 = vand.u32 %v240, 4294901760
        %v1274 = vsub.f32 %v240, %v1273
        %v1275 = vand.u32 %v1274, 4294901760
        %v1276 = vsub.f32 %v1274, %v1275
        %v1277 = vand.u32 %v1276, 4294901760
        %1278 = vmatpush1.msra.mxu0 %v1277
        %1279 = vmatprep.subr.mxu0 0.0
        %v1280 = vand.u32 %v241, 4294901760
        %v1281 = vsub.f32 %v241, %v1280
        %v1282 = vand.u32 %v1281, 4294901760
        %v1283 = vsub.f32 %v1281, %v1282
        %v1284 = vand.u32 %v1283, 4294901760
        %1285 = vmatpush1.msra.mxu0 %v1284
        %1286 = vmatprep.subr.mxu0 0.0
        %v1287 = vand.u32 %v242, 4294901760
        %v1288 = vsub.f32 %v242, %v1287
        %v1289 = vand.u32 %v1288, 4294901760
        %v1290 = vsub.f32 %v1288, %v1289
        %v1291 = vand.u32 %v1290, 4294901760
        %1292 = vmatpush1.msra.mxu0 %v1291
        %1293 = vmatprep.subr.mxu0 0.0
        %v1294 = vand.u32 %v243, 4294901760
        %v1295 = vsub.f32 %v243, %v1294
        %v1296 = vand.u32 %v1295, 4294901760
        %v1297 = vsub.f32 %v1295, %v1296
        %v1298 = vand.u32 %v1297, 4294901760
        %1299 = vmatpush1.msra.mxu0 %v1298
        %1300 = vmatprep.subr.mxu0 0.0
        %v1301 = vand.u32 %v244, 4294901760
        %v1302 = vsub.f32 %v244, %v1301
        %v1303 = vand.u32 %v1302, 4294901760
        %v1304 = vsub.f32 %v1302, %v1303
        %v1305 = vand.u32 %v1304, 4294901760
        %1306 = vmatpush1.msra.mxu0 %v1305
        %1307 = vmatprep.subr.mxu0 0.0
        %v1308 = vand.u32 %v245, 4294901760
        %v1309 = vsub.f32 %v245, %v1308
        %v1310 = vand.u32 %v1309, 4294901760
        %v1311 = vsub.f32 %v1309, %v1310
        %v1312 = vand.u32 %v1311, 4294901760
        %1313 = vmatpush1.msra.mxu0 %v1312
        %1314 = vmatprep.subr.mxu0 0.0
        %v1315 = vand.u32 %v246, 4294901760
        %v1316 = vsub.f32 %v246, %v1315
        %v1317 = vand.u32 %v1316, 4294901760
        %v1318 = vsub.f32 %v1316, %v1317
        %v1319 = vand.u32 %v1318, 4294901760
        %1320 = vmatpush1.msra.mxu0 %v1319
        %1321 = vmatprep.subr.mxu0 0.0
        %v1322 = vand.u32 %v247, 4294901760
        %v1323 = vsub.f32 %v247, %v1322
        %v1324 = vand.u32 %v1323, 4294901760
        %v1325 = vsub.f32 %v1323, %v1324
        %v1326 = vand.u32 %v1325, 4294901760
        %1327 = vmatpush1.msra.mxu0 %v1326
        %1328 = vmatprep.subr.mxu0 0.0
        %v1329 = vand.u32 %v248, 4294901760
        %v1330 = vsub.f32 %v248, %v1329
        %v1331 = vand.u32 %v1330, 4294901760
        %v1332 = vsub.f32 %v1330, %v1331
        %v1333 = vand.u32 %v1332, 4294901760
        %1334 = vmatpush1.msra.mxu0 %v1333
        %1335 = vmatprep.subr.mxu0 0.0
        %v1336 = vand.u32 %v249, 4294901760
        %v1337 = vsub.f32 %v249, %v1336
        %v1338 = vand.u32 %v1337, 4294901760
        %v1339 = vsub.f32 %v1337, %v1338
        %v1340 = vand.u32 %v1339, 4294901760
        %1341 = vmatpush1.msra.mxu0 %v1340
        %1342 = vmatprep.subr.mxu0 0.0
        %v1343 = vand.u32 %v250, 4294901760
        %v1344 = vsub.f32 %v250, %v1343
        %v1345 = vand.u32 %v1344, 4294901760
        %v1346 = vsub.f32 %v1344, %v1345
        %v1347 = vand.u32 %v1346, 4294901760
        %1348 = vmatpush1.msra.mxu0 %v1347
        %1349 = vmatprep.subr.mxu0 0.0
        %v1350 = vand.u32 %v251, 4294901760
        %v1351 = vsub.f32 %v251, %v1350
        %v1352 = vand.u32 %v1351, 4294901760
        %v1353 = vsub.f32 %v1351, %v1352
        %v1354 = vand.u32 %v1353, 4294901760
        %1355 = vmatpush1.msra.mxu0 %v1354
        %1356 = vmatprep.subr.mxu0 0.0
        %v1357 = vand.u32 %v252, 4294901760
        %v1358 = vsub.f32 %v252, %v1357
        %v1359 = vand.u32 %v1358, 4294901760
        %v1360 = vsub.f32 %v1358, %v1359
        %v1361 = vand.u32 %v1360, 4294901760
        %1362 = vmatpush1.msra.mxu0 %v1361
        %1363 = vmatprep.subr.mxu0 0.0
        %v1364 = vand.u32 %v253, 4294901760
        %v1365 = vsub.f32 %v253, %v1364
        %v1366 = vand.u32 %v1365, 4294901760
        %v1367 = vsub.f32 %v1365, %v1366
        %v1368 = vand.u32 %v1367, 4294901760
        %1369 = vmatpush1.msra.mxu0 %v1368
        %1370 = vmatprep.subr.mxu0 0.0
        %v1371 = vand.u32 %v254, 4294901760
        %v1372 = vsub.f32 %v254, %v1371
        %v1373 = vand.u32 %v1372, 4294901760
        %v1374 = vsub.f32 %v1372, %v1373
        %v1375 = vand.u32 %v1374, 4294901760
        %1376 = vmatpush1.msra.mxu0 %v1375
        %1377 = vmatprep.subr.mxu0 0.0
        %v1378 = vand.u32 %v255, 4294901760
        %v1379 = vsub.f32 %v255, %v1378
        %v1380 = vand.u32 %v1379, 4294901760
        %v1381 = vsub.f32 %v1379, %v1380
        %v1382 = vand.u32 %v1381, 4294901760
        %1383 = vmatpush1.msra.mxu0 %v1382
        %1384 = vmatprep.subr.mxu0 0.0
        %v1385 = vand.u32 %v256, 4294901760
        %v1386 = vsub.f32 %v256, %v1385
        %v1387 = vand.u32 %v1386, 4294901760
        %v1388 = vsub.f32 %v1386, %v1387
        %v1389 = vand.u32 %v1388, 4294901760
        %1390 = vmatpush1.msra.mxu0 %v1389
        %1391 = vmatprep.subr.mxu0 0.0
        %v1392 = vand.u32 %v257, 4294901760
        %v1393 = vsub.f32 %v257, %v1392
        %v1394 = vand.u32 %v1393, 4294901760
        %v1395 = vsub.f32 %v1393, %v1394
        %v1396 = vand.u32 %v1395, 4294901760
        %1397 = vmatpush1.msra.mxu0 %v1396
        %1398 = vmatprep.subr.mxu0 0.0
        %v1399 = vand.u32 %v258, 4294901760
        %v1400 = vsub.f32 %v258, %v1399
        %v1401 = vand.u32 %v1400, 4294901760
        %v1402 = vsub.f32 %v1400, %v1401
        %v1403 = vand.u32 %v1402, 4294901760
        %1404 = vmatpush1.msra.mxu0 %v1403
        %1405 = vmatprep.subr.mxu0 0.0
        %v1406 = vand.u32 %v259, 4294901760
        %v1407 = vsub.f32 %v259, %v1406
        %v1408 = vand.u32 %v1407, 4294901760
        %v1409 = vsub.f32 %v1407, %v1408
        %v1410 = vand.u32 %v1409, 4294901760
        %1411 = vmatpush1.msra.mxu0 %v1410
        %1412 = vmatprep.subr.mxu0 0.0
        %v1413 = vand.u32 %v260, 4294901760
        %v1414 = vsub.f32 %v260, %v1413
        %v1415 = vand.u32 %v1414, 4294901760
        %v1416 = vsub.f32 %v1414, %v1415
        %v1417 = vand.u32 %v1416, 4294901760
        %1418 = vmatpush1.msra.mxu0 %v1417
        %1419 = vmatprep.subr.mxu0 0.0
        %v1420 = vand.u32 %v261, 4294901760
        %v1421 = vsub.f32 %v261, %v1420
        %v1422 = vand.u32 %v1421, 4294901760
        %v1423 = vsub.f32 %v1421, %v1422
        %v1424 = vand.u32 %v1423, 4294901760
        %1425 = vmatpush1.msra.mxu0 %v1424
        %1426 = vmatprep.subr.mxu0 0.0
        %v1427 = vand.u32 %v262, 4294901760
        %v1428 = vsub.f32 %v262, %v1427
        %v1429 = vand.u32 %v1428, 4294901760
        %v1430 = vsub.f32 %v1428, %v1429
        %v1431 = vand.u32 %v1430, 4294901760
        %1432 = vmatpush1.msra.mxu0 %v1431
        %1433 = vmatprep.subr.mxu0 0.0
        %v1434 = vand.u32 %v263, 4294901760
        %v1435 = vsub.f32 %v263, %v1434
        %v1436 = vand.u32 %v1435, 4294901760
        %v1437 = vsub.f32 %v1435, %v1436
        %v1438 = vand.u32 %v1437, 4294901760
        %1439 = vmatpush1.msra.mxu0 %v1438
        %1440 = vmatprep.subr.mxu0 0.0
        %v1441 = vand.u32 %v264, 4294901760
        %v1442 = vsub.f32 %v264, %v1441
        %v1443 = vand.u32 %v1442, 4294901760
        %v1444 = vsub.f32 %v1442, %v1443
        %v1445 = vand.u32 %v1444, 4294901760
        %1446 = vmatpush1.msra.mxu0 %v1445
        %1447 = vmatprep.subr.mxu0 0.0
        %v1448 = vand.u32 %v265, 4294901760
        %v1449 = vsub.f32 %v265, %v1448
        %v1450 = vand.u32 %v1449, 4294901760
        %v1451 = vsub.f32 %v1449, %v1450
        %v1452 = vand.u32 %v1451, 4294901760
        %1453 = vmatpush1.msra.mxu0 %v1452
        %1454 = vmatprep.subr.mxu0 0.0
        %v1455 = vand.u32 %v266, 4294901760
        %v1456 = vsub.f32 %v266, %v1455
        %v1457 = vand.u32 %v1456, 4294901760
        %v1458 = vsub.f32 %v1456, %v1457
        %v1459 = vand.u32 %v1458, 4294901760
        %1460 = vmatpush1.msra.mxu0 %v1459
        %1461 = vmatprep.subr.mxu0 0.0
        %v1462 = vand.u32 %v267, 4294901760
        %v1463 = vsub.f32 %v267, %v1462
        %v1464 = vand.u32 %v1463, 4294901760
        %v1465 = vsub.f32 %v1463, %v1464
        %v1466 = vand.u32 %v1465, 4294901760
        %1467 = vmatpush1.msra.mxu0 %v1466
        %v1468 = vand.u32 %v269, 4294901760
        %1469 = vmatprep.mubr.f32.mxu0 %v1468
        %v1470 = vand.u32 %v268, 4294901760
        %1471 = vmatmul.mubr.f32.gmra.mrb[0].mxu0 %v1470
        %v1472 = vpop.f32.mrb[0].mxu0
        %v1473 = vadd.f32 %v1241, %v1472
        %v1474 = vpop.f32.mrb[0].mxu0
        %1475 = vdwg.mxu0
        %1476 = vmatprep.subr.mxu0 0.0
        %v1477 = vand.u32 %v236, 4294901760
        %v1478 = vsub.f32 %v236, %v1477
        %1479 = vmatpush1.msra.mxu0 %v1478
        %1480 = vmatprep.subr.mxu0 0.0
        %v1481 = vand.u32 %v237, 4294901760
        %v1482 = vsub.f32 %v237, %v1481
        %1483 = vmatpush1.msra.mxu0 %v1482
        %1484 = vmatprep.subr.mxu0 0.0
        %v1485 = vand.u32 %v238, 4294901760
        %v1486 = vsub.f32 %v238, %v1485
        %1487 = vmatpush1.msra.mxu0 %v1486
        %1488 = vmatprep.subr.mxu0 0.0
        %v1489 = vand.u32 %v239, 4294901760
        %v1490 = vsub.f32 %v239, %v1489
        %1491 = vmatpush1.msra.mxu0 %v1490
        %1492 = vmatprep.subr.mxu0 0.0
        %v1493 = vand.u32 %v240, 4294901760
        %v1494 = vsub.f32 %v240, %v1493
        %1495 = vmatpush1.msra.mxu0 %v1494
        %1496 = vmatprep.subr.mxu0 0.0
        %v1497 = vand.u32 %v241, 4294901760
        %v1498 = vsub.f32 %v241, %v1497
        %1499 = vmatpush1.msra.mxu0 %v1498
        %1500 = vmatprep.subr.mxu0 0.0
        %v1501 = vand.u32 %v242, 4294901760
        %v1502 = vsub.f32 %v242, %v1501
        %1503 = vmatpush1.msra.mxu0 %v1502
        %1504 = vmatprep.subr.mxu0 0.0
        %v1505 = vand.u32 %v243, 4294901760
        %v1506 = vsub.f32 %v243, %v1505
        %1507 = vmatpush1.msra.mxu0 %v1506
        %1508 = vmatprep.subr.mxu0 0.0
        %v1509 = vand.u32 %v244, 4294901760
        %v1510 = vsub.f32 %v244, %v1509
        %1511 = vmatpush1.msra.mxu0 %v1510
        %1512 = vmatprep.subr.mxu0 0.0
        %v1513 = vand.u32 %v245, 4294901760
        %v1514 = vsub.f32 %v245, %v1513
        %1515 = vmatpush1.msra.mxu0 %v1514
        %1516 = vmatprep.subr.mxu0 0.0
        %v1517 = vand.u32 %v246, 4294901760
        %v1518 = vsub.f32 %v246, %v1517
        %1519 = vmatpush1.msra.mxu0 %v1518
        %1520 = vmatprep.subr.mxu0 0.0
        %v1521 = vand.u32 %v247, 4294901760
        %v1522 = vsub.f32 %v247, %v1521
        %1523 = vmatpush1.msra.mxu0 %v1522
        %1524 = vmatprep.subr.mxu0 0.0
        %v1525 = vand.u32 %v248, 4294901760
        %v1526 = vsub.f32 %v248, %v1525
        %1527 = vmatpush1.msra.mxu0 %v1526
        %1528 = vmatprep.subr.mxu0 0.0
        %v1529 = vand.u32 %v249, 4294901760
        %v1530 = vsub.f32 %v249, %v1529
        %1531 = vmatpush1.msra.mxu0 %v1530
        %1532 = vmatprep.subr.mxu0 0.0
        %v1533 = vand.u32 %v250, 4294901760
        %v1534 = vsub.f32 %v250, %v1533
        %1535 = vmatpush1.msra.mxu0 %v1534
        %1536 = vmatprep.subr.mxu0 0.0
        %v1537 = vand.u32 %v251, 4294901760
        %v1538 = vsub.f32 %v251, %v1537
        %1539 = vmatpush1.msra.mxu0 %v1538
        %1540 = vmatprep.subr.mxu0 0.0
        %v1541 = vand.u32 %v252, 4294901760
        %v1542 = vsub.f32 %v252, %v1541
        %1543 = vmatpush1.msra.mxu0 %v1542
        %1544 = vmatprep.subr.mxu0 0.0
        %v1545 = vand.u32 %v253, 4294901760
        %v1546 = vsub.f32 %v253, %v1545
        %1547 = vmatpush1.msra.mxu0 %v1546
        %1548 = vmatprep.subr.mxu0 0.0
        %v1549 = vand.u32 %v254, 4294901760
        %v1550 = vsub.f32 %v254, %v1549
        %1551 = vmatpush1.msra.mxu0 %v1550
        %1552 = vmatprep.subr.mxu0 0.0
        %v1553 = vand.u32 %v255, 4294901760
        %v1554 = vsub.f32 %v255, %v1553
        %1555 = vmatpush1.msra.mxu0 %v1554
        %1556 = vmatprep.subr.mxu0 0.0
        %v1557 = vand.u32 %v256, 4294901760
        %v1558 = vsub.f32 %v256, %v1557
        %1559 = vmatpush1.msra.mxu0 %v1558
        %1560 = vmatprep.subr.mxu0 0.0
        %v1561 = vand.u32 %v257, 4294901760
        %v1562 = vsub.f32 %v257, %v1561
        %1563 = vmatpush1.msra.mxu0 %v1562
        %1564 = vmatprep.subr.mxu0 0.0
        %v1565 = vand.u32 %v258, 4294901760
        %v1566 = vsub.f32 %v258, %v1565
        %1567 = vmatpush1.msra.mxu0 %v1566
        %1568 = vmatprep.subr.mxu0 0.0
        %v1569 = vand.u32 %v259, 4294901760
        %v1570 = vsub.f32 %v259, %v1569
        %1571 = vmatpush1.msra.mxu0 %v1570
        %1572 = vmatprep.subr.mxu0 0.0
        %v1573 = vand.u32 %v260, 4294901760
        %v1574 = vsub.f32 %v260, %v1573
        %1575 = vmatpush1.msra.mxu0 %v1574
        %1576 = vmatprep.subr.mxu0 0.0
        %v1577 = vand.u32 %v261, 4294901760
        %v1578 = vsub.f32 %v261, %v1577
        %1579 = vmatpush1.msra.mxu0 %v1578
        %1580 = vmatprep.subr.mxu0 0.0
        %v1581 = vand.u32 %v262, 4294901760
        %v1582 = vsub.f32 %v262, %v1581
        %1583 = vmatpush1.msra.mxu0 %v1582
        %1584 = vmatprep.subr.mxu0 0.0
        %v1585 = vand.u32 %v263, 4294901760
        %v1586 = vsub.f32 %v263, %v1585
        %1587 = vmatpush1.msra.mxu0 %v1586
        %1588 = vmatprep.subr.mxu0 0.0
        %v1589 = vand.u32 %v264, 4294901760
        %v1590 = vsub.f32 %v264, %v1589
        %1591 = vmatpush1.msra.mxu0 %v1590
        %1592 = vmatprep.subr.mxu0 0.0
        %v1593 = vand.u32 %v265, 4294901760
        %v1594 = vsub.f32 %v265, %v1593
        %1595 = vmatpush1.msra.mxu0 %v1594
        %1596 = vmatprep.subr.mxu0 0.0
        %v1597 = vand.u32 %v266, 4294901760
        %v1598 = vsub.f32 %v266, %v1597
        %1599 = vmatpush1.msra.mxu0 %v1598
        %1600 = vmatprep.subr.mxu0 0.0
        %v1601 = vand.u32 %v267, 4294901760
        %v1602 = vsub.f32 %v267, %v1601
        %1603 = vmatpush1.msra.mxu0 %v1602
        %v1604 = vand.u32 %v269, 4294901760
        %v1605 = vsub.f32 %v269, %v1604
        %1606 = vmatprep.mubr.f32.mxu0 %v1605
        %v1607 = vand.u32 %v268, 4294901760
        %v1608 = vsub.f32 %v268, %v1607
        %1609 = vmatmul.mubr.f32.gmra.mrb[0].mxu0 %v1608
        %v1610 = vpop.f32.mrb[0].mxu0
        %v1611 = vadd.f32 %v1473, %v1610
        %v1612 = vpop.f32.mrb[0].mxu0
        %1613 = vdwg.mxu0
        %1614 = vmatprep.subr.mxu0 0.0
        %v1615 = vand.u32 %v236, 4294901760
        %1616 = vmatpush1.msra.mxu0 %v1615
        %1617 = vmatprep.subr.mxu0 0.0
        %v1618 = vand.u32 %v237, 4294901760
        %1619 = vmatpush1.msra.mxu0 %v1618
        %1620 = vmatprep.subr.mxu0 0.0
        %v1621 = vand.u32 %v238, 4294901760
        %1622 = vmatpush1.msra.mxu0 %v1621
        %1623 = vmatprep.subr.mxu0 0.0
        %v1624 = vand.u32 %v239, 4294901760
        %1625 = vmatpush1.msra.mxu0 %v1624
        %1626 = vmatprep.subr.mxu0 0.0
        %v1627 = vand.u32 %v240, 4294901760
        %1628 = vmatpush1.msra.mxu0 %v1627
        %1629 = vmatprep.subr.mxu0 0.0
        %v1630 = vand.u32 %v241, 4294901760
        %1631 = vmatpush1.msra.mxu0 %v1630
        %1632 = vmatprep.subr.mxu0 0.0
        %v1633 = vand.u32 %v242, 4294901760
        %1634 = vmatpush1.msra.mxu0 %v1633
        %1635 = vmatprep.subr.mxu0 0.0
        %v1636 = vand.u32 %v243, 4294901760
        %1637 = vmatpush1.msra.mxu0 %v1636
        %1638 = vmatprep.subr.mxu0 0.0
        %v1639 = vand.u32 %v244, 4294901760
        %1640 = vmatpush1.msra.mxu0 %v1639
        %1641 = vmatprep.subr.mxu0 0.0
        %v1642 = vand.u32 %v245, 4294901760
        %1643 = vmatpush1.msra.mxu0 %v1642
        %1644 = vmatprep.subr.mxu0 0.0
        %v1645 = vand.u32 %v246, 4294901760
        %1646 = vmatpush1.msra.mxu0 %v1645
        %1647 = vmatprep.subr.mxu0 0.0
        %v1648 = vand.u32 %v247, 4294901760
        %1649 = vmatpush1.msra.mxu0 %v1648
        %1650 = vmatprep.subr.mxu0 0.0
        %v1651 = vand.u32 %v248, 4294901760
        %1652 = vmatpush1.msra.mxu0 %v1651
        %1653 = vmatprep.subr.mxu0 0.0
        %v1654 = vand.u32 %v249, 4294901760
        %1655 = vmatpush1.msra.mxu0 %v1654
        %1656 = vmatprep.subr.mxu0 0.0
        %v1657 = vand.u32 %v250, 4294901760
        %1658 = vmatpush1.msra.mxu0 %v1657
        %1659 = vmatprep.subr.mxu0 0.0
        %v1660 = vand.u32 %v251, 4294901760
        %1661 = vmatpush1.msra.mxu0 %v1660
        %1662 = vmatprep.subr.mxu0 0.0
        %v1663 = vand.u32 %v252, 4294901760
        %1664 = vmatpush1.msra.mxu0 %v1663
        %1665 = vmatprep.subr.mxu0 0.0
        %v1666 = vand.u32 %v253, 4294901760
        %1667 = vmatpush1.msra.mxu0 %v1666
        %1668 = vmatprep.subr.mxu0 0.0
        %v1669 = vand.u32 %v254, 4294901760
        %1670 = vmatpush1.msra.mxu0 %v1669
        %1671 = vmatprep.subr.mxu0 0.0
        %v1672 = vand.u32 %v255, 4294901760
        %1673 = vmatpush1.msra.mxu0 %v1672
        %1674 = vmatprep.subr.mxu0 0.0
        %v1675 = vand.u32 %v256, 4294901760
        %1676 = vmatpush1.msra.mxu0 %v1675
        %1677 = vmatprep.subr.mxu0 0.0
        %v1678 = vand.u32 %v257, 4294901760
        %1679 = vmatpush1.msra.mxu0 %v1678
        %1680 = vmatprep.subr.mxu0 0.0
        %v1681 = vand.u32 %v258, 4294901760
        %1682 = vmatpush1.msra.mxu0 %v1681
        %1683 = vmatprep.subr.mxu0 0.0
        %v1684 = vand.u32 %v259, 4294901760
        %1685 = vmatpush1.msra.mxu0 %v1684
        %1686 = vmatprep.subr.mxu0 0.0
        %v1687 = vand.u32 %v260, 4294901760
        %1688 = vmatpush1.msra.mxu0 %v1687
        %1689 = vmatprep.subr.mxu0 0.0
        %v1690 = vand.u32 %v261, 4294901760
        %1691 = vmatpush1.msra.mxu0 %v1690
        %1692 = vmatprep.subr.mxu0 0.0
        %v1693 = vand.u32 %v262, 4294901760
        %1694 = vmatpush1.msra.mxu0 %v1693
        %1695 = vmatprep.subr.mxu0 0.0
        %v1696 = vand.u32 %v263, 4294901760
        %1697 = vmatpush1.msra.mxu0 %v1696
        %1698 = vmatprep.subr.mxu0 0.0
        %v1699 = vand.u32 %v264, 4294901760
        %1700 = vmatpush1.msra.mxu0 %v1699
        %1701 = vmatprep.subr.mxu0 0.0
        %v1702 = vand.u32 %v265, 4294901760
        %1703 = vmatpush1.msra.mxu0 %v1702
        %1704 = vmatprep.subr.mxu0 0.0
        %v1705 = vand.u32 %v266, 4294901760
        %1706 = vmatpush1.msra.mxu0 %v1705
        %1707 = vmatprep.subr.mxu0 0.0
        %v1708 = vand.u32 %v267, 4294901760
        %1709 = vmatpush1.msra.mxu0 %v1708
        %v1710 = vand.u32 %v269, 4294901760
        %v1711 = vsub.f32 %v269, %v1710
        %v1712 = vand.u32 %v1711, 4294901760
        %1713 = vmatprep.mubr.f32.mxu0 %v1712
        %v1714 = vand.u32 %v268, 4294901760
        %v1715 = vsub.f32 %v268, %v1714
        %v1716 = vand.u32 %v1715, 4294901760
        %1717 = vmatmul.mubr.f32.gmra.mrb[0].mxu0 %v1716
        %v1718 = vpop.f32.mrb[0].mxu0
        %v1719 = vadd.f32 %v1611, %v1718
        %v1720 = vpop.f32.mrb[0].mxu0
        %1721 = vdwg.mxu0
        %1722 = vmatprep.subr.mxu0 0.0
        %v1723 = vand.u32 %v236, 4294901760
        %v1724 = vsub.f32 %v236, %v1723
        %v1725 = vand.u32 %v1724, 4294901760
        %1726 = vmatpush1.msra.mxu0 %v1725
        %1727 = vmatprep.subr.mxu0 0.0
        %v1728 = vand.u32 %v237, 4294901760
        %v1729 = vsub.f32 %v237, %v1728
        %v1730 = vand.u32 %v1729, 4294901760
        %1731 = vmatpush1.msra.mxu0 %v1730
        %1732 = vmatprep.subr.mxu0 0.0
        %v1733 = vand.u32 %v238, 4294901760
        %v1734 = vsub.f32 %v238, %v1733
        %v1735 = vand.u32 %v1734, 4294901760
        %1736 = vmatpush1.msra.mxu0 %v1735
        %1737 = vmatprep.subr.mxu0 0.0
        %v1738 = vand.u32 %v239, 4294901760
        %v1739 = vsub.f32 %v239, %v1738
        %v1740 = vand.u32 %v1739, 4294901760
        %1741 = vmatpush1.msra.mxu0 %v1740
        %1742 = vmatprep.subr.mxu0 0.0
        %v1743 = vand.u32 %v240, 4294901760
        %v1744 = vsub.f32 %v240, %v1743
        %v1745 = vand.u32 %v1744, 4294901760
        %1746 = vmatpush1.msra.mxu0 %v1745
        %1747 = vmatprep.subr.mxu0 0.0
        %v1748 = vand.u32 %v241, 4294901760
        %v1749 = vsub.f32 %v241, %v1748
        %v1750 = vand.u32 %v1749, 4294901760
        %1751 = vmatpush1.msra.mxu0 %v1750
        %1752 = vmatprep.subr.mxu0 0.0
        %v1753 = vand.u32 %v242, 4294901760
        %v1754 = vsub.f32 %v242, %v1753
        %v1755 = vand.u32 %v1754, 4294901760
        %1756 = vmatpush1.msra.mxu0 %v1755
        %1757 = vmatprep.subr.mxu0 0.0
        %v1758 = vand.u32 %v243, 4294901760
        %v1759 = vsub.f32 %v243, %v1758
        %v1760 = vand.u32 %v1759, 4294901760
        %1761 = vmatpush1.msra.mxu0 %v1760
        %1762 = vmatprep.subr.mxu0 0.0
        %v1763 = vand.u32 %v244, 4294901760
        %v1764 = vsub.f32 %v244, %v1763
        %v1765 = vand.u32 %v1764, 4294901760
        %1766 = vmatpush1.msra.mxu0 %v1765
        %1767 = vmatprep.subr.mxu0 0.0
        %v1768 = vand.u32 %v245, 4294901760
        %v1769 = vsub.f32 %v245, %v1768
        %v1770 = vand.u32 %v1769, 4294901760
        %1771 = vmatpush1.msra.mxu0 %v1770
        %1772 = vmatprep.subr.mxu0 0.0
        %v1773 = vand.u32 %v246, 4294901760
        %v1774 = vsub.f32 %v246, %v1773
        %v1775 = vand.u32 %v1774, 4294901760
        %1776 = vmatpush1.msra.mxu0 %v1775
        %1777 = vmatprep.subr.mxu0 0.0
        %v1778 = vand.u32 %v247, 4294901760
        %v1779 = vsub.f32 %v247, %v1778
        %v1780 = vand.u32 %v1779, 4294901760
        %1781 = vmatpush1.msra.mxu0 %v1780
        %1782 = vmatprep.subr.mxu0 0.0
        %v1783 = vand.u32 %v248, 4294901760
        %v1784 = vsub.f32 %v248, %v1783
        %v1785 = vand.u32 %v1784, 4294901760
        %1786 = vmatpush1.msra.mxu0 %v1785
        %1787 = vmatprep.subr.mxu0 0.0
        %v1788 = vand.u32 %v249, 4294901760
        %v1789 = vsub.f32 %v249, %v1788
        %v1790 = vand.u32 %v1789, 4294901760
        %1791 = vmatpush1.msra.mxu0 %v1790
        %1792 = vmatprep.subr.mxu0 0.0
        %v1793 = vand.u32 %v250, 4294901760
        %v1794 = vsub.f32 %v250, %v1793
        %v1795 = vand.u32 %v1794, 4294901760
        %1796 = vmatpush1.msra.mxu0 %v1795
        %1797 = vmatprep.subr.mxu0 0.0
        %v1798 = vand.u32 %v251, 4294901760
        %v1799 = vsub.f32 %v251, %v1798
        %v1800 = vand.u32 %v1799, 4294901760
        %1801 = vmatpush1.msra.mxu0 %v1800
        %1802 = vmatprep.subr.mxu0 0.0
        %v1803 = vand.u32 %v252, 4294901760
        %v1804 = vsub.f32 %v252, %v1803
        %v1805 = vand.u32 %v1804, 4294901760
        %1806 = vmatpush1.msra.mxu0 %v1805
        %1807 = vmatprep.subr.mxu0 0.0
        %v1808 = vand.u32 %v253, 4294901760
        %v1809 = vsub.f32 %v253, %v1808
        %v1810 = vand.u32 %v1809, 4294901760
        %1811 = vmatpush1.msra.mxu0 %v1810
        %1812 = vmatprep.subr.mxu0 0.0
        %v1813 = vand.u32 %v254, 4294901760
        %v1814 = vsub.f32 %v254, %v1813
        %v1815 = vand.u32 %v1814, 4294901760
        %1816 = vmatpush1.msra.mxu0 %v1815
        %1817 = vmatprep.subr.mxu0 0.0
        %v1818 = vand.u32 %v255, 4294901760
        %v1819 = vsub.f32 %v255, %v1818
        %v1820 = vand.u32 %v1819, 4294901760
        %1821 = vmatpush1.msra.mxu0 %v1820
        %1822 = vmatprep.subr.mxu0 0.0
        %v1823 = vand.u32 %v256, 4294901760
        %v1824 = vsub.f32 %v256, %v1823
        %v1825 = vand.u32 %v1824, 4294901760
        %1826 = vmatpush1.msra.mxu0 %v1825
        %1827 = vmatprep.subr.mxu0 0.0
        %v1828 = vand.u32 %v257, 4294901760
        %v1829 = vsub.f32 %v257, %v1828
        %v1830 = vand.u32 %v1829, 4294901760
        %1831 = vmatpush1.msra.mxu0 %v1830
        %1832 = vmatprep.subr.mxu0 0.0
        %v1833 = vand.u32 %v258, 4294901760
        %v1834 = vsub.f32 %v258, %v1833
        %v1835 = vand.u32 %v1834, 4294901760
        %1836 = vmatpush1.msra.mxu0 %v1835
        %1837 = vmatprep.subr.mxu0 0.0
        %v1838 = vand.u32 %v259, 4294901760
        %v1839 = vsub.f32 %v259, %v1838
        %v1840 = vand.u32 %v1839, 4294901760
        %1841 = vmatpush1.msra.mxu0 %v1840
        %1842 = vmatprep.subr.mxu0 0.0
        %v1843 = vand.u32 %v260, 4294901760
        %v1844 = vsub.f32 %v260, %v1843
        %v1845 = vand.u32 %v1844, 4294901760
        %1846 = vmatpush1.msra.mxu0 %v1845
        %1847 = vmatprep.subr.mxu0 0.0
        %v1848 = vand.u32 %v261, 4294901760
        %v1849 = vsub.f32 %v261, %v1848
        %v1850 = vand.u32 %v1849, 4294901760
        %1851 = vmatpush1.msra.mxu0 %v1850
        %1852 = vmatprep.subr.mxu0 0.0
        %v1853 = vand.u32 %v262, 4294901760
        %v1854 = vsub.f32 %v262, %v1853
        %v1855 = vand.u32 %v1854, 4294901760
        %1856 = vmatpush1.msra.mxu0 %v1855
        %1857 = vmatprep.subr.mxu0 0.0
        %v1858 = vand.u32 %v263, 4294901760
        %v1859 = vsub.f32 %v263, %v1858
        %v1860 = vand.u32 %v1859, 4294901760
        %1861 = vmatpush1.msra.mxu0 %v1860
        %1862 = vmatprep.subr.mxu0 0.0
        %v1863 = vand.u32 %v264, 4294901760
        %v1864 = vsub.f32 %v264, %v1863
        %v1865 = vand.u32 %v1864, 4294901760
        %1866 = vmatpush1.msra.mxu0 %v1865
        %1867 = vmatprep.subr.mxu0 0.0
        %v1868 = vand.u32 %v265, 4294901760
        %v1869 = vsub.f32 %v265, %v1868
        %v1870 = vand.u32 %v1869, 4294901760
        %1871 = vmatpush1.msra.mxu0 %v1870
        %1872 = vmatprep.subr.mxu0 0.0
        %v1873 = vand.u32 %v266, 4294901760
        %v1874 = vsub.f32 %v266, %v1873
        %v1875 = vand.u32 %v1874, 4294901760
        %1876 = vmatpush1.msra.mxu0 %v1875
        %1877 = vmatprep.subr.mxu0 0.0
        %v1878 = vand.u32 %v267, 4294901760
        %v1879 = vsub.f32 %v267, %v1878
        %v1880 = vand.u32 %v1879, 4294901760
        %1881 = vmatpush1.msra.mxu0 %v1880
        %v1882 = vand.u32 %v269, 4294901760
        %1883 = vmatprep.mubr.f32.mxu0 %v1882
        %v1884 = vand.u32 %v268, 4294901760
        %1885 = vmatmul.mubr.f32.gmra.mrb[0].mxu0 %v1884
        %v1886 = vpop.f32.mrb[0].mxu0
        %v1887 = vadd.f32 %v1719, %v1886
        %v1888 = vpop.f32.mrb[0].mxu0
        %1889 = vdwg.mxu0
        %1890 = vmatprep.subr.mxu0 0.0
        %v1891 = vand.u32 %v236, 4294901760
        %1892 = vmatpush1.msra.mxu0 %v1891
        %1893 = vmatprep.subr.mxu0 0.0
        %v1894 = vand.u32 %v237, 4294901760
        %1895 = vmatpush1.msra.mxu0 %v1894
        %1896 = vmatprep.subr.mxu0 0.0
        %v1897 = vand.u32 %v238, 4294901760
        %1898 = vmatpush1.msra.mxu0 %v1897
        %1899 = vmatprep.subr.mxu0 0.0
        %v1900 = vand.u32 %v239, 4294901760
        %1901 = vmatpush1.msra.mxu0 %v1900
        %1902 = vmatprep.subr.mxu0 0.0
        %v1903 = vand.u32 %v240, 4294901760
        %1904 = vmatpush1.msra.mxu0 %v1903
        %1905 = vmatprep.subr.mxu0 0.0
        %v1906 = vand.u32 %v241, 4294901760
        %1907 = vmatpush1.msra.mxu0 %v1906
        %1908 = vmatprep.subr.mxu0 0.0
        %v1909 = vand.u32 %v242, 4294901760
        %1910 = vmatpush1.msra.mxu0 %v1909
        %1911 = vmatprep.subr.mxu0 0.0
        %v1912 = vand.u32 %v243, 4294901760
        %1913 = vmatpush1.msra.mxu0 %v1912
        %1914 = vmatprep.subr.mxu0 0.0
        %v1915 = vand.u32 %v244, 4294901760
        %1916 = vmatpush1.msra.mxu0 %v1915
        %1917 = vmatprep.subr.mxu0 0.0
        %v1918 = vand.u32 %v245, 4294901760
        %1919 = vmatpush1.msra.mxu0 %v1918
        %1920 = vmatprep.subr.mxu0 0.0
        %v1921 = vand.u32 %v246, 4294901760
        %1922 = vmatpush1.msra.mxu0 %v1921
        %1923 = vmatprep.subr.mxu0 0.0
        %v1924 = vand.u32 %v247, 4294901760
        %1925 = vmatpush1.msra.mxu0 %v1924
        %1926 = vmatprep.subr.mxu0 0.0
        %v1927 = vand.u32 %v248, 4294901760
        %1928 = vmatpush1.msra.mxu0 %v1927
        %1929 = vmatprep.subr.mxu0 0.0
        %v1930 = vand.u32 %v249, 4294901760
        %1931 = vmatpush1.msra.mxu0 %v1930
        %1932 = vmatprep.subr.mxu0 0.0
        %v1933 = vand.u32 %v250, 4294901760
        %1934 = vmatpush1.msra.mxu0 %v1933
        %1935 = vmatprep.subr.mxu0 0.0
        %v1936 = vand.u32 %v251, 4294901760
        %1937 = vmatpush1.msra.mxu0 %v1936
        %1938 = vmatprep.subr.mxu0 0.0
        %v1939 = vand.u32 %v252, 4294901760
        %1940 = vmatpush1.msra.mxu0 %v1939
        %1941 = vmatprep.subr.mxu0 0.0
        %v1942 = vand.u32 %v253, 4294901760
        %1943 = vmatpush1.msra.mxu0 %v1942
        %1944 = vmatprep.subr.mxu0 0.0
        %v1945 = vand.u32 %v254, 4294901760
        %1946 = vmatpush1.msra.mxu0 %v1945
        %1947 = vmatprep.subr.mxu0 0.0
        %v1948 = vand.u32 %v255, 4294901760
        %1949 = vmatpush1.msra.mxu0 %v1948
        %1950 = vmatprep.subr.mxu0 0.0
        %v1951 = vand.u32 %v256, 4294901760
        %1952 = vmatpush1.msra.mxu0 %v1951
        %1953 = vmatprep.subr.mxu0 0.0
        %v1954 = vand.u32 %v257, 4294901760
        %1955 = vmatpush1.msra.mxu0 %v1954
        %1956 = vmatprep.subr.mxu0 0.0
        %v1957 = vand.u32 %v258, 4294901760
        %1958 = vmatpush1.msra.mxu0 %v1957
        %1959 = vmatprep.subr.mxu0 0.0
        %v1960 = vand.u32 %v259, 4294901760
        %1961 = vmatpush1.msra.mxu0 %v1960
        %1962 = vmatprep.subr.mxu0 0.0
        %v1963 = vand.u32 %v260, 4294901760
        %1964 = vmatpush1.msra.mxu0 %v1963
        %1965 = vmatprep.subr.mxu0 0.0
        %v1966 = vand.u32 %v261, 4294901760
        %1967 = vmatpush1.msra.mxu0 %v1966
        %1968 = vmatprep.subr.mxu0 0.0
        %v1969 = vand.u32 %v262, 4294901760
        %1970 = vmatpush1.msra.mxu0 %v1969
        %1971 = vmatprep.subr.mxu0 0.0
        %v1972 = vand.u32 %v263, 4294901760
        %1973 = vmatpush1.msra.mxu0 %v1972
        %1974 = vmatprep.subr.mxu0 0.0
        %v1975 = vand.u32 %v264, 4294901760
        %1976 = vmatpush1.msra.mxu0 %v1975
        %1977 = vmatprep.subr.mxu0 0.0
        %v1978 = vand.u32 %v265, 4294901760
        %1979 = vmatpush1.msra.mxu0 %v1978
        %1980 = vmatprep.subr.mxu0 0.0
        %v1981 = vand.u32 %v266, 4294901760
        %1982 = vmatpush1.msra.mxu0 %v1981
        %1983 = vmatprep.subr.mxu0 0.0
        %v1984 = vand.u32 %v267, 4294901760
        %1985 = vmatpush1.msra.mxu0 %v1984
        %v1986 = vand.u32 %v269, 4294901760
        %1987 = vmatprep.mubr.f32.mxu0 %v1986
        %v1988 = vand.u32 %v268, 4294901760
        %1989 = vmatmul.mubr.f32.gmra.mrb[0].mxu0 %v1988
        %v1990 = vpop.f32.mrb[0].mxu0
        %v1991 = vadd.f32 %v1887, %v1990
        %v1992 = vpop.f32.mrb[0].mxu0
        %1993 = vdwg.mxu0
        %v1994 = vmul.f32 %v1129, %v1129
        %vm1995 = vcmask 130048
        %v1996 = vsel %vm1995, %v1994, 0.0
        %1997 = vadd.xlane.f32.xlu0 %v1996
        %v1998 = vpop.xlane.xlu0 %1997
        %v1999 = vrsqrt.pop %v1998
        %v2000 = vmul.f32 %v1998, %v1999
        %vm2001 = vcmp.eq.f32.partialorder %v1998, inf
        %v2002 = vsel %vm2001, %v1998, %v2000
        %vm2003 = vcmp.eq.f32.partialorder %v1998, 0.0
        %v2004 = vand.u32 %v1998, 2147483648
        %v2005 = vsel %vm2003, %v2004, %v2002
        %v2006 = vmax.f32 %v2005, 1e-12
        %v2007 = vrcp.pop %v2006
        %v2008 = vmul.f32 %v1129, %v2007
        %v2009 = vmul.f32 %v1991, %v1991
        %v2010 = vsel %vm1995, %v2009, 0.0
        %2011 = vadd.xlane.f32.xlu0 %v2010
        %v2012 = vpop.xlane.xlu0 %2011
        %v2013 = vrsqrt.pop %v2012
        %v2014 = vmul.f32 %v2012, %v2013
        %vm2015 = vcmp.eq.f32.partialorder %v2012, inf
        %v2016 = vsel %vm2015, %v2012, %v2014
        %vm2017 = vcmp.eq.f32.partialorder %v2012, 0.0
        %v2018 = vand.u32 %v2012, 2147483648
        %v2019 = vsel %vm2017, %v2018, %v2016
        %v2020 = vmax.f32 %v2019, 1e-12
        %v2021 = vrcp.pop %v2020
        %v2022 = vmul.f32 %v1991, %v2021
        %v2023 = vld [vmem:[#allocation2] sm:$0xff]
        %v2024 = vld [vmem:[#allocation2 + $0x8] sm:$0xff]
        %2025 = vxpose.xlu0.b32.start [1/16] %v2008, 128
        %2026 = vxpose.xlu0.b32.cont [2/16] 0.0, 128
        %2027 = vxpose.xlu0.b32.cont [3/16] 0.0, 128
        %2028 = vxpose.xlu0.b32.cont [4/16] 0.0, 128
        %2029 = vxpose.xlu0.b32.cont [5/16] 0.0, 128
        %2030 = vxpose.xlu0.b32.cont [6/16] 0.0, 128
        %2031 = vxpose.xlu0.b32.cont [7/16] 0.0, 128
        %2032 = vxpose.xlu0.b32.cont [8/16] 0.0, 128
        %2033 = vxpose.xlu0.b32.cont [9/16] 0.0, 128
        %2034 = vxpose.xlu0.b32.cont [10/16] 0.0, 128
        %2035 = vxpose.xlu0.b32.cont [11/16] 0.0, 128
        %2036 = vxpose.xlu0.b32.cont [12/16] 0.0, 128
        %2037 = vxpose.xlu0.b32.cont [13/16] 0.0, 128
        %2038 = vxpose.xlu0.b32.cont [14/16] 0.0, 128
        %2039 = vxpose.xlu0.b32.cont [15/16] 0.0, 128
        %2040 = vxpose.xlu0.b32.end [16/16] 0.0, 128
        %v2041 = vpop.trf.xlu0
        %v2042 = vpop.trf.xlu0
        %v2043 = vpop.trf.xlu0
        %v2044 = vpop.trf.xlu0
        %v2045 = vpop.trf.xlu0
        %v2046 = vpop.trf.xlu0
        %v2047 = vpop.trf.xlu0
        %v2048 = vpop.trf.xlu0
        %v2049 = vpop.trf.xlu0
        %v2050 = vpop.trf.xlu0
        %v2051 = vpop.trf.xlu0
        %v2052 = vpop.trf.xlu0
        %v2053 = vpop.trf.xlu0
        %v2054 = vpop.trf.xlu0
        %v2055 = vpop.trf.xlu0
        %v2056 = vpop.trf.xlu0
        %vm2057 = vcmask 64512
        %v2059 = vsel %vm2057, %v2041, 0
        %v2062 = vsel %vm2057, %v2042, 0
        %2064 = vmatprep.subr.mxu0 0.0
        %v2065 = vand.u32 %v2008, 4294901760
        %2066 = vmatpush1.msra.mxu0 %v2065
        %2067 = vmatprep.subr.mxu0 0.0
        %2068 = vmatpush1.msra.mxu0 0.0
        %2069 = vmatprep.subr.mxu0 0.0
        %2070 = vmatpush1.msra.mxu0 0.0
        %2071 = vmatprep.subr.mxu0 0.0
        %2072 = vmatpush1.msra.mxu0 0.0
        %2073 = vmatprep.subr.mxu0 0.0
        %2074 = vmatpush1.msra.mxu0 0.0
        %2075 = vmatprep.subr.mxu0 0.0
        %2076 = vmatpush1.msra.mxu0 0.0
        %2077 = vmatprep.subr.mxu0 0.0
        %2078 = vmatpush1.msra.mxu0 0.0
        %2079 = vmatprep.subr.mxu0 0.0
        %2080 = vmatpush1.msra.mxu0 0.0
        %2081 = vmatprep.subr.mxu0 0.0
        %2082 = vmatpush1.msra.mxu0 0.0
        %2083 = vmatprep.subr.mxu0 0.0
        %2084 = vmatpush1.msra.mxu0 0.0
        %2085 = vmatprep.subr.mxu0 0.0
        %2086 = vmatpush1.msra.mxu0 0.0
        %2087 = vmatprep.subr.mxu0 0.0
        %2088 = vmatpush1.msra.mxu0 0.0
        %2089 = vmatprep.subr.mxu0 0.0
        %2090 = vmatpush1.msra.mxu0 0.0
        %2091 = vmatprep.subr.mxu0 0.0
        %2092 = vmatpush1.msra.mxu0 0.0
        %2093 = vmatprep.subr.mxu0 0.0
        %2094 = vmatpush1.msra.mxu0 0.0
        %2095 = vmatprep.subr.mxu0 0.0
        %2096 = vmatpush1.msra.mxu0 0.0
        %2097 = vmatprep.subr.mxu0 0.0
        %2098 = vmatpush1.msra.mxu0 0.0
        %2099 = vmatprep.subr.mxu0 0.0
        %2100 = vmatpush1.msra.mxu0 0.0
        %2101 = vmatprep.subr.mxu0 0.0
        %2102 = vmatpush1.msra.mxu0 0.0
        %2103 = vmatprep.subr.mxu0 0.0
        %2104 = vmatpush1.msra.mxu0 0.0
        %2105 = vmatprep.subr.mxu0 0.0
        %2106 = vmatpush1.msra.mxu0 0.0
        %2107 = vmatprep.subr.mxu0 0.0
        %2108 = vmatpush1.msra.mxu0 0.0
        %2109 = vmatprep.subr.mxu0 0.0
        %2110 = vmatpush1.msra.mxu0 0.0
        %2111 = vmatprep.subr.mxu0 0.0
        %2112 = vmatpush1.msra.mxu0 0.0
        %2113 = vmatprep.subr.mxu0 0.0
        %2114 = vmatpush1.msra.mxu0 0.0
        %2115 = vmatprep.subr.mxu0 0.0
        %2116 = vmatpush1.msra.mxu0 0.0
        %2117 = vmatprep.subr.mxu0 0.0
        %2118 = vmatpush1.msra.mxu0 0.0
        %2119 = vmatprep.subr.mxu0 0.0
        %2120 = vmatpush1.msra.mxu0 0.0
        %2121 = vmatprep.subr.mxu0 0.0
        %2122 = vmatpush1.msra.mxu0 0.0
        %2123 = vmatprep.subr.mxu0 0.0
        %2124 = vmatpush1.msra.mxu0 0.0
        %2125 = vmatprep.subr.mxu0 0.0
        %2126 = vmatpush1.msra.mxu0 0.0
        %2127 = vmatprep.subr.mxu0 0.0
        %2128 = vmatpush1.msra.mxu0 0.0
        %2129 = vmatprep.mubr.f32.mxu0 0.0
        %v2130 = vand.u32 %v2059, 4294901760
        %v2131 = vsub.f32 %v2059, %v2130
        %v2132 = vand.u32 %v2131, 4294901760
        %v2133 = vsub.f32 %v2131, %v2132
        %v2134 = vand.u32 %v2133, 4294901760
        %2135 = vmatmul.mubr.f32.gmra.mrb[0].mxu0 %v2134
        %v2136 = vpop.f32.mrb[0].mxu0
        %v2137 = vadd.f32 0.0, %v2136
        %v2138 = vpop.f32.mrb[0].mxu0
        %2139 = vmatprep.mubr.f32.mxu0 0.0
        %v2140 = vand.u32 %v2062, 4294901760
        %v2141 = vsub.f32 %v2062, %v2140
        %v2142 = vand.u32 %v2141, 4294901760
        %v2143 = vsub.f32 %v2141, %v2142
        %v2144 = vand.u32 %v2143, 4294901760
        %2145 = vmatmul.mubr.f32.gmra.mrb[0].mxu0 %v2144
        %v2146 = vpop.f32.mrb[0].mxu0
        %v2147 = vadd.f32 0.0, %v2146
        %v2148 = vpop.f32.mrb[0].mxu0
        %2149 = vdwg.mxu0
        %2150 = vmatprep.subr.mxu0 0.0
        %v2151 = vand.u32 %v2008, 4294901760
        %v2152 = vsub.f32 %v2008, %v2151
        %v2153 = vand.u32 %v2152, 4294901760
        %v2154 = vsub.f32 %v2152, %v2153
        %v2155 = vand.u32 %v2154, 4294901760
        %2156 = vmatpush1.msra.mxu0 %v2155
        %2157 = vmatprep.subr.mxu0 0.0
        %2158 = vmatpush1.msra.mxu0 0.0
        %2159 = vmatprep.subr.mxu0 0.0
        %2160 = vmatpush1.msra.mxu0 0.0
        %2161 = vmatprep.subr.mxu0 0.0
        %2162 = vmatpush1.msra.mxu0 0.0
        %2163 = vmatprep.subr.mxu0 0.0
        %2164 = vmatpush1.msra.mxu0 0.0
        %2165 = vmatprep.subr.mxu0 0.0
        %2166 = vmatpush1.msra.mxu0 0.0
        %2167 = vmatprep.subr.mxu0 0.0
        %2168 = vmatpush1.msra.mxu0 0.0
        %2169 = vmatprep.subr.mxu0 0.0
        %2170 = vmatpush1.msra.mxu0 0.0
        %2171 = vmatprep.subr.mxu0 0.0
        %2172 = vmatpush1.msra.mxu0 0.0
        %2173 = vmatprep.subr.mxu0 0.0
        %2174 = vmatpush1.msra.mxu0 0.0
        %2175 = vmatprep.subr.mxu0 0.0
        %2176 = vmatpush1.msra.mxu0 0.0
        %2177 = vmatprep.subr.mxu0 0.0
        %2178 = vmatpush1.msra.mxu0 0.0
        %2179 = vmatprep.subr.mxu0 0.0
        %2180 = vmatpush1.msra.mxu0 0.0
        %2181 = vmatprep.subr.mxu0 0.0
        %2182 = vmatpush1.msra.mxu0 0.0
        %2183 = vmatprep.subr.mxu0 0.0
        %2184 = vmatpush1.msra.mxu0 0.0
        %2185 = vmatprep.subr.mxu0 0.0
        %2186 = vmatpush1.msra.mxu0 0.0
        %2187 = vmatprep.subr.mxu0 0.0
        %2188 = vmatpush1.msra.mxu0 0.0
        %2189 = vmatprep.subr.mxu0 0.0
        %2190 = vmatpush1.msra.mxu0 0.0
        %2191 = vmatprep.subr.mxu0 0.0
        %2192 = vmatpush1.msra.mxu0 0.0
        %2193 = vmatprep.subr.mxu0 0.0
        %2194 = vmatpush1.msra.mxu0 0.0
        %2195 = vmatprep.subr.mxu0 0.0
        %2196 = vmatpush1.msra.mxu0 0.0
        %2197 = vmatprep.subr.mxu0 0.0
        %2198 = vmatpush1.msra.mxu0 0.0
        %2199 = vmatprep.subr.mxu0 0.0
        %2200 = vmatpush1.msra.mxu0 0.0
        %2201 = vmatprep.subr.mxu0 0.0
        %2202 = vmatpush1.msra.mxu0 0.0
        %2203 = vmatprep.subr.mxu0 0.0
        %2204 = vmatpush1.msra.mxu0 0.0
        %2205 = vmatprep.subr.mxu0 0.0
        %2206 = vmatpush1.msra.mxu0 0.0
        %2207 = vmatprep.subr.mxu0 0.0
        %2208 = vmatpush1.msra.mxu0 0.0
        %2209 = vmatprep.subr.mxu0 0.0
        %2210 = vmatpush1.msra.mxu0 0.0
        %2211 = vmatprep.subr.mxu0 0.0
        %2212 = vmatpush1.msra.mxu0 0.0
        %2213 = vmatprep.subr.mxu0 0.0
        %2214 = vmatpush1.msra.mxu0 0.0
        %2215 = vmatprep.subr.mxu0 0.0
        %2216 = vmatpush1.msra.mxu0 0.0
        %2217 = vmatprep.subr.mxu0 0.0
        %2218 = vmatpush1.msra.mxu0 0.0
        %2219 = vmatprep.mubr.f32.mxu0 0.0
        %v2220 = vand.u32 %v2059, 4294901760
        %2221 = vmatmul.mubr.f32.gmra.mrb[0].mxu0 %v2220
        %v2222 = vpop.f32.mrb[0].mxu0
        %v2223 = vadd.f32 %v2137, %v2222
        %v2224 = vpop.f32.mrb[0].mxu0
        %2225 = vmatprep.mubr.f32.mxu0 0.0
        %v2226 = vand.u32 %v2062, 4294901760
        %2227 = vmatmul.mubr.f32.gmra.mrb[0].mxu0 %v2226
        %v2228 = vpop.f32.mrb[0].mxu0
        %v2229 = vadd.f32 %v2147, %v2228
        %v2230 = vpop.f32.mrb[0].mxu0
        %2231 = vdwg.mxu0
        %2232 = vmatprep.subr.mxu0 0.0
        %v2233 = vand.u32 %v2008, 4294901760
        %v2234 = vsub.f32 %v2008, %v2233
        %2235 = vmatpush1.msra.mxu0 %v2234
        %2236 = vmatprep.subr.mxu0 0.0
        %2237 = vmatpush1.msra.mxu0 0.0
        %2238 = vmatprep.subr.mxu0 0.0
        %2239 = vmatpush1.msra.mxu0 0.0
        %2240 = vmatprep.subr.mxu0 0.0
        %2241 = vmatpush1.msra.mxu0 0.0
        %2242 = vmatprep.subr.mxu0 0.0
        %2243 = vmatpush1.msra.mxu0 0.0
        %2244 = vmatprep.subr.mxu0 0.0
        %2245 = vmatpush1.msra.mxu0 0.0
        %2246 = vmatprep.subr.mxu0 0.0
        %2247 = vmatpush1.msra.mxu0 0.0
        %2248 = vmatprep.subr.mxu0 0.0
        %2249 = vmatpush1.msra.mxu0 0.0
        %2250 = vmatprep.subr.mxu0 0.0
        %2251 = vmatpush1.msra.mxu0 0.0
        %2252 = vmatprep.subr.mxu0 0.0
        %2253 = vmatpush1.msra.mxu0 0.0
        %2254 = vmatprep.subr.mxu0 0.0
        %2255 = vmatpush1.msra.mxu0 0.0
        %2256 = vmatprep.subr.mxu0 0.0
        %2257 = vmatpush1.msra.mxu0 0.0
        %2258 = vmatprep.subr.mxu0 0.0
        %2259 = vmatpush1.msra.mxu0 0.0
        %2260 = vmatprep.subr.mxu0 0.0
        %2261 = vmatpush1.msra.mxu0 0.0
        %2262 = vmatprep.subr.mxu0 0.0
        %2263 = vmatpush1.msra.mxu0 0.0
        %2264 = vmatprep.subr.mxu0 0.0
        %2265 = vmatpush1.msra.mxu0 0.0
        %2266 = vmatprep.subr.mxu0 0.0
        %2267 = vmatpush1.msra.mxu0 0.0
        %2268 = vmatprep.subr.mxu0 0.0
        %2269 = vmatpush1.msra.mxu0 0.0
        %2270 = vmatprep.subr.mxu0 0.0
        %2271 = vmatpush1.msra.mxu0 0.0
        %2272 = vmatprep.subr.mxu0 0.0
        %2273 = vmatpush1.msra.mxu0 0.0
        %2274 = vmatprep.subr.mxu0 0.0
        %2275 = vmatpush1.msra.mxu0 0.0
        %2276 = vmatprep.subr.mxu0 0.0
        %2277 = vmatpush1.msra.mxu0 0.0
        %2278 = vmatprep.subr.mxu0 0.0
        %2279 = vmatpush1.msra.mxu0 0.0
        %2280 = vmatprep.subr.mxu0 0.0
        %2281 = vmatpush1.msra.mxu0 0.0
        %2282 = vmatprep.subr.mxu0 0.0
        %2283 = vmatpush1.msra.mxu0 0.0
        %2284 = vmatprep.subr.mxu0 0.0
        %2285 = vmatpush1.msra.mxu0 0.0
        %2286 = vmatprep.subr.mxu0 0.0
        %2287 = vmatpush1.msra.mxu0 0.0
        %2288 = vmatprep.subr.mxu0 0.0
        %2289 = vmatpush1.msra.mxu0 0.0
        %2290 = vmatprep.subr.mxu0 0.0
        %2291 = vmatpush1.msra.mxu0 0.0
        %2292 = vmatprep.subr.mxu0 0.0
        %2293 = vmatpush1.msra.mxu0 0.0
        %2294 = vmatprep.subr.mxu0 0.0
        %2295 = vmatpush1.msra.mxu0 0.0
        %2296 = vmatprep.subr.mxu0 0.0
        %2297 = vmatpush1.msra.mxu0 0.0
        %2298 = vmatprep.mubr.f32.mxu0 0.0
        %v2299 = vand.u32 %v2059, 4294901760
        %v2300 = vsub.f32 %v2059, %v2299
        %2301 = vmatmul.mubr.f32.gmra.mrb[0].mxu0 %v2300
        %v2302 = vpop.f32.mrb[0].mxu0
        %v2303 = vadd.f32 %v2223, %v2302
        %v2304 = vpop.f32.mrb[0].mxu0
        %2305 = vmatprep.mubr.f32.mxu0 0.0
        %v2306 = vand.u32 %v2062, 4294901760
        %v2307 = vsub.f32 %v2062, %v2306
        %2308 = vmatmul.mubr.f32.gmra.mrb[0].mxu0 %v2307
        %v2309 = vpop.f32.mrb[0].mxu0
        %v2310 = vadd.f32 %v2229, %v2309
        %v2311 = vpop.f32.mrb[0].mxu0
        %2312 = vdwg.mxu0
        %2313 = vmatprep.subr.mxu0 0.0
        %v2314 = vand.u32 %v2008, 4294901760
        %2315 = vmatpush1.msra.mxu0 %v2314
        %2316 = vmatprep.subr.mxu0 0.0
        %2317 = vmatpush1.msra.mxu0 0.0
        %2318 = vmatprep.subr.mxu0 0.0
        %2319 = vmatpush1.msra.mxu0 0.0
        %2320 = vmatprep.subr.mxu0 0.0
        %2321 = vmatpush1.msra.mxu0 0.0
        %2322 = vmatprep.subr.mxu0 0.0
        %2323 = vmatpush1.msra.mxu0 0.0
        %2324 = vmatprep.subr.mxu0 0.0
        %2325 = vmatpush1.msra.mxu0 0.0
        %2326 = vmatprep.subr.mxu0 0.0
        %2327 = vmatpush1.msra.mxu0 0.0
        %2328 = vmatprep.subr.mxu0 0.0
        %2329 = vmatpush1.msra.mxu0 0.0
        %2330 = vmatprep.subr.mxu0 0.0
        %2331 = vmatpush1.msra.mxu0 0.0
        %2332 = vmatprep.subr.mxu0 0.0
        %2333 = vmatpush1.msra.mxu0 0.0
        %2334 = vmatprep.subr.mxu0 0.0
        %2335 = vmatpush1.msra.mxu0 0.0
        %2336 = vmatprep.subr.mxu0 0.0
        %2337 = vmatpush1.msra.mxu0 0.0
        %2338 = vmatprep.subr.mxu0 0.0
        %2339 = vmatpush1.msra.mxu0 0.0
        %2340 = vmatprep.subr.mxu0 0.0
        %2341 = vmatpush1.msra.mxu0 0.0
        %2342 = vmatprep.subr.mxu0 0.0
        %2343 = vmatpush1.msra.mxu0 0.0
        %2344 = vmatprep.subr.mxu0 0.0
        %2345 = vmatpush1.msra.mxu0 0.0
        %2346 = vmatprep.subr.mxu0 0.0
        %2347 = vmatpush1.msra.mxu0 0.0
        %2348 = vmatprep.subr.mxu0 0.0
        %2349 = vmatpush1.msra.mxu0 0.0
        %2350 = vmatprep.subr.mxu0 0.0
        %2351 = vmatpush1.msra.mxu0 0.0
        %2352 = vmatprep.subr.mxu0 0.0
        %2353 = vmatpush1.msra.mxu0 0.0
        %2354 = vmatprep.subr.mxu0 0.0
        %2355 = vmatpush1.msra.mxu0 0.0
        %2356 = vmatprep.subr.mxu0 0.0
        %2357 = vmatpush1.msra.mxu0 0.0
        %2358 = vmatprep.subr.mxu0 0.0
        %2359 = vmatpush1.msra.mxu0 0.0
        %2360 = vmatprep.subr.mxu0 0.0
        %2361 = vmatpush1.msra.mxu0 0.0
        %2362 = vmatprep.subr.mxu0 0.0
        %2363 = vmatpush1.msra.mxu0 0.0
        %2364 = vmatprep.subr.mxu0 0.0
        %2365 = vmatpush1.msra.mxu0 0.0
        %2366 = vmatprep.subr.mxu0 0.0
        %2367 = vmatpush1.msra.mxu0 0.0
        %2368 = vmatprep.subr.mxu0 0.0
        %2369 = vmatpush1.msra.mxu0 0.0
        %2370 = vmatprep.subr.mxu0 0.0
        %2371 = vmatpush1.msra.mxu0 0.0
        %2372 = vmatprep.subr.mxu0 0.0
        %2373 = vmatpush1.msra.mxu0 0.0
        %2374 = vmatprep.subr.mxu0 0.0
        %2375 = vmatpush1.msra.mxu0 0.0
        %2376 = vmatprep.subr.mxu0 0.0
        %2377 = vmatpush1.msra.mxu0 0.0
        %2378 = vmatprep.mubr.f32.mxu0 0.0
        %v2379 = vand.u32 %v2059, 4294901760
        %v2380 = vsub.f32 %v2059, %v2379
        %v2381 = vand.u32 %v2380, 4294901760
        %2382 = vmatmul.mubr.f32.gmra.mrb[0].mxu0 %v2381
        %v2383 = vpop.f32.mrb[0].mxu0
        %v2384 = vadd.f32 %v2303, %v2383
        %v2385 = vpop.f32.mrb[0].mxu0
        %2386 = vmatprep.mubr.f32.mxu0 0.0
        %v2387 = vand.u32 %v2062, 4294901760
        %v2388 = vsub.f32 %v2062, %v2387
        %v2389 = vand.u32 %v2388, 4294901760
        %2390 = vmatmul.mubr.f32.gmra.mrb[0].mxu0 %v2389
        %v2391 = vpop.f32.mrb[0].mxu0
        %v2392 = vadd.f32 %v2310, %v2391
        %v2393 = vpop.f32.mrb[0].mxu0
        %2394 = vdwg.mxu0
        %2395 = vmatprep.subr.mxu0 0.0
        %v2396 = vand.u32 %v2008, 4294901760
        %v2397 = vsub.f32 %v2008, %v2396
        %v2398 = vand.u32 %v2397, 4294901760
        %2399 = vmatpush1.msra.mxu0 %v2398
        %2400 = vmatprep.subr.mxu0 0.0
        %2401 = vmatpush1.msra.mxu0 0.0
        %2402 = vmatprep.subr.mxu0 0.0
        %2403 = vmatpush1.msra.mxu0 0.0
        %2404 = vmatprep.subr.mxu0 0.0
        %2405 = vmatpush1.msra.mxu0 0.0
        %2406 = vmatprep.subr.mxu0 0.0
        %2407 = vmatpush1.msra.mxu0 0.0
        %2408 = vmatprep.subr.mxu0 0.0
        %2409 = vmatpush1.msra.mxu0 0.0
        %2410 = vmatprep.subr.mxu0 0.0
        %2411 = vmatpush1.msra.mxu0 0.0
        %2412 = vmatprep.subr.mxu0 0.0
        %2413 = vmatpush1.msra.mxu0 0.0
        %2414 = vmatprep.subr.mxu0 0.0
        %2415 = vmatpush1.msra.mxu0 0.0
        %2416 = vmatprep.subr.mxu0 0.0
        %2417 = vmatpush1.msra.mxu0 0.0
        %2418 = vmatprep.subr.mxu0 0.0
        %2419 = vmatpush1.msra.mxu0 0.0
        %2420 = vmatprep.subr.mxu0 0.0
        %2421 = vmatpush1.msra.mxu0 0.0
        %2422 = vmatprep.subr.mxu0 0.0
        %2423 = vmatpush1.msra.mxu0 0.0
        %2424 = vmatprep.subr.mxu0 0.0
        %2425 = vmatpush1.msra.mxu0 0.0
        %2426 = vmatprep.subr.mxu0 0.0
        %2427 = vmatpush1.msra.mxu0 0.0
        %2428 = vmatprep.subr.mxu0 0.0
        %2429 = vmatpush1.msra.mxu0 0.0
        %2430 = vmatprep.subr.mxu0 0.0
        %2431 = vmatpush1.msra.mxu0 0.0
        %2432 = vmatprep.subr.mxu0 0.0
        %2433 = vmatpush1.msra.mxu0 0.0
        %2434 = vmatprep.subr.mxu0 0.0
        %2435 = vmatpush1.msra.mxu0 0.0
        %2436 = vmatprep.subr.mxu0 0.0
        %2437 = vmatpush1.msra.mxu0 0.0
        %2438 = vmatprep.subr.mxu0 0.0
        %2439 = vmatpush1.msra.mxu0 0.0
        %2440 = vmatprep.subr.mxu0 0.0
        %2441 = vmatpush1.msra.mxu0 0.0
        %2442 = vmatprep.subr.mxu0 0.0
        %2443 = vmatpush1.msra.mxu0 0.0
        %2444 = vmatprep.subr.mxu0 0.0
        %2445 = vmatpush1.msra.mxu0 0.0
        %2446 = vmatprep.subr.mxu0 0.0
        %2447 = vmatpush1.msra.mxu0 0.0
        %2448 = vmatprep.subr.mxu0 0.0
        %2449 = vmatpush1.msra.mxu0 0.0
        %2450 = vmatprep.subr.mxu0 0.0
        %2451 = vmatpush1.msra.mxu0 0.0
        %2452 = vmatprep.subr.mxu0 0.0
        %2453 = vmatpush1.msra.mxu0 0.0
        %2454 = vmatprep.subr.mxu0 0.0
        %2455 = vmatpush1.msra.mxu0 0.0
        %2456 = vmatprep.subr.mxu0 0.0
        %2457 = vmatpush1.msra.mxu0 0.0
        %2458 = vmatprep.subr.mxu0 0.0
        %2459 = vmatpush1.msra.mxu0 0.0
        %2460 = vmatprep.subr.mxu0 0.0
        %2461 = vmatpush1.msra.mxu0 0.0
        %2462 = vmatprep.mubr.f32.mxu0 0.0
        %v2463 = vand.u32 %v2059, 4294901760
        %2464 = vmatmul.mubr.f32.gmra.mrb[0].mxu0 %v2463
        %v2465 = vpop.f32.mrb[0].mxu0
        %v2466 = vadd.f32 %v2384, %v2465
        %v2467 = vpop.f32.mrb[0].mxu0
        %2468 = vmatprep.mubr.f32.mxu0 0.0
        %v2469 = vand.u32 %v2062, 4294901760
        %2470 = vmatmul.mubr.f32.gmra.mrb[0].mxu0 %v2469
        %v2471 = vpop.f32.mrb[0].mxu0
        %v2472 = vadd.f32 %v2392, %v2471
        %v2473 = vpop.f32.mrb[0].mxu0
        %2474 = vdwg.mxu0
        %2475 = vmatprep.subr.mxu0 0.0
        %v2476 = vand.u32 %v2008, 4294901760
        %2477 = vmatpush1.msra.mxu0 %v2476
        %2478 = vmatprep.subr.mxu0 0.0
        %2479 = vmatpush1.msra.mxu0 0.0
        %2480 = vmatprep.subr.mxu0 0.0
        %2481 = vmatpush1.msra.mxu0 0.0
        %2482 = vmatprep.subr.mxu0 0.0
        %2483 = vmatpush1.msra.mxu0 0.0
        %2484 = vmatprep.subr.mxu0 0.0
        %2485 = vmatpush1.msra.mxu0 0.0
        %2486 = vmatprep.subr.mxu0 0.0
        %2487 = vmatpush1.msra.mxu0 0.0
        %2488 = vmatprep.subr.mxu0 0.0
        %2489 = vmatpush1.msra.mxu0 0.0
        %2490 = vmatprep.subr.mxu0 0.0
        %2491 = vmatpush1.msra.mxu0 0.0
        %2492 = vmatprep.subr.mxu0 0.0
        %2493 = vmatpush1.msra.mxu0 0.0
        %2494 = vmatprep.subr.mxu0 0.0
        %2495 = vmatpush1.msra.mxu0 0.0
        %2496 = vmatprep.subr.mxu0 0.0
        %2497 = vmatpush1.msra.mxu0 0.0
        %2498 = vmatprep.subr.mxu0 0.0
        %2499 = vmatpush1.msra.mxu0 0.0
        %2500 = vmatprep.subr.mxu0 0.0
        %2501 = vmatpush1.msra.mxu0 0.0
        %2502 = vmatprep.subr.mxu0 0.0
        %2503 = vmatpush1.msra.mxu0 0.0
        %2504 = vmatprep.subr.mxu0 0.0
        %2505 = vmatpush1.msra.mxu0 0.0
        %2506 = vmatprep.subr.mxu0 0.0
        %2507 = vmatpush1.msra.mxu0 0.0
        %2508 = vmatprep.subr.mxu0 0.0
        %2509 = vmatpush1.msra.mxu0 0.0
        %2510 = vmatprep.subr.mxu0 0.0
        %2511 = vmatpush1.msra.mxu0 0.0
        %2512 = vmatprep.subr.mxu0 0.0
        %2513 = vmatpush1.msra.mxu0 0.0
        %2514 = vmatprep.subr.mxu0 0.0
        %2515 = vmatpush1.msra.mxu0 0.0
        %2516 = vmatprep.subr.mxu0 0.0
        %2517 = vmatpush1.msra.mxu0 0.0
        %2518 = vmatprep.subr.mxu0 0.0
        %2519 = vmatpush1.msra.mxu0 0.0
        %2520 = vmatprep.subr.mxu0 0.0
        %2521 = vmatpush1.msra.mxu0 0.0
        %2522 = vmatprep.subr.mxu0 0.0
        %2523 = vmatpush1.msra.mxu0 0.0
        %2524 = vmatprep.subr.mxu0 0.0
        %2525 = vmatpush1.msra.mxu0 0.0
        %2526 = vmatprep.subr.mxu0 0.0
        %2527 = vmatpush1.msra.mxu0 0.0
        %2528 = vmatprep.subr.mxu0 0.0
        %2529 = vmatpush1.msra.mxu0 0.0
        %2530 = vmatprep.subr.mxu0 0.0
        %2531 = vmatpush1.msra.mxu0 0.0
        %2532 = vmatprep.subr.mxu0 0.0
        %2533 = vmatpush1.msra.mxu0 0.0
        %2534 = vmatprep.subr.mxu0 0.0
        %2535 = vmatpush1.msra.mxu0 0.0
        %2536 = vmatprep.subr.mxu0 0.0
        %2537 = vmatpush1.msra.mxu0 0.0
        %2538 = vmatprep.subr.mxu0 0.0
        %2539 = vmatpush1.msra.mxu0 0.0
        %2540 = vmatprep.mubr.f32.mxu0 0.0
        %v2541 = vand.u32 %v2059, 4294901760
        %2542 = vmatmul.mubr.f32.gmra.mrb[0].mxu0 %v2541
        %v2543 = vpop.f32.mrb[0].mxu0
        %v2544 = vadd.f32 %v2466, %v2543
        %v2545 = vpop.f32.mrb[0].mxu0
        %2546 = vmatprep.mubr.f32.mxu0 0.0
        %v2547 = vand.u32 %v2062, 4294901760
        %2548 = vmatmul.mubr.f32.gmra.mrb[0].mxu0 %v2547
        %v2549 = vpop.f32.mrb[0].mxu0
        %v2550 = vadd.f32 %v2472, %v2549
        %v2551 = vpop.f32.mrb[0].mxu0
        %2552 = vdwg.mxu0
        %v2553 = vadd.f32 %v2023, %v2544
        %v2554 = vadd.f32 %v2024, %v2550
        %2555 = vst.msk [vmem:[#allocation2] sm:$0xff] %vm1995, %v2553
        %2556 = vst.msk [vmem:[#allocation2 + $0x8] sm:$0xff] %vm1995, %v2554
        %v2557 = vld [vmem:[#allocation3] sm:$0xff]
        %v2558 = vld [vmem:[#allocation3 + $0x8] sm:$0xff]
        %2559 = vxpose.xlu0.b32.start [1/16] %v2022, 128
        %2560 = vxpose.xlu0.b32.cont [2/16] 0.0, 128
        %2561 = vxpose.xlu0.b32.cont [3/16] 0.0, 128
        %2562 = vxpose.xlu0.b32.cont [4/16] 0.0, 128
        %2563 = vxpose.xlu0.b32.cont [5/16] 0.0, 128
        %2564 = vxpose.xlu0.b32.cont [6/16] 0.0, 128
        %2565 = vxpose.xlu0.b32.cont [7/16] 0.0, 128
        %2566 = vxpose.xlu0.b32.cont [8/16] 0.0, 128
        %2567 = vxpose.xlu0.b32.cont [9/16] 0.0, 128
        %2568 = vxpose.xlu0.b32.cont [10/16] 0.0, 128
        %2569 = vxpose.xlu0.b32.cont [11/16] 0.0, 128
        %2570 = vxpose.xlu0.b32.cont [12/16] 0.0, 128
        %2571 = vxpose.xlu0.b32.cont [13/16] 0.0, 128
        %2572 = vxpose.xlu0.b32.cont [14/16] 0.0, 128
        %2573 = vxpose.xlu0.b32.cont [15/16] 0.0, 128
        %2574 = vxpose.xlu0.b32.end [16/16] 0.0, 128
        %v2575 = vpop.trf.xlu0
        %v2576 = vpop.trf.xlu0
        %v2577 = vpop.trf.xlu0
        %v2578 = vpop.trf.xlu0
        %v2579 = vpop.trf.xlu0
        %v2580 = vpop.trf.xlu0
        %v2581 = vpop.trf.xlu0
        %v2582 = vpop.trf.xlu0
        %v2583 = vpop.trf.xlu0
        %v2584 = vpop.trf.xlu0
        %v2585 = vpop.trf.xlu0
        %v2586 = vpop.trf.xlu0
        %v2587 = vpop.trf.xlu0
        %v2588 = vpop.trf.xlu0
        %v2589 = vpop.trf.xlu0
        %v2590 = vpop.trf.xlu0
        %v2592 = vsel %vm2057, %v2575, 0
        %v2595 = vsel %vm2057, %v2576, 0
        %2597 = vmatprep.subr.mxu0 0.0
        %v2598 = vand.u32 %v2022, 4294901760
        %2599 = vmatpush1.msra.mxu0 %v2598
        %2600 = vmatprep.subr.mxu0 0.0
        %2601 = vmatpush1.msra.mxu0 0.0
        %2602 = vmatprep.subr.mxu0 0.0
        %2603 = vmatpush1.msra.mxu0 0.0
        %2604 = vmatprep.subr.mxu0 0.0
        %2605 = vmatpush1.msra.mxu0 0.0
        %2606 = vmatprep.subr.mxu0 0.0
        %2607 = vmatpush1.msra.mxu0 0.0
        %2608 = vmatprep.subr.mxu0 0.0
        %2609 = vmatpush1.msra.mxu0 0.0
        %2610 = vmatprep.subr.mxu0 0.0
        %2611 = vmatpush1.msra.mxu0 0.0
        %2612 = vmatprep.subr.mxu0 0.0
        %2613 = vmatpush1.msra.mxu0 0.0
        %2614 = vmatprep.subr.mxu0 0.0
        %2615 = vmatpush1.msra.mxu0 0.0
        %2616 = vmatprep.subr.mxu0 0.0
        %2617 = vmatpush1.msra.mxu0 0.0
        %2618 = vmatprep.subr.mxu0 0.0
        %2619 = vmatpush1.msra.mxu0 0.0
        %2620 = vmatprep.subr.mxu0 0.0
        %2621 = vmatpush1.msra.mxu0 0.0
        %2622 = vmatprep.subr.mxu0 0.0
        %2623 = vmatpush1.msra.mxu0 0.0
        %2624 = vmatprep.subr.mxu0 0.0
        %2625 = vmatpush1.msra.mxu0 0.0
        %2626 = vmatprep.subr.mxu0 0.0
        %2627 = vmatpush1.msra.mxu0 0.0
        %2628 = vmatprep.subr.mxu0 0.0
        %2629 = vmatpush1.msra.mxu0 0.0
        %2630 = vmatprep.subr.mxu0 0.0
        %2631 = vmatpush1.msra.mxu0 0.0
        %2632 = vmatprep.subr.mxu0 0.0
        %2633 = vmatpush1.msra.mxu0 0.0
        %2634 = vmatprep.subr.mxu0 0.0
        %2635 = vmatpush1.msra.mxu0 0.0
        %2636 = vmatprep.subr.mxu0 0.0
        %2637 = vmatpush1.msra.mxu0 0.0
        %2638 = vmatprep.subr.mxu0 0.0
        %2639 = vmatpush1.msra.mxu0 0.0
        %2640 = vmatprep.subr.mxu0 0.0
        %2641 = vmatpush1.msra.mxu0 0.0
        %2642 = vmatprep.subr.mxu0 0.0
        %2643 = vmatpush1.msra.mxu0 0.0
        %2644 = vmatprep.subr.mxu0 0.0
        %2645 = vmatpush1.msra.mxu0 0.0
        %2646 = vmatprep.subr.mxu0 0.0
        %2647 = vmatpush1.msra.mxu0 0.0
        %2648 = vmatprep.subr.mxu0 0.0
        %2649 = vmatpush1.msra.mxu0 0.0
        %2650 = vmatprep.subr.mxu0 0.0
        %2651 = vmatpush1.msra.mxu0 0.0
        %2652 = vmatprep.subr.mxu0 0.0
        %2653 = vmatpush1.msra.mxu0 0.0
        %2654 = vmatprep.subr.mxu0 0.0
        %2655 = vmatpush1.msra.mxu0 0.0
        %2656 = vmatprep.subr.mxu0 0.0
        %2657 = vmatpush1.msra.mxu0 0.0
        %2658 = vmatprep.subr.mxu0 0.0
        %2659 = vmatpush1.msra.mxu0 0.0
        %2660 = vmatprep.subr.mxu0 0.0
        %2661 = vmatpush1.msra.mxu0 0.0
        %2662 = vmatprep.mubr.f32.mxu0 0.0
        %v2663 = vand.u32 %v2592, 4294901760
        %v2664 = vsub.f32 %v2592, %v2663
        %v2665 = vand.u32 %v2664, 4294901760
        %v2666 = vsub.f32 %v2664, %v2665
        %v2667 = vand.u32 %v2666, 4294901760
        %2668 = vmatmul.mubr.f32.gmra.mrb[0].mxu0 %v2667
        %v2669 = vpop.f32.mrb[0].mxu0
        %v2670 = vadd.f32 0.0, %v2669
        %v2671 = vpop.f32.mrb[0].mxu0
        %2672 = vmatprep.mubr.f32.mxu0 0.0
        %v2673 = vand.u32 %v2595, 4294901760
        %v2674 = vsub.f32 %v2595, %v2673
        %v2675 = vand.u32 %v2674, 4294901760
        %v2676 = vsub.f32 %v2674, %v2675
        %v2677 = vand.u32 %v2676, 4294901760
        %2678 = vmatmul.mubr.f32.gmra.mrb[0].mxu0 %v2677
        %v2679 = vpop.f32.mrb[0].mxu0
        %v2680 = vadd.f32 0.0, %v2679
        %v2681 = vpop.f32.mrb[0].mxu0
        %2682 = vdwg.mxu0
        %2683 = vmatprep.subr.mxu0 0.0
        %v2684 = vand.u32 %v2022, 4294901760
        %v2685 = vsub.f32 %v2022, %v2684
        %v2686 = vand.u32 %v2685, 4294901760
        %v2687 = vsub.f32 %v2685, %v2686
        %v2688 = vand.u32 %v2687, 4294901760
        %2689 = vmatpush1.msra.mxu0 %v2688
        %2690 = vmatprep.subr.mxu0 0.0
        %2691 = vmatpush1.msra.mxu0 0.0
        %2692 = vmatprep.subr.mxu0 0.0
        %2693 = vmatpush1.msra.mxu0 0.0
        %2694 = vmatprep.subr.mxu0 0.0
        %2695 = vmatpush1.msra.mxu0 0.0
        %2696 = vmatprep.subr.mxu0 0.0
        %2697 = vmatpush1.msra.mxu0 0.0
        %2698 = vmatprep.subr.mxu0 0.0
        %2699 = vmatpush1.msra.mxu0 0.0
        %2700 = vmatprep.subr.mxu0 0.0
        %2701 = vmatpush1.msra.mxu0 0.0
        %2702 = vmatprep.subr.mxu0 0.0
        %2703 = vmatpush1.msra.mxu0 0.0
        %2704 = vmatprep.subr.mxu0 0.0
        %2705 = vmatpush1.msra.mxu0 0.0
        %2706 = vmatprep.subr.mxu0 0.0
        %2707 = vmatpush1.msra.mxu0 0.0
        %2708 = vmatprep.subr.mxu0 0.0
        %2709 = vmatpush1.msra.mxu0 0.0
        %2710 = vmatprep.subr.mxu0 0.0
        %2711 = vmatpush1.msra.mxu0 0.0
        %2712 = vmatprep.subr.mxu0 0.0
        %2713 = vmatpush1.msra.mxu0 0.0
        %2714 = vmatprep.subr.mxu0 0.0
        %2715 = vmatpush1.msra.mxu0 0.0
        %2716 = vmatprep.subr.mxu0 0.0
        %2717 = vmatpush1.msra.mxu0 0.0
        %2718 = vmatprep.subr.mxu0 0.0
        %2719 = vmatpush1.msra.mxu0 0.0
        %2720 = vmatprep.subr.mxu0 0.0
        %2721 = vmatpush1.msra.mxu0 0.0
        %2722 = vmatprep.subr.mxu0 0.0
        %2723 = vmatpush1.msra.mxu0 0.0
        %2724 = vmatprep.subr.mxu0 0.0
        %2725 = vmatpush1.msra.mxu0 0.0
        %2726 = vmatprep.subr.mxu0 0.0
        %2727 = vmatpush1.msra.mxu0 0.0
        %2728 = vmatprep.subr.mxu0 0.0
        %2729 = vmatpush1.msra.mxu0 0.0
        %2730 = vmatprep.subr.mxu0 0.0
        %2731 = vmatpush1.msra.mxu0 0.0
        %2732 = vmatprep.subr.mxu0 0.0
        %2733 = vmatpush1.msra.mxu0 0.0
        %2734 = vmatprep.subr.mxu0 0.0
        %2735 = vmatpush1.msra.mxu0 0.0
        %2736 = vmatprep.subr.mxu0 0.0
        %2737 = vmatpush1.msra.mxu0 0.0
        %2738 = vmatprep.subr.mxu0 0.0
        %2739 = vmatpush1.msra.mxu0 0.0
        %2740 = vmatprep.subr.mxu0 0.0
        %2741 = vmatpush1.msra.mxu0 0.0
        %2742 = vmatprep.subr.mxu0 0.0
        %2743 = vmatpush1.msra.mxu0 0.0
        %2744 = vmatprep.subr.mxu0 0.0
        %2745 = vmatpush1.msra.mxu0 0.0
        %2746 = vmatprep.subr.mxu0 0.0
        %2747 = vmatpush1.msra.mxu0 0.0
        %2748 = vmatprep.subr.mxu0 0.0
        %2749 = vmatpush1.msra.mxu0 0.0
        %2750 = vmatprep.subr.mxu0 0.0
        %2751 = vmatpush1.msra.mxu0 0.0
        %2752 = vmatprep.mubr.f32.mxu0 0.0
        %v2753 = vand.u32 %v2592, 4294901760
        %2754 = vmatmul.mubr.f32.gmra.mrb[0].mxu0 %v2753
        %v2755 = vpop.f32.mrb[0].mxu0
        %v2756 = vadd.f32 %v2670, %v2755
        %v2757 = vpop.f32.mrb[0].mxu0
        %2758 = vmatprep.mubr.f32.mxu0 0.0
        %v2759 = vand.u32 %v2595, 4294901760
        %2760 = vmatmul.mubr.f32.gmra.mrb[0].mxu0 %v2759
        %v2761 = vpop.f32.mrb[0].mxu0
        %v2762 = vadd.f32 %v2680, %v2761
        %v2763 = vpop.f32.mrb[0].mxu0
        %2764 = vdwg.mxu0
        %2765 = vmatprep.subr.mxu0 0.0
        %v2766 = vand.u32 %v2022, 4294901760
        %v2767 = vsub.f32 %v2022, %v2766
        %2768 = vmatpush1.msra.mxu0 %v2767
        %2769 = vmatprep.subr.mxu0 0.0
        %2770 = vmatpush1.msra.mxu0 0.0
        %2771 = vmatprep.subr.mxu0 0.0
        %2772 = vmatpush1.msra.mxu0 0.0
        %2773 = vmatprep.subr.mxu0 0.0
        %2774 = vmatpush1.msra.mxu0 0.0
        %2775 = vmatprep.subr.mxu0 0.0
        %2776 = vmatpush1.msra.mxu0 0.0
        %2777 = vmatprep.subr.mxu0 0.0
        %2778 = vmatpush1.msra.mxu0 0.0
        %2779 = vmatprep.subr.mxu0 0.0
        %2780 = vmatpush1.msra.mxu0 0.0
        %2781 = vmatprep.subr.mxu0 0.0
        %2782 = vmatpush1.msra.mxu0 0.0
        %2783 = vmatprep.subr.mxu0 0.0
        %2784 = vmatpush1.msra.mxu0 0.0
        %2785 = vmatprep.subr.mxu0 0.0
        %2786 = vmatpush1.msra.mxu0 0.0
        %2787 = vmatprep.subr.mxu0 0.0
        %2788 = vmatpush1.msra.mxu0 0.0
        %2789 = vmatprep.subr.mxu0 0.0
        %2790 = vmatpush1.msra.mxu0 0.0
        %2791 = vmatprep.subr.mxu0 0.0
        %2792 = vmatpush1.msra.mxu0 0.0
        %2793 = vmatprep.subr.mxu0 0.0
        %2794 = vmatpush1.msra.mxu0 0.0
        %2795 = vmatprep.subr.mxu0 0.0
        %2796 = vmatpush1.msra.mxu0 0.0
        %2797 = vmatprep.subr.mxu0 0.0
        %2798 = vmatpush1.msra.mxu0 0.0
        %2799 = vmatprep.subr.mxu0 0.0
        %2800 = vmatpush1.msra.mxu0 0.0
        %2801 = vmatprep.subr.mxu0 0.0
        %2802 = vmatpush1.msra.mxu0 0.0
        %2803 = vmatprep.subr.mxu0 0.0
        %2804 = vmatpush1.msra.mxu0 0.0
        %2805 = vmatprep.subr.mxu0 0.0
        %2806 = vmatpush1.msra.mxu0 0.0
        %2807 = vmatprep.subr.mxu0 0.0
        %2808 = vmatpush1.msra.mxu0 0.0
        %2809 = vmatprep.subr.mxu0 0.0
        %2810 = vmatpush1.msra.mxu0 0.0
        %2811 = vmatprep.subr.mxu0 0.0
        %2812 = vmatpush1.msra.mxu0 0.0
        %2813 = vmatprep.subr.mxu0 0.0
        %2814 = vmatpush1.msra.mxu0 0.0
        %2815 = vmatprep.subr.mxu0 0.0
        %2816 = vmatpush1.msra.mxu0 0.0
        %2817 = vmatprep.subr.mxu0 0.0
        %2818 = vmatpush1.msra.mxu0 0.0
        %2819 = vmatprep.subr.mxu0 0.0
        %2820 = vmatpush1.msra.mxu0 0.0
        %2821 = vmatprep.subr.mxu0 0.0
        %2822 = vmatpush1.msra.mxu0 0.0
        %2823 = vmatprep.subr.mxu0 0.0
        %2824 = vmatpush1.msra.mxu0 0.0
        %2825 = vmatprep.subr.mxu0 0.0
        %2826 = vmatpush1.msra.mxu0 0.0
        %2827 = vmatprep.subr.mxu0 0.0
        %2828 = vmatpush1.msra.mxu0 0.0
        %2829 = vmatprep.subr.mxu0 0.0
        %2830 = vmatpush1.msra.mxu0 0.0
        %2831 = vmatprep.mubr.f32.mxu0 0.0
        %v2832 = vand.u32 %v2592, 4294901760
        %v2833 = vsub.f32 %v2592, %v2832
        %2834 = vmatmul.mubr.f32.gmra.mrb[0].mxu0 %v2833
        %v2835 = vpop.f32.mrb[0].mxu0
        %v2836 = vadd.f32 %v2756, %v2835
        %v2837 = vpop.f32.mrb[0].mxu0
        %2838 = vmatprep.mubr.f32.mxu0 0.0
        %v2839 = vand.u32 %v2595, 4294901760
        %v2840 = vsub.f32 %v2595, %v2839
        %2841 = vmatmul.mubr.f32.gmra.mrb[0].mxu0 %v2840
        %v2842 = vpop.f32.mrb[0].mxu0
        %v2843 = vadd.f32 %v2762, %v2842
        %v2844 = vpop.f32.mrb[0].mxu0
        %2845 = vdwg.mxu0
        %2846 = vmatprep.subr.mxu0 0.0
        %v2847 = vand.u32 %v2022, 4294901760
        %2848 = vmatpush1.msra.mxu0 %v2847
        %2849 = vmatprep.subr.mxu0 0.0
        %2850 = vmatpush1.msra.mxu0 0.0
        %2851 = vmatprep.subr.mxu0 0.0
        %2852 = vmatpush1.msra.mxu0 0.0
        %2853 = vmatprep.subr.mxu0 0.0
        %2854 = vmatpush1.msra.mxu0 0.0
        %2855 = vmatprep.subr.mxu0 0.0
        %2856 = vmatpush1.msra.mxu0 0.0
        %2857 = vmatprep.subr.mxu0 0.0
        %2858 = vmatpush1.msra.mxu0 0.0
        %2859 = vmatprep.subr.mxu0 0.0
        %2860 = vmatpush1.msra.mxu0 0.0
        %2861 = vmatprep.subr.mxu0 0.0
        %2862 = vmatpush1.msra.mxu0 0.0
        %2863 = vmatprep.subr.mxu0 0.0
        %2864 = vmatpush1.msra.mxu0 0.0
        %2865 = vmatprep.subr.mxu0 0.0
        %2866 = vmatpush1.msra.mxu0 0.0
        %2867 = vmatprep.subr.mxu0 0.0
        %2868 = vmatpush1.msra.mxu0 0.0
        %2869 = vmatprep.subr.mxu0 0.0
        %2870 = vmatpush1.msra.mxu0 0.0
        %2871 = vmatprep.subr.mxu0 0.0
        %2872 = vmatpush1.msra.mxu0 0.0
        %2873 = vmatprep.subr.mxu0 0.0
        %2874 = vmatpush1.msra.mxu0 0.0
        %2875 = vmatprep.subr.mxu0 0.0
        %2876 = vmatpush1.msra.mxu0 0.0
        %2877 = vmatprep.subr.mxu0 0.0
        %2878 = vmatpush1.msra.mxu0 0.0
        %2879 = vmatprep.subr.mxu0 0.0
        %2880 = vmatpush1.msra.mxu0 0.0
        %2881 = vmatprep.subr.mxu0 0.0
        %2882 = vmatpush1.msra.mxu0 0.0
        %2883 = vmatprep.subr.mxu0 0.0
        %2884 = vmatpush1.msra.mxu0 0.0
        %2885 = vmatprep.subr.mxu0 0.0
        %2886 = vmatpush1.msra.mxu0 0.0
        %2887 = vmatprep.subr.mxu0 0.0
        %2888 = vmatpush1.msra.mxu0 0.0
        %2889 = vmatprep.subr.mxu0 0.0
        %2890 = vmatpush1.msra.mxu0 0.0
        %2891 = vmatprep.subr.mxu0 0.0
        %2892 = vmatpush1.msra.mxu0 0.0
        %2893 = vmatprep.subr.mxu0 0.0
        %2894 = vmatpush1.msra.mxu0 0.0
        %2895 = vmatprep.subr.mxu0 0.0
        %2896 = vmatpush1.msra.mxu0 0.0
        %2897 = vmatprep.subr.mxu0 0.0
        %2898 = vmatpush1.msra.mxu0 0.0
        %2899 = vmatprep.subr.mxu0 0.0
        %2900 = vmatpush1.msra.mxu0 0.0
        %2901 = vmatprep.subr.mxu0 0.0
        %2902 = vmatpush1.msra.mxu0 0.0
        %2903 = vmatprep.subr.mxu0 0.0
        %2904 = vmatpush1.msra.mxu0 0.0
        %2905 = vmatprep.subr.mxu0 0.0
        %2906 = vmatpush1.msra.mxu0 0.0
        %2907 = vmatprep.subr.mxu0 0.0
        %2908 = vmatpush1.msra.mxu0 0.0
        %2909 = vmatprep.subr.mxu0 0.0
        %2910 = vmatpush1.msra.mxu0 0.0
        %2911 = vmatprep.mubr.f32.mxu0 0.0
        %v2912 = vand.u32 %v2592, 4294901760
        %v2913 = vsub.f32 %v2592, %v2912
        %v2914 = vand.u32 %v2913, 4294901760
        %2915 = vmatmul.mubr.f32.gmra.mrb[0].mxu0 %v2914
        %v2916 = vpop.f32.mrb[0].mxu0
        %v2917 = vadd.f32 %v2836, %v2916
        %v2918 = vpop.f32.mrb[0].mxu0
        %2919 = vmatprep.mubr.f32.mxu0 0.0
        %v2920 = vand.u32 %v2595, 4294901760
        %v2921 = vsub.f32 %v2595, %v2920
        %v2922 = vand.u32 %v2921, 4294901760
        %2923 = vmatmul.mubr.f32.gmra.mrb[0].mxu0 %v2922
        %v2924 = vpop.f32.mrb[0].mxu0
        %v2925 = vadd.f32 %v2843, %v2924
        %v2926 = vpop.f32.mrb[0].mxu0
        %2927 = vdwg.mxu0
        %2928 = vmatprep.subr.mxu0 0.0
        %v2929 = vand.u32 %v2022, 4294901760
        %v2930 = vsub.f32 %v2022, %v2929
        %v2931 = vand.u32 %v2930, 4294901760
        %2932 = vmatpush1.msra.mxu0 %v2931
        %2933 = vmatprep.subr.mxu0 0.0
        %2934 = vmatpush1.msra.mxu0 0.0
        %2935 = vmatprep.subr.mxu0 0.0
        %2936 = vmatpush1.msra.mxu0 0.0
        %2937 = vmatprep.subr.mxu0 0.0
        %2938 = vmatpush1.msra.mxu0 0.0
        %2939 = vmatprep.subr.mxu0 0.0
        %2940 = vmatpush1.msra.mxu0 0.0
        %2941 = vmatprep.subr.mxu0 0.0
        %2942 = vmatpush1.msra.mxu0 0.0
        %2943 = vmatprep.subr.mxu0 0.0
        %2944 = vmatpush1.msra.mxu0 0.0
        %2945 = vmatprep.subr.mxu0 0.0
        %2946 = vmatpush1.msra.mxu0 0.0
        %2947 = vmatprep.subr.mxu0 0.0
        %2948 = vmatpush1.msra.mxu0 0.0
        %2949 = vmatprep.subr.mxu0 0.0
        %2950 = vmatpush1.msra.mxu0 0.0
        %2951 = vmatprep.subr.mxu0 0.0
        %2952 = vmatpush1.msra.mxu0 0.0
        %2953 = vmatprep.subr.mxu0 0.0
        %2954 = vmatpush1.msra.mxu0 0.0
        %2955 = vmatprep.subr.mxu0 0.0
        %2956 = vmatpush1.msra.mxu0 0.0
        %2957 = vmatprep.subr.mxu0 0.0
        %2958 = vmatpush1.msra.mxu0 0.0
        %2959 = vmatprep.subr.mxu0 0.0
        %2960 = vmatpush1.msra.mxu0 0.0
        %2961 = vmatprep.subr.mxu0 0.0
        %2962 = vmatpush1.msra.mxu0 0.0
        %2963 = vmatprep.subr.mxu0 0.0
        %2964 = vmatpush1.msra.mxu0 0.0
        %2965 = vmatprep.subr.mxu0 0.0
        %2966 = vmatpush1.msra.mxu0 0.0
        %2967 = vmatprep.subr.mxu0 0.0
        %2968 = vmatpush1.msra.mxu0 0.0
        %2969 = vmatprep.subr.mxu0 0.0
        %2970 = vmatpush1.msra.mxu0 0.0
        %2971 = vmatprep.subr.mxu0 0.0
        %2972 = vmatpush1.msra.mxu0 0.0
        %2973 = vmatprep.subr.mxu0 0.0
        %2974 = vmatpush1.msra.mxu0 0.0
        %2975 = vmatprep.subr.mxu0 0.0
        %2976 = vmatpush1.msra.mxu0 0.0
        %2977 = vmatprep.subr.mxu0 0.0
        %2978 = vmatpush1.msra.mxu0 0.0
        %2979 = vmatprep.subr.mxu0 0.0
        %2980 = vmatpush1.msra.mxu0 0.0
        %2981 = vmatprep.subr.mxu0 0.0
        %2982 = vmatpush1.msra.mxu0 0.0
        %2983 = vmatprep.subr.mxu0 0.0
        %2984 = vmatpush1.msra.mxu0 0.0
        %2985 = vmatprep.subr.mxu0 0.0
        %2986 = vmatpush1.msra.mxu0 0.0
        %2987 = vmatprep.subr.mxu0 0.0
        %2988 = vmatpush1.msra.mxu0 0.0
        %2989 = vmatprep.subr.mxu0 0.0
        %2990 = vmatpush1.msra.mxu0 0.0
        %2991 = vmatprep.subr.mxu0 0.0
        %2992 = vmatpush1.msra.mxu0 0.0
        %2993 = vmatprep.subr.mxu0 0.0
        %2994 = vmatpush1.msra.mxu0 0.0
        %2995 = vmatprep.mubr.f32.mxu0 0.0
        %v2996 = vand.u32 %v2592, 4294901760
        %2997 = vmatmul.mubr.f32.gmra.mrb[0].mxu0 %v2996
        %v2998 = vpop.f32.mrb[0].mxu0
        %v2999 = vadd.f32 %v2917, %v2998
        %v3000 = vpop.f32.mrb[0].mxu0
        %3001 = vmatprep.mubr.f32.mxu0 0.0
        %v3002 = vand.u32 %v2595, 4294901760
        %3003 = vmatmul.mubr.f32.gmra.mrb[0].mxu0 %v3002
        %v3004 = vpop.f32.mrb[0].mxu0
        %v3005 = vadd.f32 %v2925, %v3004
        %v3006 = vpop.f32.mrb[0].mxu0
        %3007 = vdwg.mxu0
        %3008 = vmatprep.subr.mxu0 0.0
        %v3009 = vand.u32 %v2022, 4294901760
        %3010 = vmatpush1.msra.mxu0 %v3009
        %3011 = vmatprep.subr.mxu0 0.0
        %3012 = vmatpush1.msra.mxu0 0.0
        %3013 = vmatprep.subr.mxu0 0.0
        %3014 = vmatpush1.msra.mxu0 0.0
        %3015 = vmatprep.subr.mxu0 0.0
        %3016 = vmatpush1.msra.mxu0 0.0
        %3017 = vmatprep.subr.mxu0 0.0
        %3018 = vmatpush1.msra.mxu0 0.0
        %3019 = vmatprep.subr.mxu0 0.0
        %3020 = vmatpush1.msra.mxu0 0.0
        %3021 = vmatprep.subr.mxu0 0.0
        %3022 = vmatpush1.msra.mxu0 0.0
        %3023 = vmatprep.subr.mxu0 0.0
        %3024 = vmatpush1.msra.mxu0 0.0
        %3025 = vmatprep.subr.mxu0 0.0
        %3026 = vmatpush1.msra.mxu0 0.0
        %3027 = vmatprep.subr.mxu0 0.0
        %3028 = vmatpush1.msra.mxu0 0.0
        %3029 = vmatprep.subr.mxu0 0.0
        %3030 = vmatpush1.msra.mxu0 0.0
        %3031 = vmatprep.subr.mxu0 0.0
        %3032 = vmatpush1.msra.mxu0 0.0
        %3033 = vmatprep.subr.mxu0 0.0
        %3034 = vmatpush1.msra.mxu0 0.0
        %3035 = vmatprep.subr.mxu0 0.0
        %3036 = vmatpush1.msra.mxu0 0.0
        %3037 = vmatprep.subr.mxu0 0.0
        %3038 = vmatpush1.msra.mxu0 0.0
        %3039 = vmatprep.subr.mxu0 0.0
        %3040 = vmatpush1.msra.mxu0 0.0
        %3041 = vmatprep.subr.mxu0 0.0
        %3042 = vmatpush1.msra.mxu0 0.0
        %3043 = vmatprep.subr.mxu0 0.0
        %3044 = vmatpush1.msra.mxu0 0.0
        %3045 = vmatprep.subr.mxu0 0.0
        %3046 = vmatpush1.msra.mxu0 0.0
        %3047 = vmatprep.subr.mxu0 0.0
        %3048 = vmatpush1.msra.mxu0 0.0
        %3049 = vmatprep.subr.mxu0 0.0
        %3050 = vmatpush1.msra.mxu0 0.0
        %3051 = vmatprep.subr.mxu0 0.0
        %3052 = vmatpush1.msra.mxu0 0.0
        %3053 = vmatprep.subr.mxu0 0.0
        %3054 = vmatpush1.msra.mxu0 0.0
        %3055 = vmatprep.subr.mxu0 0.0
        %3056 = vmatpush1.msra.mxu0 0.0
        %3057 = vmatprep.subr.mxu0 0.0
        %3058 = vmatpush1.msra.mxu0 0.0
        %3059 = vmatprep.subr.mxu0 0.0
        %3060 = vmatpush1.msra.mxu0 0.0
        %3061 = vmatprep.subr.mxu0 0.0
        %3062 = vmatpush1.msra.mxu0 0.0
        %3063 = vmatprep.subr.mxu0 0.0
        %3064 = vmatpush1.msra.mxu0 0.0
        %3065 = vmatprep.subr.mxu0 0.0
        %3066 = vmatpush1.msra.mxu0 0.0
        %3067 = vmatprep.subr.mxu0 0.0
        %3068 = vmatpush1.msra.mxu0 0.0
        %3069 = vmatprep.subr.mxu0 0.0
        %3070 = vmatpush1.msra.mxu0 0.0
        %3071 = vmatprep.subr.mxu0 0.0
        %3072 = vmatpush1.msra.mxu0 0.0
        %3073 = vmatprep.mubr.f32.mxu0 0.0
        %v3074 = vand.u32 %v2592, 4294901760
        %3075 = vmatmul.mubr.f32.gmra.mrb[0].mxu0 %v3074
        %v3076 = vpop.f32.mrb[0].mxu0
        %v3077 = vadd.f32 %v2999, %v3076
        %v3078 = vpop.f32.mrb[0].mxu0
        %3079 = vmatprep.mubr.f32.mxu0 0.0
        %v3080 = vand.u32 %v2595, 4294901760
        %3081 = vmatmul.mubr.f32.gmra.mrb[0].mxu0 %v3080
        %v3082 = vpop.f32.mrb[0].mxu0
        %v3083 = vadd.f32 %v3005, %v3082
        %v3084 = vpop.f32.mrb[0].mxu0
        %3085 = vdwg.mxu0
        %v3086 = vadd.f32 %v2557, %v3077
        %v3087 = vadd.f32 %v2558, %v3083
        %3088 = vst.msk [vmem:[#allocation3] sm:$0xff] %vm1995, %v3086
        %3089 = vst.msk [vmem:[#allocation3 + $0x8] sm:$0xff] %vm1995, %v3087
        // Predicated region
        $region37: #{tpu_custom_call.1} parent=31 // pred_check
          %p3090 = pneg %p195
        $region38: #{tpu_custom_call.1} parent=31 // pred_check_branch
          %3092 = sbr.rel (%p3090) target = $region40
        $region39: #{tpu_custom_call.1} parent=31 // pred_region
          %v3093 = vld [vmem:[#allocation2] sm:$0xff]
          %v3094 = vld [vmem:[#allocation2 + $0x8] sm:$0xff]
          %3095 = vst.msk [vmem:[%s185] sm:$0xff] %vm1995, %v3093
          %3096 = vst.msk [vmem:[%s185 + $0x8] sm:$0xff] %vm1995, %v3094
          %v3097 = vld [vmem:[#allocation3] sm:$0xff]
          %v3098 = vld [vmem:[#allocation3 + $0x8] sm:$0xff]
          %s3099 = scalar_lea.vmem %s185, 16 [#allocation4]
          %3100 = vst.msk [vmem:[%s3099] sm:$0xff] %vm1995, %v3097
          %3101 = vst.msk [vmem:[%s3099 + $0x8] sm:$0xff] %vm1995, %v3098
        $region40: #{tpu_custom_call.1} parent=31 // pred_fallthru
          _
        %s3102 = sand.u32 %s107, 1
        %s3103 = scalar_lea.sflag [#allocation5], %s3102
        %s3104 = sand.u32 %s107, 1
        %s3105 = smul.addr %s3104, 32
        %s3106 = scalar_lea.vmem [#allocation4], %s3105
        // Predicated region
        $region41: #{tpu_custom_call.1} parent=31 // pred_check
          %p3107 = pneg %p117
        $region42: #{tpu_custom_call.1} parent=31 // pred_check_branch
          %3109 = sbr.rel (%p3107) target = $region44
        $region43: #{tpu_custom_call.1} parent=31 // pred_region
          %s3111 = ssub.s32 512, 512
          %3112 = vsyncadd %s3103, %s3111
          %s3113 = smul.addr %s21, 4
          %s3114 = smul.addr %s3113, 128
          %s3115 = scalar_lea.hbm %s3, %s3114
          %s3116 = sshll.u32 %s3106, 4
          %s3117 = int_to_ptr.vmem [resolvable:$true] %s3116
          %3122 = dma.vmem_to_hbm [thread:$0]  %s3117, 512, %s3115, %s3103, 128, 128, 8
        $region44: #{tpu_custom_call.1} parent=31 // pred_fallthru
          _
      $region32: #{tpu_custom_call.1} parent=5 // pred_fallthru
        _
      %p3123 = scmp.le.s32.totalorder 2, %s12
      // Predicated region
      $region45: #{tpu_custom_call.1} parent=5 // pred_check
        %p3124 = pneg %p3123
      $region46: #{tpu_custom_call.1} parent=5 // pred_check_branch
        %3126 = sbr.rel (%p3124) target = $region48
      $region47: #{tpu_custom_call.1} parent=5 // pred_region
        %s3127 = ssub.s32 %s12, 2
        // Predicated region
        $region49: #{tpu_custom_call.1} parent=47 // pred_check
          %p3128 = pneg %p123
        $region50: #{tpu_custom_call.1} parent=47 // pred_check_branch
          %3130 = sbr.rel (%p3128) target = $region52
        $region51: #{tpu_custom_call.1} parent=47 // pred_region
          %s3131 = sand.u32 %s108, 1
          %s3132 = scalar_lea.sflag [#allocation5], %s3131
          %s3133 = sand.u32 %s108, 1
          %s3134 = smul.addr %s3133, 32
          %s3135 = scalar_lea.vmem [#allocation4], %s3134
          %3136 = dma.done %s3132, 512
        $region52: #{tpu_custom_call.1} parent=47 // pred_fallthru
          _
      $region48: #{tpu_custom_call.1} parent=5 // pred_fallthru
        _
    $region6: #{tpu_custom_call.1} parent=1 // loop_footer
      %s16 = sadd.s32 1, %s12
    $region7: #{tpu_custom_call.1} parent=1 // loop_footer_branch
      %11 = sbr.rel target = $region3
    $region8: #{tpu_custom_call.1} parent=1 // loop_exit
      _
    %3137 = vsyncpa [#allocation5], 1
    %s3138 = scalar_lea.sflag [#allocation5], 1
    %3139 = vsyncpa %s3138, 1

</llo_original>
